<compile_context>
chip_gen: v5e
topology: v5e:2x2
jax: 0.10.0
libtpu: 0.0.40
codegen_flags: <defaults>
</compile_context>

<pallas_src>
import functools

import jax
import jax.numpy as jnp
from jax.experimental import pallas as pl
from jax.experimental.pallas import tpu as pltpu

_VMEM_LIMIT = 32 * 1024 * 1024  # explicit scoped-VMEM budget (safe on v5e/v6e/v7x)


def _round_up(x, m):
    return (x + m - 1) // m * m


def _pick_tile(m, max_tile=512, align=16):
    """Pick (tile_m, m_padded): largest tile <= max_tile, grid divides evenly."""
    if m <= max_tile:
        t = _round_up(m, align)
        return t, t
    return max_tile, _round_up(m, max_tile)


# ----------------------------- Pallas kernels -----------------------------

def _conv_lrelu_stats_kernel(m_valid, tile_m,
                             x_ref, w_ref, b_ref,
                             o_ref, sum_ref, ssq_ref):
    """One M-tile of h = leaky_relu(x @ w + b, 0.2) with bf16 operands and f32
    accumulation, plus the per-tile per-channel sum / sum-of-squares needed for
    the fused BatchNorm statistics (rows padded past m_valid are masked out)."""
    acc = jnp.dot(x_ref[...], w_ref[...], preferred_element_type=jnp.float32)
    acc = acc + b_ref[...]
    h = jnp.maximum(acc, 0.2 * acc)              # LeakyReLU(0.2) on the VPU
    o_ref[...] = h.astype(o_ref.dtype)

    if m_valid % tile_m != 0:                    # static: only if M was padded
        row = (pl.program_id(0) * tile_m
               + jax.lax.broadcasted_iota(jnp.int32, (tile_m, 1), 0))
        hv = jnp.where(row < m_valid, h, 0.0)
    else:
        hv = h
    s = jnp.sum(hv, axis=0, keepdims=True)
    q = jnp.sum(hv * hv, axis=0, keepdims=True)
    # Sublane-aligned (8, Cout) block; real data replicated across the 8 rows.
    sum_ref[...] = jnp.broadcast_to(s, sum_ref.shape)
    ssq_ref[...] = jnp.broadcast_to(q, ssq_ref.shape)


def _linear_kernel(x_ref, w_ref, b_ref, o_ref):
    """o = x @ w + b with a lane-dense (128-wide, zero-padded) output tile."""
    o_ref[...] = (jnp.dot(x_ref[...], w_ref[...],
                          preferred_element_type=jnp.float32) + b_ref[...])


# ------------------------------- JAX glue ----------------------------------

def _im2col(x_nhwc, kh, kw, stride, pad):
    """NHWC -> patch matrix [N*OH*OW, KH*KW*Cin] (KH, KW, Cin row-major)."""
    n, h, w, c = x_nhwc.shape
    xp = jnp.pad(x_nhwc, ((0, 0), (pad, pad), (pad, pad), (0, 0)))
    oh = (h + 2 * pad - kh) // stride + 1
    ow = (w + 2 * pad - kw) // stride + 1
    cols = []
    for i in range(kh):
        for j in range(kw):
            cols.append(xp[:, i:i + stride * oh:stride, j:j + stride * ow:stride, :])
    patches = jnp.stack(cols, axis=3)            # [N, OH, OW, KH*KW, C]
    return patches.reshape(n * oh * ow, kh * kw * c), oh, ow


def _conv_block(x_nhwc, w_pt, b, gamma, beta, kh, kw, stride, pad):
    """Conv2d -> LeakyReLU(0.2) -> BatchNorm2d (batch stats), returns NHWC f32.

    Matmul + bias + LeakyReLU + BN-statistics reduction run in one tiled Pallas
    kernel; the BN normalize is a per-channel affine applied in JAX so XLA
    fuses it into the next consumer (no extra Pallas pass / HBM round-trip).
    """
    n = x_nhwc.shape[0]
    cout = w_pt.shape[0]
    patches, oh, ow = _im2col(x_nhwc, kh, kw, stride, pad)
    m, k = patches.shape
    # PyTorch conv weight [Cout, Cin, KH, KW] -> [KH*KW*Cin, Cout]
    w_mat = jnp.transpose(w_pt, (2, 3, 1, 0)).reshape(k, cout)

    tile_m, m_pad = _pick_tile(m)
    num_tiles = m_pad // tile_m
    patches = jnp.pad(patches, ((0, m_pad - m), (0, 0))).astype(jnp.bfloat16)
    w_bf = w_mat.astype(jnp.bfloat16)
    b_row = b.reshape(1, cout).astype(jnp.float32)

    kernel = functools.partial(_conv_lrelu_stats_kernel, m, tile_m)
    h, sums, ssqs = pl.pallas_call(
        kernel,
        out_shape=[
            jax.ShapeDtypeStruct((m_pad, cout), jnp.bfloat16),
            jax.ShapeDtypeStruct((num_tiles * 8, cout), jnp.float32),
            jax.ShapeDtypeStruct((num_tiles * 8, cout), jnp.float32),
        ],
        grid=(num_tiles,),
        in_specs=[
            pl.BlockSpec((tile_m, k), lambda i: (i, 0)),
            pl.BlockSpec((k, cout), lambda i: (0, 0)),
            pl.BlockSpec((1, cout), lambda i: (0, 0)),
        ],
        out_specs=[
            pl.BlockSpec((tile_m, cout), lambda i: (i, 0)),
            pl.BlockSpec((8, cout), lambda i: (i, 0)),
            pl.BlockSpec((8, cout), lambda i: (i, 0)),
        ],
        compiler_params=pltpu.CompilerParams(
            dimension_semantics=("parallel",),
            vmem_limit_bytes=_VMEM_LIMIT),
    )(patches, w_bf, b_row)

    # Combine the tiny per-tile partial sums into batch statistics.
    total = jnp.sum(sums[::8], axis=0)
    total_sq = jnp.sum(ssqs[::8], axis=0)
    mean = total / m
    var = jnp.maximum(total_sq / m - mean * mean, 0.0)  # biased, like PyTorch BN
    scale = gamma * jax.lax.rsqrt(var + 1e-5)
    shift = beta - mean * scale

    h = h[:m].astype(jnp.float32).reshape(n, oh, ow, cout)
    return h * scale + shift          # BN normalize; fused downstream by XLA


def _linear(feat, wl, bl):
    """Final Linear(4096 -> 1) with a lane-dense padded output column."""
    n, f = feat.shape
    tile_n, n_pad = _pick_tile(n, max_tile=256)
    num_tiles = n_pad // tile_n
    x = jnp.pad(feat, ((0, n_pad - n), (0, 0))).astype(jnp.bfloat16)
    w = jnp.zeros((f, 128), jnp.float32).at[:, 0].set(wl[0]).astype(jnp.bfloat16)
    b = jnp.zeros((1, 128), jnp.float32).at[0, 0].set(bl[0])

    out = pl.pallas_call(
        _linear_kernel,
        out_shape=jax.ShapeDtypeStruct((n_pad, 128), jnp.float32),
        grid=(num_tiles,),
        in_specs=[
            pl.BlockSpec((tile_n, f), lambda i: (i, 0)),
            pl.BlockSpec((f, 128), lambda i: (0, 0)),
            pl.BlockSpec((1, 128), lambda i: (0, 0)),
        ],
        out_specs=pl.BlockSpec((tile_n, 128), lambda i: (i, 0)),
        compiler_params=pltpu.CompilerParams(
            dimension_semantics=("parallel",),
            vmem_limit_bytes=_VMEM_LIMIT),
    )(x, w, b)
    return out[:n, :1]


def discriminator_forward(x_nchw, params):
    n = x_nchw.shape[0]
    x = jnp.transpose(x_nchw, (0, 2, 3, 1)).astype(jnp.float32)  # NCHW -> NHWC

    x = _conv_block(x, params["w1"], params["b1"], params["g1"], params["be1"], 4, 4, 2, 1)  # 28->14
    x = _conv_block(x, params["w2"], params["b2"], params["g2"], params["be2"], 4, 4, 2, 1)  # 14->7
    x = _conv_block(x, params["w3"], params["b3"], params["g3"], params["be3"], 3, 3, 2, 1)  # 7->4

    # PyTorch Flatten flattens NCHW order (C, H, W): transpose back first.
    feat = jnp.transpose(x, (0, 3, 1, 2)).reshape(n, -1)          # [N, 4096]
    return _linear(feat, params["wl"], params["bl"])


# ------------------------------ parameters ---------------------------------

def init_params(key):
    ks = jax.random.split(key, 8)
    std = 0.02  # deterministic DCGAN-style init
    return {
        "w1": jax.random.normal(ks[0], (64, 1, 4, 4), jnp.float32) * std,
        "b1": jax.random.normal(ks[1], (64,), jnp.float32) * std,
        "g1": jnp.ones((64,), jnp.float32),
        "be1": jnp.zeros((64,), jnp.float32),
        "w2": jax.random.normal(ks[2], (128, 64, 4, 4), jnp.float32) * std,
        "b2": jax.random.normal(ks[3], (128,), jnp.float32) * std,
        "g2": jnp.ones((128,), jnp.float32),
        "be2": jnp.zeros((128,), jnp.float32),
        "w3": jax.random.normal(ks[4], (256, 128, 3, 3), jnp.float32) * std,
        "b3": jax.random.normal(ks[5], (256,), jnp.float32) * std,
        "g3": jnp.ones((256,), jnp.float32),
        "be3": jnp.zeros((256,), jnp.float32),
        "wl": jax.random.normal(ks[6], (1, 4 * 4 * 256), jnp.float32) * std,
        "bl": jax.random.normal(ks[7], (1,), jnp.float32) * std,
    }


# --------------------------------- main -------------------------------------

if __name__ == "__main__":
    key = jax.random.PRNGKey(0)
    k_x, k_p = jax.random.split(key)
    # MNIST-shaped input (spatial size 28 is required by Linear(4*4*256, 1)).
    x = jax.random.normal(k_x, (2, 1, 28, 28), jnp.float32)
    params = init_params(k_p)

    fwd = jax.jit(discriminator_forward)
    out = jax.block_until_ready(fwd(x, params))
    assert out.shape == (2, 1) and out.dtype == jnp.float32
    print("KERNEL_OK")
</pallas_src>

<mosaic_0001>
module attributes {stable_mosaic.version = 11 : i64} {
  func.func @_conv_lrelu_stats_kernel(%arg0: i32, %arg1: memref<400x16xbf16, #tpu.memory_space<vmem>>, %arg2: memref<16x64xbf16, #tpu.memory_space<vmem>>, %arg3: memref<1x64xf32, #tpu.memory_space<vmem>>, %arg4: memref<400x64xbf16, #tpu.memory_space<vmem>>, %arg5: memref<8x64xf32, #tpu.memory_space<vmem>>, %arg6: memref<8x64xf32, #tpu.memory_space<vmem>>) attributes {dimension_semantics = [#tpu.dimension_semantics<parallel>], iteration_bounds = array<i64: 1>, scalar_prefetch = 0 : i64, scratch_operands = 0 : i64, tpu.core_type = #tpu.core_type<tc>, window_params = [{transform_indices = @transform_0, window_bounds = array<i64: 400, 16>}, {pipeline_mode = #tpu.pipeline_mode<synchronous>, transform_indices = @transform_1, window_bounds = array<i64: 16, 64>}, {pipeline_mode = #tpu.pipeline_mode<synchronous>, transform_indices = @transform_2, window_bounds = array<i64: 1, 64>}, {transform_indices = @transform_3, window_bounds = array<i64: 400, 64>}, {transform_indices = @transform_4, window_bounds = array<i64: 8, 64>}, {transform_indices = @transform_5, window_bounds = array<i64: 8, 64>}]} {
    %c0 = arith.constant 0 : index
    %c0_0 = arith.constant 0 : index
    %0 = vector.load %arg1[%c0, %c0_0] : memref<400x16xbf16, #tpu.memory_space<vmem>>, vector<400x16xbf16>
    %c0_1 = arith.constant 0 : index
    %c0_2 = arith.constant 0 : index
    %1 = vector.load %arg2[%c0_1, %c0_2] : memref<16x64xbf16, #tpu.memory_space<vmem>>, vector<16x64xbf16>
    %cst = arith.constant dense<0.000000e+00> : vector<400x64xf32>
    %2 = tpu.matmul %0, %1, %cst {dimension_numbers = #tpu.dot_dimension_numbers<[1], [0], [0], [1], [0, 0, 1, 1], [], []>} : vector<400x16xbf16>, vector<16x64xbf16>, vector<400x64xf32> -> vector<400x64xf32>
    %c0_3 = arith.constant 0 : index
    %c0_4 = arith.constant 0 : index
    %3 = vector.load %arg3[%c0_3, %c0_4] : memref<1x64xf32, #tpu.memory_space<vmem>>, vector<1x64xf32>
    %4 = vector.broadcast %3 : vector<1x64xf32> to vector<400x64xf32>
    %5 = arith.addf %2, %4 : vector<400x64xf32>
    %cst_5 = arith.constant 2.000000e-01 : f32
    %6 = vector.broadcast %cst_5 : f32 to vector<400x64xf32>
    %7 = arith.mulf %6, %5 : vector<400x64xf32>
    %8 = arith.maximumf %5, %7 : vector<400x64xf32>
    %9 = arith.truncf %8 : vector<400x64xf32> to vector<400x64xbf16>
    %c0_6 = arith.constant 0 : index
    %c0_7 = arith.constant 0 : index
    %10 = vector.load %arg4[%c0_6, %c0_7] : memref<400x64xbf16, #tpu.memory_space<vmem>>, vector<400x64xbf16>
    tpu.vector_store %arg4[%c0_6, %c0_7], %9 {strides = array<i32>} : memref<400x64xbf16, #tpu.memory_space<vmem>>, vector<400x64xbf16>,
    %c400_i32 = arith.constant 400 : i32
    %11 = arith.muli %arg0, %c400_i32 : i32
    %12 = tpu.iota {dimensions = array<i32: 0>} : vector<400x1xi32>
    %13 = vector.broadcast %11 : i32 to vector<400x1xi32>
    %14 = arith.addi %13, %12 : vector<400x1xi32>
    %c392_i32 = arith.constant 392 : i32
    %15 = vector.broadcast %c392_i32 : i32 to vector<400x1xi32>
    %16 = arith.cmpi slt, %14, %15 : vector<400x1xi32>
    %cst_8 = arith.constant 0.000000e+00 : f32
    %17 = vector.shape_cast %16 : vector<400x1xi1> to vector<400x1xi1>
    %18 = vector.broadcast %17 : vector<400x1xi1> to vector<400x64xi1>
    %19 = vector.broadcast %cst_8 : f32 to vector<400x64xf32>
    %20 = arith.select %18, %8, %19 : vector<400x64xi1>, vector<400x64xf32>
    %cst_9 = arith.constant dense<0.000000e+00> : vector<64xf32>
    %21 = vector.multi_reduction <add>, %20, %cst_9 [0] : vector<400x64xf32> to vector<64xf32>
    %22 = vector.shape_cast %21 : vector<64xf32> to vector<1x64xf32>
    %23 = arith.mulf %20, %20 : vector<400x64xf32>
    %cst_10 = arith.constant dense<0.000000e+00> : vector<64xf32>
    %24 = vector.multi_reduction <add>, %23, %cst_10 [0] : vector<400x64xf32> to vector<64xf32>
    %25 = vector.shape_cast %24 : vector<64xf32> to vector<1x64xf32>
    %26 = vector.shape_cast %22 : vector<1x64xf32> to vector<1x64xf32>
    %27 = vector.broadcast %26 : vector<1x64xf32> to vector<8x64xf32>
    %c0_11 = arith.constant 0 : index
    %c0_12 = arith.constant 0 : index
    %28 = vector.load %arg5[%c0_11, %c0_12] : memref<8x64xf32, #tpu.memory_space<vmem>>, vector<8x64xf32>
    tpu.vector_store %arg5[%c0_11, %c0_12], %27 {strides = array<i32>} : memref<8x64xf32, #tpu.memory_space<vmem>>, vector<8x64xf32>,
    %29 = vector.shape_cast %25 : vector<1x64xf32> to vector<1x64xf32>
    %30 = vector.broadcast %29 : vector<1x64xf32> to vector<8x64xf32>
    %c0_13 = arith.constant 0 : index
    %c0_14 = arith.constant 0 : index
    %31 = vector.load %arg6[%c0_13, %c0_14] : memref<8x64xf32, #tpu.memory_space<vmem>>, vector<8x64xf32>
    tpu.vector_store %arg6[%c0_13, %c0_14], %30 {strides = array<i32>} : memref<8x64xf32, #tpu.memory_space<vmem>>, vector<8x64xf32>,
    return
  }
  func.func @transform_0(%arg0: i32) -> (i32, i32) {
    %c0_i32 = arith.constant 0 : i32
    %c0_i32_0 = arith.constant 0 : i32
    return %arg0, %c0_i32 : i32, i32
  }
  func.func @transform_1(%arg0: i32) -> (i32, i32) {
    %c0_i32 = arith.constant 0 : i32
    %c0_i32_0 = arith.constant 0 : i32
    %c0_i32_1 = arith.constant 0 : i32
    return %c0_i32, %c0_i32_0 : i32, i32
  }
  func.func @transform_2(%arg0: i32) -> (i32, i32) {
    %c0_i32 = arith.constant 0 : i32
    %c0_i32_0 = arith.constant 0 : i32
    %c0_i32_1 = arith.constant 0 : i32
    return %c0_i32, %c0_i32_0 : i32, i32
  }
  func.func @transform_3(%arg0: i32) -> (i32, i32) {
    %c0_i32 = arith.constant 0 : i32
    %c0_i32_0 = arith.constant 0 : i32
    return %arg0, %c0_i32 : i32, i32
  }
  func.func @transform_4(%arg0: i32) -> (i32, i32) {
    %c0_i32 = arith.constant 0 : i32
    %c0_i32_0 = arith.constant 0 : i32
    return %arg0, %c0_i32 : i32, i32
  }
  func.func @transform_5(%arg0: i32) -> (i32, i32) {
    %c0_i32 = arith.constant 0 : i32
    %c0_i32_0 = arith.constant 0 : i32
    return %arg0, %c0_i32 : i32, i32
  }
}

module attributes {stable_mosaic.version = 11 : i64} {
  func.func @_conv_lrelu_stats_kernel(%arg0: i32, %arg1: memref<112x1024xbf16, #tpu.memory_space<vmem>>, %arg2: memref<1024x128xbf16, #tpu.memory_space<vmem>>, %arg3: memref<1x128xf32, #tpu.memory_space<vmem>>, %arg4: memref<112x128xbf16, #tpu.memory_space<vmem>>, %arg5: memref<8x128xf32, #tpu.memory_space<vmem>>, %arg6: memref<8x128xf32, #tpu.memory_space<vmem>>) attributes {dimension_semantics = [#tpu.dimension_semantics<parallel>], iteration_bounds = array<i64: 1>, scalar_prefetch = 0 : i64, scratch_operands = 0 : i64, tpu.core_type = #tpu.core_type<tc>, window_params = [{transform_indices = @transform_0, window_bounds = array<i64: 112, 1024>}, {pipeline_mode = #tpu.pipeline_mode<synchronous>, transform_indices = @transform_1, window_bounds = array<i64: 1024, 128>}, {pipeline_mode = #tpu.pipeline_mode<synchronous>, transform_indices = @transform_2, window_bounds = array<i64: 1, 128>}, {transform_indices = @transform_3, window_bounds = array<i64: 112, 128>}, {transform_indices = @transform_4, window_bounds = array<i64: 8, 128>}, {transform_indices = @transform_5, window_bounds = array<i64: 8, 128>}]} {
    %c0 = arith.constant 0 : index
    %c0_0 = arith.constant 0 : index
    %0 = vector.load %arg1[%c0, %c0_0] : memref<112x1024xbf16, #tpu.memory_space<vmem>>, vector<112x1024xbf16>
    %c0_1 = arith.constant 0 : index
    %c0_2 = arith.constant 0 : index
    %1 = vector.load %arg2[%c0_1, %c0_2] : memref<1024x128xbf16, #tpu.memory_space<vmem>>, vector<1024x128xbf16>
    %cst = arith.constant dense<0.000000e+00> : vector<112x128xf32>
    %2 = tpu.matmul %0, %1, %cst {dimension_numbers = #tpu.dot_dimension_numbers<[1], [0], [0], [1], [0, 0, 1, 1], [], []>} : vector<112x1024xbf16>, vector<1024x128xbf16>, vector<112x128xf32> -> vector<112x128xf32>
    %c0_3 = arith.constant 0 : index
    %c0_4 = arith.constant 0 : index
    %3 = vector.load %arg3[%c0_3, %c0_4] : memref<1x128xf32, #tpu.memory_space<vmem>>, vector<1x128xf32>
    %4 = vector.broadcast %3 : vector<1x128xf32> to vector<112x128xf32>
    %5 = arith.addf %2, %4 : vector<112x128xf32>
    %cst_5 = arith.constant 2.000000e-01 : f32
    %6 = vector.broadcast %cst_5 : f32 to vector<112x128xf32>
    %7 = arith.mulf %6, %5 : vector<112x128xf32>
    %8 = arith.maximumf %5, %7 : vector<112x128xf32>
    %9 = arith.truncf %8 : vector<112x128xf32> to vector<112x128xbf16>
    %c0_6 = arith.constant 0 : index
    %c0_7 = arith.constant 0 : index
    %10 = vector.load %arg4[%c0_6, %c0_7] : memref<112x128xbf16, #tpu.memory_space<vmem>>, vector<112x128xbf16>
    tpu.vector_store %arg4[%c0_6, %c0_7], %9 {strides = array<i32>} : memref<112x128xbf16, #tpu.memory_space<vmem>>, vector<112x128xbf16>,
    %c112_i32 = arith.constant 112 : i32
    %11 = arith.muli %arg0, %c112_i32 : i32
    %12 = tpu.iota {dimensions = array<i32: 0>} : vector<112x1xi32>
    %13 = vector.broadcast %11 : i32 to vector<112x1xi32>
    %14 = arith.addi %13, %12 : vector<112x1xi32>
    %c98_i32 = arith.constant 98 : i32
    %15 = vector.broadcast %c98_i32 : i32 to vector<112x1xi32>
    %16 = arith.cmpi slt, %14, %15 : vector<112x1xi32>
    %cst_8 = arith.constant 0.000000e+00 : f32
    %17 = vector.shape_cast %16 : vector<112x1xi1> to vector<112x1xi1>
    %18 = vector.broadcast %17 : vector<112x1xi1> to vector<112x128xi1>
    %19 = vector.broadcast %cst_8 : f32 to vector<112x128xf32>
    %20 = arith.select %18, %8, %19 : vector<112x128xi1>, vector<112x128xf32>
    %cst_9 = arith.constant dense<0.000000e+00> : vector<128xf32>
    %21 = vector.multi_reduction <add>, %20, %cst_9 [0] : vector<112x128xf32> to vector<128xf32>
    %22 = vector.shape_cast %21 : vector<128xf32> to vector<1x128xf32>
    %23 = arith.mulf %20, %20 : vector<112x128xf32>
    %cst_10 = arith.constant dense<0.000000e+00> : vector<128xf32>
    %24 = vector.multi_reduction <add>, %23, %cst_10 [0] : vector<112x128xf32> to vector<128xf32>
    %25 = vector.shape_cast %24 : vector<128xf32> to vector<1x128xf32>
    %26 = vector.shape_cast %22 : vector<1x128xf32> to vector<1x128xf32>
    %27 = vector.broadcast %26 : vector<1x128xf32> to vector<8x128xf32>
    %c0_11 = arith.constant 0 : index
    %c0_12 = arith.constant 0 : index
    %28 = vector.load %arg5[%c0_11, %c0_12] : memref<8x128xf32, #tpu.memory_space<vmem>>, vector<8x128xf32>
    tpu.vector_store %arg5[%c0_11, %c0_12], %27 {strides = array<i32>} : memref<8x128xf32, #tpu.memory_space<vmem>>, vector<8x128xf32>,
    %29 = vector.shape_cast %25 : vector<1x128xf32> to vector<1x128xf32>
    %30 = vector.broadcast %29 : vector<1x128xf32> to vector<8x128xf32>
    %c0_13 = arith.constant 0 : index
    %c0_14 = arith.constant 0 : index
    %31 = vector.load %arg6[%c0_13, %c0_14] : memref<8x128xf32, #tpu.memory_space<vmem>>, vector<8x128xf32>
    tpu.vector_store %arg6[%c0_13, %c0_14], %30 {strides = array<i32>} : memref<8x128xf32, #tpu.memory_space<vmem>>, vector<8x128xf32>,
    return
  }
  func.func @transform_0(%arg0: i32) -> (i32, i32) {
    %c0_i32 = arith.constant 0 : i32
    %c0_i32_0 = arith.constant 0 : i32
    return %arg0, %c0_i32 : i32, i32
  }
  func.func @transform_1(%arg0: i32) -> (i32, i32) {
    %c0_i32 = arith.constant 0 : i32
    %c0_i32_0 = arith.constant 0 : i32
    %c0_i32_1 = arith.constant 0 : i32
    return %c0_i32, %c0_i32_0 : i32, i32
  }
  func.func @transform_2(%arg0: i32) -> (i32, i32) {
    %c0_i32 = arith.constant 0 : i32
    %c0_i32_0 = arith.constant 0 : i32
    %c0_i32_1 = arith.constant 0 : i32
    return %c0_i32, %c0_i32_0 : i32, i32
  }
  func.func @transform_3(%arg0: i32) -> (i32, i32) {
    %c0_i32 = arith.constant 0 : i32
    %c0_i32_0 = arith.constant 0 : i32
    return %arg0, %c0_i32 : i32, i32
  }
  func.func @transform_4(%arg0: i32) -> (i32, i32) {
    %c0_i32 = arith.constant 0 : i32
    %c0_i32_0 = arith.constant 0 : i32
    return %arg0, %c0_i32 : i32, i32
  }
  func.func @transform_5(%arg0: i32) -> (i32, i32) {
    %c0_i32 = arith.constant 0 : i32
    %c0_i32_0 = arith.constant 0 : i32
    return %arg0, %c0_i32 : i32, i32
  }
}

module attributes {stable_mosaic.version = 11 : i64} {
  func.func @_conv_lrelu_stats_kernel(%arg0: i32, %arg1: memref<32x1152xbf16, #tpu.memory_space<vmem>>, %arg2: memref<1152x256xbf16, #tpu.memory_space<vmem>>, %arg3: memref<1x256xf32, #tpu.memory_space<vmem>>, %arg4: memref<32x256xbf16, #tpu.memory_space<vmem>>, %arg5: memref<8x256xf32, #tpu.memory_space<vmem>>, %arg6: memref<8x256xf32, #tpu.memory_space<vmem>>) attributes {dimension_semantics = [#tpu.dimension_semantics<parallel>], iteration_bounds = array<i64: 1>, scalar_prefetch = 0 : i64, scratch_operands = 0 : i64, tpu.core_type = #tpu.core_type<tc>, window_params = [{transform_indices = @transform_0, window_bounds = array<i64: 32, 1152>}, {pipeline_mode = #tpu.pipeline_mode<synchronous>, transform_indices = @transform_1, window_bounds = array<i64: 1152, 256>}, {pipeline_mode = #tpu.pipeline_mode<synchronous>, transform_indices = @transform_2, window_bounds = array<i64: 1, 256>}, {transform_indices = @transform_3, window_bounds = array<i64: 32, 256>}, {transform_indices = @transform_4, window_bounds = array<i64: 8, 256>}, {transform_indices = @transform_5, window_bounds = array<i64: 8, 256>}]} {
    %c0 = arith.constant 0 : index
    %c0_0 = arith.constant 0 : index
    %0 = vector.load %arg1[%c0, %c0_0] : memref<32x1152xbf16, #tpu.memory_space<vmem>>, vector<32x1152xbf16>
    %c0_1 = arith.constant 0 : index
    %c0_2 = arith.constant 0 : index
    %1 = vector.load %arg2[%c0_1, %c0_2] : memref<1152x256xbf16, #tpu.memory_space<vmem>>, vector<1152x256xbf16>
    %cst = arith.constant dense<0.000000e+00> : vector<32x256xf32>
    %2 = tpu.matmul %0, %1, %cst {dimension_numbers = #tpu.dot_dimension_numbers<[1], [0], [0], [1], [0, 0, 1, 1], [], []>} : vector<32x1152xbf16>, vector<1152x256xbf16>, vector<32x256xf32> -> vector<32x256xf32>
    %c0_3 = arith.constant 0 : index
    %c0_4 = arith.constant 0 : index
    %3 = vector.load %arg3[%c0_3, %c0_4] : memref<1x256xf32, #tpu.memory_space<vmem>>, vector<1x256xf32>
    %4 = vector.broadcast %3 : vector<1x256xf32> to vector<32x256xf32>
    %5 = arith.addf %2, %4 : vector<32x256xf32>
    %cst_5 = arith.constant 2.000000e-01 : f32
    %6 = vector.broadcast %cst_5 : f32 to vector<32x256xf32>
    %7 = arith.mulf %6, %5 : vector<32x256xf32>
    %8 = arith.maximumf %5, %7 : vector<32x256xf32>
    %9 = arith.truncf %8 : vector<32x256xf32> to vector<32x256xbf16>
    %c0_6 = arith.constant 0 : index
    %c0_7 = arith.constant 0 : index
    %10 = vector.load %arg4[%c0_6, %c0_7] : memref<32x256xbf16, #tpu.memory_space<vmem>>, vector<32x256xbf16>
    tpu.vector_store %arg4[%c0_6, %c0_7], %9 {strides = array<i32>} : memref<32x256xbf16, #tpu.memory_space<vmem>>, vector<32x256xbf16>,
    %cst_8 = arith.constant dense<0.000000e+00> : vector<256xf32>
    %11 = vector.multi_reduction <add>, %8, %cst_8 [0] : vector<32x256xf32> to vector<256xf32>
    %12 = vector.shape_cast %11 : vector<256xf32> to vector<1x256xf32>
    %13 = arith.mulf %8, %8 : vector<32x256xf32>
    %cst_9 = arith.constant dense<0.000000e+00> : vector<256xf32>
    %14 = vector.multi_reduction <add>, %13, %cst_9 [0] : vector<32x256xf32> to vector<256xf32>
    %15 = vector.shape_cast %14 : vector<256xf32> to vector<1x256xf32>
    %16 = vector.shape_cast %12 : vector<1x256xf32> to vector<1x256xf32>
    %17 = vector.broadcast %16 : vector<1x256xf32> to vector<8x256xf32>
    %c0_10 = arith.constant 0 : index
    %c0_11 = arith.constant 0 : index
    %18 = vector.load %arg5[%c0_10, %c0_11] : memref<8x256xf32, #tpu.memory_space<vmem>>, vector<8x256xf32>
    tpu.vector_store %arg5[%c0_10, %c0_11], %17 {strides = array<i32>} : memref<8x256xf32, #tpu.memory_space<vmem>>, vector<8x256xf32>,
    %19 = vector.shape_cast %15 : vector<1x256xf32> to vector<1x256xf32>
    %20 = vector.broadcast %19 : vector<1x256xf32> to vector<8x256xf32>
    %c0_12 = arith.constant 0 : index
    %c0_13 = arith.constant 0 : index
    %21 = vector.load %arg6[%c0_12, %c0_13] : memref<8x256xf32, #tpu.memory_space<vmem>>, vector<8x256xf32>
    tpu.vector_store %arg6[%c0_12, %c0_13], %20 {strides = array<i32>} : memref<8x256xf32, #tpu.memory_space<vmem>>, vector<8x256xf32>,
    return
  }
  func.func @transform_0(%arg0: i32) -> (i32, i32) {
    %c0_i32 = arith.constant 0 : i32
    %c0_i32_0 = arith.constant 0 : i32
    return %arg0, %c0_i32 : i32, i32
  }
  func.func @transform_1(%arg0: i32) -> (i32, i32) {
    %c0_i32 = arith.constant 0 : i32
    %c0_i32_0 = arith.constant 0 : i32
    %c0_i32_1 = arith.constant 0 : i32
    return %c0_i32, %c0_i32_0 : i32, i32
  }
  func.func @transform_2(%arg0: i32) -> (i32, i32) {
    %c0_i32 = arith.constant 0 : i32
    %c0_i32_0 = arith.constant 0 : i32
    %c0_i32_1 = arith.constant 0 : i32
    return %c0_i32, %c0_i32_0 : i32, i32
  }
  func.func @transform_3(%arg0: i32) -> (i32, i32) {
    %c0_i32 = arith.constant 0 : i32
    %c0_i32_0 = arith.constant 0 : i32
    return %arg0, %c0_i32 : i32, i32
  }
  func.func @transform_4(%arg0: i32) -> (i32, i32) {
    %c0_i32 = arith.constant 0 : i32
    %c0_i32_0 = arith.constant 0 : i32
    return %arg0, %c0_i32 : i32, i32
  }
  func.func @transform_5(%arg0: i32) -> (i32, i32) {
    %c0_i32 = arith.constant 0 : i32
    %c0_i32_0 = arith.constant 0 : i32
    return %arg0, %c0_i32 : i32, i32
  }
}

module attributes {stable_mosaic.version = 11 : i64} {
  func.func @_linear_kernel(%arg0: i32, %arg1: memref<16x4096xbf16, #tpu.memory_space<vmem>>, %arg2: memref<4096x128xbf16, #tpu.memory_space<vmem>>, %arg3: memref<1x128xf32, #tpu.memory_space<vmem>>, %arg4: memref<16x128xf32, #tpu.memory_space<vmem>>) attributes {dimension_semantics = [#tpu.dimension_semantics<parallel>], iteration_bounds = array<i64: 1>, scalar_prefetch = 0 : i64, scratch_operands = 0 : i64, tpu.core_type = #tpu.core_type<tc>, window_params = [{transform_indices = @transform_0, window_bounds = array<i64: 16, 4096>}, {pipeline_mode = #tpu.pipeline_mode<synchronous>, transform_indices = @transform_1, window_bounds = array<i64: 4096, 128>}, {pipeline_mode = #tpu.pipeline_mode<synchronous>, transform_indices = @transform_2, window_bounds = array<i64: 1, 128>}, {transform_indices = @transform_3, window_bounds = array<i64: 16, 128>}]} {
    %c0 = arith.constant 0 : index
    %c0_0 = arith.constant 0 : index
    %0 = vector.load %arg1[%c0, %c0_0] : memref<16x4096xbf16, #tpu.memory_space<vmem>>, vector<16x4096xbf16>
    %c0_1 = arith.constant 0 : index
    %c0_2 = arith.constant 0 : index
    %1 = vector.load %arg2[%c0_1, %c0_2] : memref<4096x128xbf16, #tpu.memory_space<vmem>>, vector<4096x128xbf16>
    %cst = arith.constant dense<0.000000e+00> : vector<16x128xf32>
    %2 = tpu.matmul %0, %1, %cst {dimension_numbers = #tpu.dot_dimension_numbers<[1], [0], [0], [1], [0, 0, 1, 1], [], []>} : vector<16x4096xbf16>, vector<4096x128xbf16>, vector<16x128xf32> -> vector<16x128xf32>
    %c0_3 = arith.constant 0 : index
    %c0_4 = arith.constant 0 : index
    %3 = vector.load %arg3[%c0_3, %c0_4] : memref<1x128xf32, #tpu.memory_space<vmem>>, vector<1x128xf32>
    %4 = vector.broadcast %3 : vector<1x128xf32> to vector<16x128xf32>
    %5 = arith.addf %2, %4 : vector<16x128xf32>
    %c0_5 = arith.constant 0 : index
    %c0_6 = arith.constant 0 : index
    %6 = vector.load %arg4[%c0_5, %c0_6] : memref<16x128xf32, #tpu.memory_space<vmem>>, vector<16x128xf32>
    tpu.vector_store %arg4[%c0_5, %c0_6], %5 {strides = array<i32>} : memref<16x128xf32, #tpu.memory_space<vmem>>, vector<16x128xf32>,
    return
  }
  func.func @transform_0(%arg0: i32) -> (i32, i32) {
    %c0_i32 = arith.constant 0 : i32
    %c0_i32_0 = arith.constant 0 : i32
    return %arg0, %c0_i32 : i32, i32
  }
  func.func @transform_1(%arg0: i32) -> (i32, i32) {
    %c0_i32 = arith.constant 0 : i32
    %c0_i32_0 = arith.constant 0 : i32
    %c0_i32_1 = arith.constant 0 : i32
    return %c0_i32, %c0_i32_0 : i32, i32
  }
  func.func @transform_2(%arg0: i32) -> (i32, i32) {
    %c0_i32 = arith.constant 0 : i32
    %c0_i32_0 = arith.constant 0 : i32
    %c0_i32_1 = arith.constant 0 : i32
    return %c0_i32, %c0_i32_0 : i32, i32
  }
  func.func @transform_3(%arg0: i32) -> (i32, i32) {
    %c0_i32 = arith.constant 0 : i32
    %c0_i32_0 = arith.constant 0 : i32
    return %arg0, %c0_i32 : i32, i32
  }
}

</mosaic_0001>

<llo_original>
// kernel: discriminator_forward.4
$region0: #{discriminator_forward.4}
  #allocation0 [shape = 'u32[]', space=smem, size = 0x4, offset = 0x4, fixed_abs, tag = 'smem constant byte address 0x4 - core index']
  #allocation1 [shape = 'u32[72,128]{1,0:T(1,128)}', space=vmem, size = 0x9000, scoped, tag = 'internal scratch']
  %s0 = inlined_call_operand.vmem [shape: bf16[400,16], index: 0, kind: input, shape index: {}]
  %s1 = inlined_call_operand.vmem [shape: bf16[16,64], index: 1, kind: input, shape index: {}]
  %s2 = inlined_call_operand.vmem [shape: f32[1,64], index: 2, kind: input, shape index: {}]
  %s3 = inlined_call_operand.vmem [shape: bf16[400,64], index: 3, kind: output, shape index: {0}]
  %s4 = inlined_call_operand.vmem [shape: f32[8,64], index: 4, kind: output, shape index: {1}]
  %s5 = inlined_call_operand.vmem [shape: f32[8,64], index: 5, kind: output, shape index: {2}]
  %6 = xla_tuple %s3, %s4, %s5
  %s7 = sld [smem:[#allocation0]]
  $region38: #{discriminator_forward.4} parent=0
    _
  %s9 = ssub.s32 1, %s7
  %s10 = scalar_select 0, %s9, %s7
  // Predicated region
  $region2: #{discriminator_forward.4} parent=0 // pred_check
    _
  $region3: #{discriminator_forward.4} parent=0 // pred_check_branch
    %12 = sbr.rel (0) target = $region5
  $region4: #{discriminator_forward.4} parent=0 // pred_region
    _
  $region5: #{discriminator_forward.4} parent=0 // pred_fallthru
    _
  // Predicated region
  $region6: #{discriminator_forward.4} parent=0 // pred_check
    _
  $region7: #{discriminator_forward.4} parent=0 // pred_check_branch
    %14 = sbr.rel (0) target = $region9
  $region8: #{discriminator_forward.4} parent=0 // pred_region
    _
  $region9: #{discriminator_forward.4} parent=0 // pred_fallthru
    _
  // Predicated region
  $region10: #{discriminator_forward.4} parent=0 // pred_check
    _
  $region11: #{discriminator_forward.4} parent=0 // pred_check_branch
    %16 = sbr.rel (0) target = $region13
  $region12: #{discriminator_forward.4} parent=0 // pred_region
    _
  $region13: #{discriminator_forward.4} parent=0 // pred_fallthru
    _
  %v18 = vld [vmem:[%s0] sm:$0xf]
  %v19 = vld [vmem:[%s0 + $0x4] sm:$0xf]
  %v20 = vld [vmem:[%s0 + $0x8] sm:$0xf]
  %v21 = vld [vmem:[%s0 + $0xc] sm:$0xf]
  %v22 = vld [vmem:[%s0 + $0x10] sm:$0xf]
  %v23 = vld [vmem:[%s0 + $0x14] sm:$0xf]
  %v24 = vld [vmem:[%s0 + $0x18] sm:$0xf]
  %v25 = vld [vmem:[%s0 + $0x1c] sm:$0xf]
  %v26 = vld [vmem:[%s0 + $0x20] sm:$0xf]
  %v27 = vld [vmem:[%s0 + $0x24] sm:$0xf]
  %v28 = vld [vmem:[%s0 + $0x28] sm:$0xf]
  %v29 = vld [vmem:[%s0 + $0x2c] sm:$0xf]
  %v30 = vld [vmem:[%s0 + $0x30] sm:$0xf]
  %v31 = vld [vmem:[%s0 + $0x34] sm:$0xf]
  %v32 = vld [vmem:[%s0 + $0x38] sm:$0xf]
  %v33 = vld [vmem:[%s0 + $0x3c] sm:$0xf]
  %v34 = vld [vmem:[%s0 + $0x40] sm:$0xf]
  %v35 = vld [vmem:[%s0 + $0x44] sm:$0xf]
  %v36 = vld [vmem:[%s0 + $0x48] sm:$0xf]
  %v37 = vld [vmem:[%s0 + $0x4c] sm:$0xf]
  %v38 = vld [vmem:[%s0 + $0x50] sm:$0xf]
  %v39 = vld [vmem:[%s0 + $0x54] sm:$0xf]
  %v40 = vld [vmem:[%s0 + $0x58] sm:$0xf]
  %v41 = vld [vmem:[%s0 + $0x5c] sm:$0xf]
  %v42 = vld [vmem:[%s0 + $0x60] sm:$0xf]
  %v43 = vld [vmem:[%s0 + $0x64] sm:$0xf]
  %v44 = vld [vmem:[%s0 + $0x68] sm:$0xf]
  %v45 = vld [vmem:[%s0 + $0x6c] sm:$0xf]
  %v46 = vld [vmem:[%s0 + $0x70] sm:$0xf]
  %v47 = vld [vmem:[%s0 + $0x74] sm:$0xf]
  %v48 = vld [vmem:[%s0 + $0x78] sm:$0xf]
  %v49 = vld [vmem:[%s0 + $0x7c] sm:$0xf]
  %v50 = vld [vmem:[%s0 + $0x80] sm:$0xf]
  %v51 = vld [vmem:[%s0 + $0x84] sm:$0xf]
  %v52 = vld [vmem:[%s0 + $0x88] sm:$0xf]
  %v53 = vld [vmem:[%s0 + $0x8c] sm:$0xf]
  %v54 = vld [vmem:[%s0 + $0x90] sm:$0xf]
  %v55 = vld [vmem:[%s0 + $0x94] sm:$0xf]
  %v56 = vld [vmem:[%s0 + $0x98] sm:$0xf]
  %v57 = vld [vmem:[%s0 + $0x9c] sm:$0xf]
  %v58 = vld [vmem:[%s0 + $0xa0] sm:$0xf]
  %v59 = vld [vmem:[%s0 + $0xa4] sm:$0xf]
  %v60 = vld [vmem:[%s0 + $0xa8] sm:$0xf]
  %v61 = vld [vmem:[%s0 + $0xac] sm:$0xf]
  %v62 = vld [vmem:[%s0 + $0xb0] sm:$0xf]
  %v63 = vld [vmem:[%s0 + $0xb4] sm:$0xf]
  %v64 = vld [vmem:[%s0 + $0xb8] sm:$0xf]
  %v65 = vld [vmem:[%s0 + $0xbc] sm:$0xf]
  %v66 = vld [vmem:[%s0 + $0xc0] sm:$0xf]
  %v67 = vld [vmem:[%s0 + $0xc4] sm:$0xf]
  %v68 = vld [vmem:[%s1] sm:$0xf]
  %v69 = vld [vmem:[%s1 + $0x4] sm:$0xf]
  %v70 = vld [vmem:[%s2] sm:$0x1]
  %v72 = vperm.slane %v70, 0
  %v124 = vunpack.c.l.b16 %v18
  %v125 = vunpack.c.l.b16 %v19
  %v126 = vunpack.c.l.b16 %v20
  %v127 = vunpack.c.l.b16 %v21
  %v128 = vunpack.c.l.b16 %v22
  %v129 = vunpack.c.l.b16 %v23
  %v130 = vunpack.c.l.b16 %v24
  %v131 = vunpack.c.l.b16 %v25
  %v132 = vunpack.c.l.b16 %v26
  %v133 = vunpack.c.l.b16 %v27
  %v134 = vunpack.c.l.b16 %v28
  %v135 = vunpack.c.l.b16 %v29
  %v136 = vunpack.c.l.b16 %v30
  %v137 = vunpack.c.l.b16 %v31
  %v138 = vunpack.c.l.b16 %v32
  %v139 = vunpack.c.l.b16 %v33
  %v140 = vunpack.c.l.b16 %v34
  %v141 = vunpack.c.l.b16 %v35
  %v142 = vunpack.c.l.b16 %v36
  %v143 = vunpack.c.l.b16 %v37
  %v144 = vunpack.c.l.b16 %v38
  %v145 = vunpack.c.l.b16 %v39
  %v146 = vunpack.c.l.b16 %v40
  %v147 = vunpack.c.l.b16 %v41
  %v148 = vunpack.c.l.b16 %v42
  %v149 = vunpack.c.l.b16 %v43
  %v150 = vunpack.c.l.b16 %v44
  %v151 = vunpack.c.l.b16 %v45
  %v152 = vunpack.c.l.b16 %v46
  %v153 = vunpack.c.l.b16 %v47
  %v154 = vunpack.c.l.b16 %v48
  %v155 = vunpack.c.l.b16 %v49
  %v156 = vunpack.c.l.b16 %v50
  %v157 = vunpack.c.l.b16 %v51
  %v158 = vunpack.c.l.b16 %v52
  %v159 = vunpack.c.l.b16 %v53
  %v160 = vunpack.c.l.b16 %v54
  %v161 = vunpack.c.l.b16 %v55
  %v162 = vunpack.c.l.b16 %v56
  %v163 = vunpack.c.l.b16 %v57
  %v164 = vunpack.c.l.b16 %v58
  %v165 = vunpack.c.l.b16 %v59
  %v166 = vunpack.c.l.b16 %v60
  %v167 = vunpack.c.l.b16 %v61
  %v168 = vunpack.c.l.b16 %v62
  %v169 = vunpack.c.l.b16 %v63
  %v170 = vunpack.c.l.b16 %v64
  %v171 = vunpack.c.l.b16 %v65
  %v172 = vunpack.c.l.b16 %v66
  %v173 = vunpack.c.l.b16 %v67
  %v174 = vpack.c.b16 %v125, %v124
  %v175 = vpack.c.b16 %v127, %v126
  %v176 = vpack.c.b16 %v129, %v128
  %v177 = vpack.c.b16 %v131, %v130
  %v178 = vpack.c.b16 %v133, %v132
  %v179 = vpack.c.b16 %v135, %v134
  %v180 = vpack.c.b16 %v137, %v136
  %v181 = vpack.c.b16 %v139, %v138
  %v182 = vpack.c.b16 %v141, %v140
  %v183 = vpack.c.b16 %v143, %v142
  %v184 = vpack.c.b16 %v145, %v144
  %v185 = vpack.c.b16 %v147, %v146
  %v186 = vpack.c.b16 %v149, %v148
  %v187 = vpack.c.b16 %v151, %v150
  %v188 = vpack.c.b16 %v153, %v152
  %v189 = vpack.c.b16 %v155, %v154
  %v190 = vpack.c.b16 %v157, %v156
  %v191 = vpack.c.b16 %v159, %v158
  %v192 = vpack.c.b16 %v161, %v160
  %v193 = vpack.c.b16 %v163, %v162
  %v194 = vpack.c.b16 %v165, %v164
  %v195 = vpack.c.b16 %v167, %v166
  %v196 = vpack.c.b16 %v169, %v168
  %v197 = vpack.c.b16 %v171, %v170
  %v198 = vpack.c.b16 %v173, %v172
  %v201 = vunpack.c.l.b16 %v68
  %v202 = vunpack.c.l.b16 %v69
  %v203 = vpack.c.b16 %v202, %v201
  %vm205 = vcmask 130048
  %v207 = vsel %vm205, %v174, 0
  %v210 = vsel %vm205, %v175, 0
  %v213 = vsel %vm205, %v176, 0
  %v216 = vsel %vm205, %v177, 0
  %v219 = vsel %vm205, %v178, 0
  %v222 = vsel %vm205, %v179, 0
  %v225 = vsel %vm205, %v180, 0
  %v228 = vsel %vm205, %v181, 0
  %v231 = vsel %vm205, %v182, 0
  %v234 = vsel %vm205, %v183, 0
  %v237 = vsel %vm205, %v184, 0
  %v240 = vsel %vm205, %v185, 0
  %v243 = vsel %vm205, %v186, 0
  %v246 = vsel %vm205, %v187, 0
  %v249 = vsel %vm205, %v188, 0
  %v252 = vsel %vm205, %v189, 0
  %v255 = vsel %vm205, %v190, 0
  %v258 = vsel %vm205, %v191, 0
  %v261 = vsel %vm205, %v192, 0
  %v264 = vsel %vm205, %v193, 0
  %v267 = vsel %vm205, %v194, 0
  %v270 = vsel %vm205, %v195, 0
  %v273 = vsel %vm205, %v196, 0
  %v276 = vsel %vm205, %v197, 0
  %v279 = vsel %vm205, %v198, 0
  %281 = vmatpush.bf16.msra.mxu0 0
  %282 = vmatpush.bf16.msra.mxu0 0
  %283 = vmatpush.bf16.msra.mxu0 0
  %284 = vmatpush.bf16.msra.mxu0 0
  %285 = vmatpush.bf16.msra.mxu0 0
  %286 = vmatpush.bf16.msra.mxu0 0
  %287 = vmatpush.bf16.msra.mxu0 0
  %288 = vmatpush.bf16.msra.mxu0 %v203
  %289 = vmatmul.bf16.gmra.mxu0 %v207
  %v290 = vpop.f32.mrf.mxu0
  %v291 = vadd.f32 %v72, %v290
  %v292 = vpop.f32.mrf.mxu0
  %v293 = vadd.f32 %v72, %v292
  %294 = vmatmul.bf16.gmra.mxu0 %v210
  %v295 = vpop.f32.mrf.mxu0
  %v296 = vadd.f32 %v72, %v295
  %v297 = vpop.f32.mrf.mxu0
  %v298 = vadd.f32 %v72, %v297
  %299 = vmatmul.bf16.gmra.mxu0 %v213
  %v300 = vpop.f32.mrf.mxu0
  %v301 = vadd.f32 %v72, %v300
  %v302 = vpop.f32.mrf.mxu0
  %v303 = vadd.f32 %v72, %v302
  %304 = vmatmul.bf16.gmra.mxu0 %v216
  %v305 = vpop.f32.mrf.mxu0
  %v306 = vadd.f32 %v72, %v305
  %v307 = vpop.f32.mrf.mxu0
  %v308 = vadd.f32 %v72, %v307
  %309 = vmatmul.bf16.gmra.mxu0 %v219
  %v310 = vpop.f32.mrf.mxu0
  %v311 = vadd.f32 %v72, %v310
  %v312 = vpop.f32.mrf.mxu0
  %v313 = vadd.f32 %v72, %v312
  %314 = vmatmul.bf16.gmra.mxu0 %v222
  %v315 = vpop.f32.mrf.mxu0
  %v316 = vadd.f32 %v72, %v315
  %v317 = vpop.f32.mrf.mxu0
  %v318 = vadd.f32 %v72, %v317
  %319 = vmatmul.bf16.gmra.mxu0 %v225
  %v320 = vpop.f32.mrf.mxu0
  %v321 = vadd.f32 %v72, %v320
  %v322 = vpop.f32.mrf.mxu0
  %v323 = vadd.f32 %v72, %v322
  %324 = vmatmul.bf16.gmra.mxu0 %v228
  %v325 = vpop.f32.mrf.mxu0
  %v326 = vadd.f32 %v72, %v325
  %v327 = vpop.f32.mrf.mxu0
  %v328 = vadd.f32 %v72, %v327
  %329 = vmatmul.bf16.gmra.mxu0 %v231
  %v330 = vpop.f32.mrf.mxu0
  %v331 = vadd.f32 %v72, %v330
  %v332 = vpop.f32.mrf.mxu0
  %v333 = vadd.f32 %v72, %v332
  %334 = vmatmul.bf16.gmra.mxu0 %v234
  %v335 = vpop.f32.mrf.mxu0
  %v336 = vadd.f32 %v72, %v335
  %v337 = vpop.f32.mrf.mxu0
  %v338 = vadd.f32 %v72, %v337
  %339 = vmatmul.bf16.gmra.mxu0 %v237
  %v340 = vpop.f32.mrf.mxu0
  %v341 = vadd.f32 %v72, %v340
  %v342 = vpop.f32.mrf.mxu0
  %v343 = vadd.f32 %v72, %v342
  %344 = vmatmul.bf16.gmra.mxu0 %v240
  %v345 = vpop.f32.mrf.mxu0
  %v346 = vadd.f32 %v72, %v345
  %v347 = vpop.f32.mrf.mxu0
  %v348 = vadd.f32 %v72, %v347
  %349 = vmatmul.bf16.gmra.mxu0 %v243
  %v350 = vpop.f32.mrf.mxu0
  %v351 = vadd.f32 %v72, %v350
  %v352 = vpop.f32.mrf.mxu0
  %v353 = vadd.f32 %v72, %v352
  %354 = vmatmul.bf16.gmra.mxu0 %v246
  %v355 = vpop.f32.mrf.mxu0
  %v356 = vadd.f32 %v72, %v355
  %v357 = vpop.f32.mrf.mxu0
  %v358 = vadd.f32 %v72, %v357
  %359 = vmatmul.bf16.gmra.mxu0 %v249
  %v360 = vpop.f32.mrf.mxu0
  %v361 = vadd.f32 %v72, %v360
  %v362 = vpop.f32.mrf.mxu0
  %v363 = vadd.f32 %v72, %v362
  %364 = vmatmul.bf16.gmra.mxu0 %v252
  %v365 = vpop.f32.mrf.mxu0
  %v366 = vadd.f32 %v72, %v365
  %v367 = vpop.f32.mrf.mxu0
  %v368 = vadd.f32 %v72, %v367
  %369 = vmatmul.bf16.gmra.mxu0 %v255
  %v370 = vpop.f32.mrf.mxu0
  %v371 = vadd.f32 %v72, %v370
  %v372 = vpop.f32.mrf.mxu0
  %v373 = vadd.f32 %v72, %v372
  %374 = vmatmul.bf16.gmra.mxu0 %v258
  %v375 = vpop.f32.mrf.mxu0
  %v376 = vadd.f32 %v72, %v375
  %v377 = vpop.f32.mrf.mxu0
  %v378 = vadd.f32 %v72, %v377
  %379 = vmatmul.bf16.gmra.mxu0 %v261
  %v380 = vpop.f32.mrf.mxu0
  %v381 = vadd.f32 %v72, %v380
  %v382 = vpop.f32.mrf.mxu0
  %v383 = vadd.f32 %v72, %v382
  %384 = vmatmul.bf16.gmra.mxu0 %v264
  %v385 = vpop.f32.mrf.mxu0
  %v386 = vadd.f32 %v72, %v385
  %v387 = vpop.f32.mrf.mxu0
  %v388 = vadd.f32 %v72, %v387
  %389 = vmatmul.bf16.gmra.mxu0 %v267
  %v390 = vpop.f32.mrf.mxu0
  %v391 = vadd.f32 %v72, %v390
  %v392 = vpop.f32.mrf.mxu0
  %v393 = vadd.f32 %v72, %v392
  %394 = vmatmul.bf16.gmra.mxu0 %v270
  %v395 = vpop.f32.mrf.mxu0
  %v396 = vadd.f32 %v72, %v395
  %v397 = vpop.f32.mrf.mxu0
  %v398 = vadd.f32 %v72, %v397
  %399 = vmatmul.bf16.gmra.mxu0 %v273
  %v400 = vpop.f32.mrf.mxu0
  %v401 = vadd.f32 %v72, %v400
  %v402 = vpop.f32.mrf.mxu0
  %v403 = vadd.f32 %v72, %v402
  %404 = vmatmul.bf16.gmra.mxu0 %v276
  %v405 = vpop.f32.mrf.mxu0
  %v406 = vadd.f32 %v72, %v405
  %v407 = vpop.f32.mrf.mxu0
  %v408 = vadd.f32 %v72, %v407
  %409 = vmatmul.bf16.gmra.mxu0 %v279
  %v410 = vpop.f32.mrf.mxu0
  %v411 = vadd.f32 %v72, %v410
  %v412 = vpop.f32.mrf.mxu0
  %v413 = vadd.f32 %v72, %v412
  %414 = vdwg.mxu0
  %v415 = vmul.f32 %v291, 0.2
  %v416 = vmul.f32 %v293, 0.2
  %v417 = vmul.f32 %v296, 0.2
  %v418 = vmul.f32 %v298, 0.2
  %v419 = vmul.f32 %v301, 0.2
  %v420 = vmul.f32 %v303, 0.2
  %v421 = vmul.f32 %v306, 0.2
  %v422 = vmul.f32 %v308, 0.2
  %v423 = vmul.f32 %v311, 0.2
  %v424 = vmul.f32 %v313, 0.2
  %v425 = vmul.f32 %v316, 0.2
  %v426 = vmul.f32 %v318, 0.2
  %v427 = vmul.f32 %v321, 0.2
  %v428 = vmul.f32 %v323, 0.2
  %v429 = vmul.f32 %v326, 0.2
  %v430 = vmul.f32 %v328, 0.2
  %v431 = vmul.f32 %v331, 0.2
  %v432 = vmul.f32 %v333, 0.2
  %v433 = vmul.f32 %v336, 0.2
  %v434 = vmul.f32 %v338, 0.2
  %v435 = vmul.f32 %v341, 0.2
  %v436 = vmul.f32 %v343, 0.2
  %v437 = vmul.f32 %v346, 0.2
  %v438 = vmul.f32 %v348, 0.2
  %v439 = vmul.f32 %v351, 0.2
  %v440 = vmul.f32 %v353, 0.2
  %v441 = vmul.f32 %v356, 0.2
  %v442 = vmul.f32 %v358, 0.2
  %v443 = vmul.f32 %v361, 0.2
  %v444 = vmul.f32 %v363, 0.2
  %v445 = vmul.f32 %v366, 0.2
  %v446 = vmul.f32 %v368, 0.2
  %v447 = vmul.f32 %v371, 0.2
  %v448 = vmul.f32 %v373, 0.2
  %v449 = vmul.f32 %v376, 0.2
  %v450 = vmul.f32 %v378, 0.2
  %v451 = vmul.f32 %v381, 0.2
  %v452 = vmul.f32 %v383, 0.2
  %v453 = vmul.f32 %v386, 0.2
  %v454 = vmul.f32 %v388, 0.2
  %v455 = vmul.f32 %v391, 0.2
  %v456 = vmul.f32 %v393, 0.2
  %v457 = vmul.f32 %v396, 0.2
  %v458 = vmul.f32 %v398, 0.2
  %v459 = vmul.f32 %v401, 0.2
  %v460 = vmul.f32 %v403, 0.2
  %v461 = vmul.f32 %v406, 0.2
  %v462 = vmul.f32 %v408, 0.2
  %v463 = vmul.f32 %v411, 0.2
  %v464 = vmul.f32 %v413, 0.2
  %v465 = vmax.f32 %v291, %v415
  %v466 = vmax.f32 %v293, %v416
  %v467 = vmax.f32 %v296, %v417
  %v468 = vmax.f32 %v298, %v418
  %v469 = vmax.f32 %v301, %v419
  %v470 = vmax.f32 %v303, %v420
  %v471 = vmax.f32 %v306, %v421
  %v472 = vmax.f32 %v308, %v422
  %v473 = vmax.f32 %v311, %v423
  %v474 = vmax.f32 %v313, %v424
  %v475 = vmax.f32 %v316, %v425
  %v476 = vmax.f32 %v318, %v426
  %v477 = vmax.f32 %v321, %v427
  %v478 = vmax.f32 %v323, %v428
  %v479 = vmax.f32 %v326, %v429
  %v480 = vmax.f32 %v328, %v430
  %v481 = vmax.f32 %v331, %v431
  %v482 = vmax.f32 %v333, %v432
  %v483 = vmax.f32 %v336, %v433
  %v484 = vmax.f32 %v338, %v434
  %v485 = vmax.f32 %v341, %v435
  %v486 = vmax.f32 %v343, %v436
  %v487 = vmax.f32 %v346, %v437
  %v488 = vmax.f32 %v348, %v438
  %v489 = vmax.f32 %v351, %v439
  %v490 = vmax.f32 %v353, %v440
  %v491 = vmax.f32 %v356, %v441
  %v492 = vmax.f32 %v358, %v442
  %v493 = vmax.f32 %v361, %v443
  %v494 = vmax.f32 %v363, %v444
  %v495 = vmax.f32 %v366, %v445
  %v496 = vmax.f32 %v368, %v446
  %v497 = vmax.f32 %v371, %v447
  %v498 = vmax.f32 %v373, %v448
  %v499 = vmax.f32 %v376, %v449
  %v500 = vmax.f32 %v378, %v450
  %v501 = vmax.f32 %v381, %v451
  %v502 = vmax.f32 %v383, %v452
  %v503 = vmax.f32 %v386, %v453
  %v504 = vmax.f32 %v388, %v454
  %v505 = vmax.f32 %v391, %v455
  %v506 = vmax.f32 %v393, %v456
  %v507 = vmax.f32 %v396, %v457
  %v508 = vmax.f32 %v398, %v458
  %v509 = vmax.f32 %v401, %v459
  %v510 = vmax.f32 %v403, %v460
  %v511 = vmax.f32 %v406, %v461
  %v512 = vmax.f32 %v408, %v462
  %v513 = vmax.f32 %v411, %v463
  %v514 = vmax.f32 %v413, %v464
  %v515 = vpack.c.bf16 %v465, %v465
  %v516 = vpack.c.bf16 %v466, %v466
  %v517 = vpack.c.bf16 %v467, %v467
  %v518 = vpack.c.bf16 %v468, %v468
  %v519 = vpack.c.bf16 %v469, %v469
  %v520 = vpack.c.bf16 %v470, %v470
  %v521 = vpack.c.bf16 %v471, %v471
  %v522 = vpack.c.bf16 %v472, %v472
  %v523 = vpack.c.bf16 %v473, %v473
  %v524 = vpack.c.bf16 %v474, %v474
  %v525 = vpack.c.bf16 %v475, %v475
  %v526 = vpack.c.bf16 %v476, %v476
  %v527 = vpack.c.bf16 %v477, %v477
  %v528 = vpack.c.bf16 %v478, %v478
  %v529 = vpack.c.bf16 %v479, %v479
  %v530 = vpack.c.bf16 %v480, %v480
  %v531 = vpack.c.bf16 %v481, %v481
  %v532 = vpack.c.bf16 %v482, %v482
  %v533 = vpack.c.bf16 %v483, %v483
  %v534 = vpack.c.bf16 %v484, %v484
  %v535 = vpack.c.bf16 %v485, %v485
  %v536 = vpack.c.bf16 %v486, %v486
  %v537 = vpack.c.bf16 %v487, %v487
  %v538 = vpack.c.bf16 %v488, %v488
  %v539 = vpack.c.bf16 %v489, %v489
  %v540 = vpack.c.bf16 %v490, %v490
  %v541 = vpack.c.bf16 %v491, %v491
  %v542 = vpack.c.bf16 %v492, %v492
  %v543 = vpack.c.bf16 %v493, %v493
  %v544 = vpack.c.bf16 %v494, %v494
  %v545 = vpack.c.bf16 %v495, %v495
  %v546 = vpack.c.bf16 %v496, %v496
  %v547 = vpack.c.bf16 %v497, %v497
  %v548 = vpack.c.bf16 %v498, %v498
  %v549 = vpack.c.bf16 %v499, %v499
  %v550 = vpack.c.bf16 %v500, %v500
  %v551 = vpack.c.bf16 %v501, %v501
  %v552 = vpack.c.bf16 %v502, %v502
  %v553 = vpack.c.bf16 %v503, %v503
  %v554 = vpack.c.bf16 %v504, %v504
  %v555 = vpack.c.bf16 %v505, %v505
  %v556 = vpack.c.bf16 %v506, %v506
  %v557 = vpack.c.bf16 %v507, %v507
  %v558 = vpack.c.bf16 %v508, %v508
  %v559 = vpack.c.bf16 %v509, %v509
  %v560 = vpack.c.bf16 %v510, %v510
  %v561 = vpack.c.bf16 %v511, %v511
  %v562 = vpack.c.bf16 %v512, %v512
  %v563 = vpack.c.bf16 %v513, %v513
  %v564 = vpack.c.bf16 %v514, %v514
  %vm565 = vcmask 519168
  %566 = vst.msk [vmem:[%s3] sm:$0xf] %vm565, %v515
  %567 = vst.msk [vmem:[%s3 + $0x4] sm:$0xf] %vm565, %v516
  %568 = vst.msk [vmem:[%s3 + $0x8] sm:$0xf] %vm565, %v517
  %569 = vst.msk [vmem:[%s3 + $0xc] sm:$0xf] %vm565, %v518
  %570 = vst.msk [vmem:[%s3 + $0x10] sm:$0xf] %vm565, %v519
  %571 = vst.msk [vmem:[%s3 + $0x14] sm:$0xf] %vm565, %v520
  %572 = vst.msk [vmem:[%s3 + $0x18] sm:$0xf] %vm565, %v521
  %573 = vst.msk [vmem:[%s3 + $0x1c] sm:$0xf] %vm565, %v522
  %574 = vst.msk [vmem:[%s3 + $0x20] sm:$0xf] %vm565, %v523
  %575 = vst.msk [vmem:[%s3 + $0x24] sm:$0xf] %vm565, %v524
  %576 = vst.msk [vmem:[%s3 + $0x28] sm:$0xf] %vm565, %v525
  %577 = vst.msk [vmem:[%s3 + $0x2c] sm:$0xf] %vm565, %v526
  %578 = vst.msk [vmem:[%s3 + $0x30] sm:$0xf] %vm565, %v527
  %579 = vst.msk [vmem:[%s3 + $0x34] sm:$0xf] %vm565, %v528
  %580 = vst.msk [vmem:[%s3 + $0x38] sm:$0xf] %vm565, %v529
  %581 = vst.msk [vmem:[%s3 + $0x3c] sm:$0xf] %vm565, %v530
  %582 = vst.msk [vmem:[%s3 + $0x40] sm:$0xf] %vm565, %v531
  %583 = vst.msk [vmem:[%s3 + $0x44] sm:$0xf] %vm565, %v532
  %584 = vst.msk [vmem:[%s3 + $0x48] sm:$0xf] %vm565, %v533
  %585 = vst.msk [vmem:[%s3 + $0x4c] sm:$0xf] %vm565, %v534
  %586 = vst.msk [vmem:[%s3 + $0x50] sm:$0xf] %vm565, %v535
  %587 = vst.msk [vmem:[%s3 + $0x54] sm:$0xf] %vm565, %v536
  %588 = vst.msk [vmem:[%s3 + $0x58] sm:$0xf] %vm565, %v537
  %589 = vst.msk [vmem:[%s3 + $0x5c] sm:$0xf] %vm565, %v538
  %590 = vst.msk [vmem:[%s3 + $0x60] sm:$0xf] %vm565, %v539
  %591 = vst.msk [vmem:[%s3 + $0x64] sm:$0xf] %vm565, %v540
  %592 = vst.msk [vmem:[%s3 + $0x68] sm:$0xf] %vm565, %v541
  %593 = vst.msk [vmem:[%s3 + $0x6c] sm:$0xf] %vm565, %v542
  %594 = vst.msk [vmem:[%s3 + $0x70] sm:$0xf] %vm565, %v543
  %595 = vst.msk [vmem:[%s3 + $0x74] sm:$0xf] %vm565, %v544
  %596 = vst.msk [vmem:[%s3 + $0x78] sm:$0xf] %vm565, %v545
  %597 = vst.msk [vmem:[%s3 + $0x7c] sm:$0xf] %vm565, %v546
  %598 = vst.msk [vmem:[%s3 + $0x80] sm:$0xf] %vm565, %v547
  %599 = vst.msk [vmem:[%s3 + $0x84] sm:$0xf] %vm565, %v548
  %600 = vst.msk [vmem:[%s3 + $0x88] sm:$0xf] %vm565, %v549
  %601 = vst.msk [vmem:[%s3 + $0x8c] sm:$0xf] %vm565, %v550
  %602 = vst.msk [vmem:[%s3 + $0x90] sm:$0xf] %vm565, %v551
  %603 = vst.msk [vmem:[%s3 + $0x94] sm:$0xf] %vm565, %v552
  %604 = vst.msk [vmem:[%s3 + $0x98] sm:$0xf] %vm565, %v553
  %605 = vst.msk [vmem:[%s3 + $0x9c] sm:$0xf] %vm565, %v554
  %606 = vst.msk [vmem:[%s3 + $0xa0] sm:$0xf] %vm565, %v555
  %607 = vst.msk [vmem:[%s3 + $0xa4] sm:$0xf] %vm565, %v556
  %608 = vst.msk [vmem:[%s3 + $0xa8] sm:$0xf] %vm565, %v557
  %609 = vst.msk [vmem:[%s3 + $0xac] sm:$0xf] %vm565, %v558
  %610 = vst.msk [vmem:[%s3 + $0xb0] sm:$0xf] %vm565, %v559
  %611 = vst.msk [vmem:[%s3 + $0xb4] sm:$0xf] %vm565, %v560
  %612 = vst.msk [vmem:[%s3 + $0xb8] sm:$0xf] %vm565, %v561
  %613 = vst.msk [vmem:[%s3 + $0xbc] sm:$0xf] %vm565, %v562
  %614 = vst.msk [vmem:[%s3 + $0xc0] sm:$0xf] %vm565, %v563
  %615 = vst.msk [vmem:[%s3 + $0xc4] sm:$0xf] %vm565, %v564
  %s616 = smul.u32 0, 400
  %v617 = vlaneseq
  %v618 = vshrl.u32 %v617, 7
  %v619 = vadd.s32 %v618, 8
  %v620 = vadd.s32 %v618, 16
  %v621 = vadd.s32 %v618, 24
  %v622 = vadd.s32 %v618, 32
  %v623 = vadd.s32 %v618, 40
  %v624 = vadd.s32 %v618, 48
  %v625 = vadd.s32 %v618, 56
  %v626 = vadd.s32 %v618, 64
  %v627 = vadd.s32 %v618, 72
  %v628 = vadd.s32 %v618, 80
  %v629 = vadd.s32 %v618, 88
  %v630 = vadd.s32 %v618, 96
  %v631 = vadd.s32 %v618, 104
  %v632 = vadd.s32 %v618, 112
  %v633 = vadd.s32 %v618, 120
  %v634 = vadd.s32 %v618, 128
  %v635 = vadd.s32 %v618, 136
  %v636 = vadd.s32 %v618, 144
  %v637 = vadd.s32 %v618, 152
  %v638 = vadd.s32 %v618, 160
  %v639 = vadd.s32 %v618, 168
  %v640 = vadd.s32 %v618, 176
  %v641 = vadd.s32 %v618, 184
  %v642 = vadd.s32 %v618, 192
  %v643 = vadd.s32 %v618, 200
  %v644 = vadd.s32 %v618, 208
  %v645 = vadd.s32 %v618, 216
  %v646 = vadd.s32 %v618, 224
  %v647 = vadd.s32 %v618, 232
  %v648 = vadd.s32 %v618, 240
  %v649 = vadd.s32 %v618, 248
  %v650 = vadd.s32 %v618, 256
  %v651 = vadd.s32 %v618, 264
  %v652 = vadd.s32 %v618, 272
  %v653 = vadd.s32 %v618, 280
  %v654 = vadd.s32 %v618, 288
  %v655 = vadd.s32 %v618, 296
  %v656 = vadd.s32 %v618, 304
  %v657 = vadd.s32 %v618, 312
  %v658 = vadd.s32 %v618, 320
  %v659 = vadd.s32 %v618, 328
  %v660 = vadd.s32 %v618, 336
  %v661 = vadd.s32 %v618, 344
  %v662 = vadd.s32 %v618, 352
  %v663 = vadd.s32 %v618, 360
  %v664 = vadd.s32 %v618, 368
  %v665 = vadd.s32 %v618, 376
  %v666 = vadd.s32 %v618, 384
  %v667 = vadd.s32 %v618, 392
  %v668 = vstv %s616
  %v669 = vadd.s32 %v668, %v618
  %v670 = vadd.s32 %v668, %v619
  %v671 = vadd.s32 %v668, %v620
  %v672 = vadd.s32 %v668, %v621
  %v673 = vadd.s32 %v668, %v622
  %v674 = vadd.s32 %v668, %v623
  %v675 = vadd.s32 %v668, %v624
  %v676 = vadd.s32 %v668, %v625
  %v677 = vadd.s32 %v668, %v626
  %v678 = vadd.s32 %v668, %v627
  %v679 = vadd.s32 %v668, %v628
  %v680 = vadd.s32 %v668, %v629
  %v681 = vadd.s32 %v668, %v630
  %v682 = vadd.s32 %v668, %v631
  %v683 = vadd.s32 %v668, %v632
  %v684 = vadd.s32 %v668, %v633
  %v685 = vadd.s32 %v668, %v634
  %v686 = vadd.s32 %v668, %v635
  %v687 = vadd.s32 %v668, %v636
  %v688 = vadd.s32 %v668, %v637
  %v689 = vadd.s32 %v668, %v638
  %v690 = vadd.s32 %v668, %v639
  %v691 = vadd.s32 %v668, %v640
  %v692 = vadd.s32 %v668, %v641
  %v693 = vadd.s32 %v668, %v642
  %v694 = vadd.s32 %v668, %v643
  %v695 = vadd.s32 %v668, %v644
  %v696 = vadd.s32 %v668, %v645
  %v697 = vadd.s32 %v668, %v646
  %v698 = vadd.s32 %v668, %v647
  %v699 = vadd.s32 %v668, %v648
  %v700 = vadd.s32 %v668, %v649
  %v701 = vadd.s32 %v668, %v650
  %v702 = vadd.s32 %v668, %v651
  %v703 = vadd.s32 %v668, %v652
  %v704 = vadd.s32 %v668, %v653
  %v705 = vadd.s32 %v668, %v654
  %v706 = vadd.s32 %v668, %v655
  %v707 = vadd.s32 %v668, %v656
  %v708 = vadd.s32 %v668, %v657
  %v709 = vadd.s32 %v668, %v658
  %v710 = vadd.s32 %v668, %v659
  %v711 = vadd.s32 %v668, %v660
  %v712 = vadd.s32 %v668, %v661
  %v713 = vadd.s32 %v668, %v662
  %v714 = vadd.s32 %v668, %v663
  %v715 = vadd.s32 %v668, %v664
  %v716 = vadd.s32 %v668, %v665
  %v717 = vadd.s32 %v668, %v666
  %v718 = vadd.s32 %v668, %v667
  %vm719 = vcmp.lt.s32.totalorder %v669, 392
  %vm720 = vcmp.lt.s32.totalorder %v670, 392
  %vm721 = vcmp.lt.s32.totalorder %v671, 392
  %vm722 = vcmp.lt.s32.totalorder %v672, 392
  %vm723 = vcmp.lt.s32.totalorder %v673, 392
  %vm724 = vcmp.lt.s32.totalorder %v674, 392
  %vm725 = vcmp.lt.s32.totalorder %v675, 392
  %vm726 = vcmp.lt.s32.totalorder %v676, 392
  %vm727 = vcmp.lt.s32.totalorder %v677, 392
  %vm728 = vcmp.lt.s32.totalorder %v678, 392
  %vm729 = vcmp.lt.s32.totalorder %v679, 392
  %vm730 = vcmp.lt.s32.totalorder %v680, 392
  %vm731 = vcmp.lt.s32.totalorder %v681, 392
  %vm732 = vcmp.lt.s32.totalorder %v682, 392
  %vm733 = vcmp.lt.s32.totalorder %v683, 392
  %vm734 = vcmp.lt.s32.totalorder %v684, 392
  %vm735 = vcmp.lt.s32.totalorder %v685, 392
  %vm736 = vcmp.lt.s32.totalorder %v686, 392
  %vm737 = vcmp.lt.s32.totalorder %v687, 392
  %vm738 = vcmp.lt.s32.totalorder %v688, 392
  %vm739 = vcmp.lt.s32.totalorder %v689, 392
  %vm740 = vcmp.lt.s32.totalorder %v690, 392
  %vm741 = vcmp.lt.s32.totalorder %v691, 392
  %vm742 = vcmp.lt.s32.totalorder %v692, 392
  %vm743 = vcmp.lt.s32.totalorder %v693, 392
  %vm744 = vcmp.lt.s32.totalorder %v694, 392
  %vm745 = vcmp.lt.s32.totalorder %v695, 392
  %vm746 = vcmp.lt.s32.totalorder %v696, 392
  %vm747 = vcmp.lt.s32.totalorder %v697, 392
  %vm748 = vcmp.lt.s32.totalorder %v698, 392
  %vm749 = vcmp.lt.s32.totalorder %v699, 392
  %vm750 = vcmp.lt.s32.totalorder %v700, 392
  %vm751 = vcmp.lt.s32.totalorder %v701, 392
  %vm752 = vcmp.lt.s32.totalorder %v702, 392
  %vm753 = vcmp.lt.s32.totalorder %v703, 392
  %vm754 = vcmp.lt.s32.totalorder %v704, 392
  %vm755 = vcmp.lt.s32.totalorder %v705, 392
  %vm756 = vcmp.lt.s32.totalorder %v706, 392
  %vm757 = vcmp.lt.s32.totalorder %v707, 392
  %vm758 = vcmp.lt.s32.totalorder %v708, 392
  %vm759 = vcmp.lt.s32.totalorder %v709, 392
  %vm760 = vcmp.lt.s32.totalorder %v710, 392
  %vm761 = vcmp.lt.s32.totalorder %v711, 392
  %vm762 = vcmp.lt.s32.totalorder %v712, 392
  %vm763 = vcmp.lt.s32.totalorder %v713, 392
  %vm764 = vcmp.lt.s32.totalorder %v714, 392
  %vm765 = vcmp.lt.s32.totalorder %v715, 392
  %vm766 = vcmp.lt.s32.totalorder %v716, 392
  %vm767 = vcmp.lt.s32.totalorder %v717, 392
  %vm768 = vcmp.lt.s32.totalorder %v718, 392
  %v769 = vsel %vm719, 1, 0
  %v770 = vsel %vm720, 1, 0
  %v771 = vsel %vm721, 1, 0
  %v772 = vsel %vm722, 1, 0
  %v773 = vsel %vm723, 1, 0
  %v774 = vsel %vm724, 1, 0
  %v775 = vsel %vm725, 1, 0
  %v776 = vsel %vm726, 1, 0
  %v777 = vsel %vm727, 1, 0
  %v778 = vsel %vm728, 1, 0
  %v779 = vsel %vm729, 1, 0
  %v780 = vsel %vm730, 1, 0
  %v781 = vsel %vm731, 1, 0
  %v782 = vsel %vm732, 1, 0
  %v783 = vsel %vm733, 1, 0
  %v784 = vsel %vm734, 1, 0
  %v785 = vsel %vm735, 1, 0
  %v786 = vsel %vm736, 1, 0
  %v787 = vsel %vm737, 1, 0
  %v788 = vsel %vm738, 1, 0
  %v789 = vsel %vm739, 1, 0
  %v790 = vsel %vm740, 1, 0
  %v791 = vsel %vm741, 1, 0
  %v792 = vsel %vm742, 1, 0
  %v793 = vsel %vm743, 1, 0
  %v794 = vsel %vm744, 1, 0
  %v795 = vsel %vm745, 1, 0
  %v796 = vsel %vm746, 1, 0
  %v797 = vsel %vm747, 1, 0
  %v798 = vsel %vm748, 1, 0
  %v799 = vsel %vm749, 1, 0
  %v800 = vsel %vm750, 1, 0
  %v801 = vsel %vm751, 1, 0
  %v802 = vsel %vm752, 1, 0
  %v803 = vsel %vm753, 1, 0
  %v804 = vsel %vm754, 1, 0
  %v805 = vsel %vm755, 1, 0
  %v806 = vsel %vm756, 1, 0
  %v807 = vsel %vm757, 1, 0
  %v808 = vsel %vm758, 1, 0
  %v809 = vsel %vm759, 1, 0
  %v810 = vsel %vm760, 1, 0
  %v811 = vsel %vm761, 1, 0
  %v812 = vsel %vm762, 1, 0
  %v813 = vsel %vm763, 1, 0
  %v814 = vsel %vm764, 1, 0
  %v815 = vsel %vm765, 1, 0
  %v816 = vsel %vm766, 1, 0
  %v817 = vsel %vm767, 1, 0
  %v818 = vsel %vm768, 1, 0
  %vm819 = vcmp.eq.s32.totalorder %v769, 1
  %vm820 = vcmp.eq.s32.totalorder %v770, 1
  %vm821 = vcmp.eq.s32.totalorder %v771, 1
  %vm822 = vcmp.eq.s32.totalorder %v772, 1
  %vm823 = vcmp.eq.s32.totalorder %v773, 1
  %vm824 = vcmp.eq.s32.totalorder %v774, 1
  %vm825 = vcmp.eq.s32.totalorder %v775, 1
  %vm826 = vcmp.eq.s32.totalorder %v776, 1
  %vm827 = vcmp.eq.s32.totalorder %v777, 1
  %vm828 = vcmp.eq.s32.totalorder %v778, 1
  %vm829 = vcmp.eq.s32.totalorder %v779, 1
  %vm830 = vcmp.eq.s32.totalorder %v780, 1
  %vm831 = vcmp.eq.s32.totalorder %v781, 1
  %vm832 = vcmp.eq.s32.totalorder %v782, 1
  %vm833 = vcmp.eq.s32.totalorder %v783, 1
  %vm834 = vcmp.eq.s32.totalorder %v784, 1
  %vm835 = vcmp.eq.s32.totalorder %v785, 1
  %vm836 = vcmp.eq.s32.totalorder %v786, 1
  %vm837 = vcmp.eq.s32.totalorder %v787, 1
  %vm838 = vcmp.eq.s32.totalorder %v788, 1
  %vm839 = vcmp.eq.s32.totalorder %v789, 1
  %vm840 = vcmp.eq.s32.totalorder %v790, 1
  %vm841 = vcmp.eq.s32.totalorder %v791, 1
  %vm842 = vcmp.eq.s32.totalorder %v792, 1
  %vm843 = vcmp.eq.s32.totalorder %v793, 1
  %vm844 = vcmp.eq.s32.totalorder %v794, 1
  %vm845 = vcmp.eq.s32.totalorder %v795, 1
  %vm846 = vcmp.eq.s32.totalorder %v796, 1
  %vm847 = vcmp.eq.s32.totalorder %v797, 1
  %vm848 = vcmp.eq.s32.totalorder %v798, 1
  %vm849 = vcmp.eq.s32.totalorder %v799, 1
  %vm850 = vcmp.eq.s32.totalorder %v800, 1
  %vm851 = vcmp.eq.s32.totalorder %v801, 1
  %vm852 = vcmp.eq.s32.totalorder %v802, 1
  %vm853 = vcmp.eq.s32.totalorder %v803, 1
  %vm854 = vcmp.eq.s32.totalorder %v804, 1
  %vm855 = vcmp.eq.s32.totalorder %v805, 1
  %vm856 = vcmp.eq.s32.totalorder %v806, 1
  %vm857 = vcmp.eq.s32.totalorder %v807, 1
  %vm858 = vcmp.eq.s32.totalorder %v808, 1
  %vm859 = vcmp.eq.s32.totalorder %v809, 1
  %vm860 = vcmp.eq.s32.totalorder %v810, 1
  %vm861 = vcmp.eq.s32.totalorder %v811, 1
  %vm862 = vcmp.eq.s32.totalorder %v812, 1
  %vm863 = vcmp.eq.s32.totalorder %v813, 1
  %vm864 = vcmp.eq.s32.totalorder %v814, 1
  %vm865 = vcmp.eq.s32.totalorder %v815, 1
  %vm866 = vcmp.eq.s32.totalorder %v816, 1
  %vm867 = vcmp.eq.s32.totalorder %v817, 1
  %vm868 = vcmp.eq.s32.totalorder %v818, 1
  %v869 = vsel %vm819, %v465, 0.0
  %v870 = vsel %vm820, %v466, 0.0
  %v871 = vsel %vm821, %v467, 0.0
  %v872 = vsel %vm822, %v468, 0.0
  %v873 = vsel %vm823, %v469, 0.0
  %v874 = vsel %vm824, %v470, 0.0
  %v875 = vsel %vm825, %v471, 0.0
  %v876 = vsel %vm826, %v472, 0.0
  %v877 = vsel %vm827, %v473, 0.0
  %v878 = vsel %vm828, %v474, 0.0
  %v879 = vsel %vm829, %v475, 0.0
  %v880 = vsel %vm830, %v476, 0.0
  %v881 = vsel %vm831, %v477, 0.0
  %v882 = vsel %vm832, %v478, 0.0
  %v883 = vsel %vm833, %v479, 0.0
  %v884 = vsel %vm834, %v480, 0.0
  %v885 = vsel %vm835, %v481, 0.0
  %v886 = vsel %vm836, %v482, 0.0
  %v887 = vsel %vm837, %v483, 0.0
  %v888 = vsel %vm838, %v484, 0.0
  %v889 = vsel %vm839, %v485, 0.0
  %v890 = vsel %vm840, %v486, 0.0
  %v891 = vsel %vm841, %v487, 0.0
  %v892 = vsel %vm842, %v488, 0.0
  %v893 = vsel %vm843, %v489, 0.0
  %v894 = vsel %vm844, %v490, 0.0
  %v895 = vsel %vm845, %v491, 0.0
  %v896 = vsel %vm846, %v492, 0.0
  %v897 = vsel %vm847, %v493, 0.0
  %v898 = vsel %vm848, %v494, 0.0
  %v899 = vsel %vm849, %v495, 0.0
  %v900 = vsel %vm850, %v496, 0.0
  %v901 = vsel %vm851, %v497, 0.0
  %v902 = vsel %vm852, %v498, 0.0
  %v903 = vsel %vm853, %v499, 0.0
  %v904 = vsel %vm854, %v500, 0.0
  %v905 = vsel %vm855, %v501, 0.0
  %v906 = vsel %vm856, %v502, 0.0
  %v907 = vsel %vm857, %v503, 0.0
  %v908 = vsel %vm858, %v504, 0.0
  %v909 = vsel %vm859, %v505, 0.0
  %v910 = vsel %vm860, %v506, 0.0
  %v911 = vsel %vm861, %v507, 0.0
  %v912 = vsel %vm862, %v508, 0.0
  %v913 = vsel %vm863, %v509, 0.0
  %v914 = vsel %vm864, %v510, 0.0
  %v915 = vsel %vm865, %v511, 0.0
  %v916 = vsel %vm866, %v512, 0.0
  %v917 = vsel %vm867, %v513, 0.0
  %v918 = vsel %vm868, %v514, 0.0
  %vm919 = vcmask 523264
  %v920 = vsel %vm919, %v869, 0.0
  %v921 = vsel %vm919, %v870, 0.0
  %v922 = vadd.f32 %v920, %v921
  %v923 = vsel %vm919, %v871, 0.0
  %v924 = vadd.f32 %v922, %v923
  %v925 = vsel %vm919, %v872, 0.0
  %v926 = vadd.f32 %v924, %v925
  %v927 = vsel %vm919, %v873, 0.0
  %v928 = vadd.f32 %v926, %v927
  %v929 = vsel %vm919, %v874, 0.0
  %v930 = vadd.f32 %v928, %v929
  %v931 = vsel %vm919, %v875, 0.0
  %v932 = vadd.f32 %v930, %v931
  %v933 = vsel %vm919, %v876, 0.0
  %v934 = vadd.f32 %v932, %v933
  %v935 = vsel %vm919, %v877, 0.0
  %v936 = vadd.f32 %v934, %v935
  %v937 = vsel %vm919, %v878, 0.0
  %v938 = vadd.f32 %v936, %v937
  %v939 = vsel %vm919, %v879, 0.0
  %v940 = vadd.f32 %v938, %v939
  %v941 = vsel %vm919, %v880, 0.0
  %v942 = vadd.f32 %v940, %v941
  %v943 = vsel %vm919, %v881, 0.0
  %v944 = vadd.f32 %v942, %v943
  %v945 = vsel %vm919, %v882, 0.0
  %v946 = vadd.f32 %v944, %v945
  %v947 = vsel %vm919, %v883, 0.0
  %v948 = vadd.f32 %v946, %v947
  %v949 = vsel %vm919, %v884, 0.0
  %v950 = vadd.f32 %v948, %v949
  %v951 = vsel %vm919, %v885, 0.0
  %v952 = vadd.f32 %v950, %v951
  %v953 = vsel %vm919, %v886, 0.0
  %v954 = vadd.f32 %v952, %v953
  %v955 = vsel %vm919, %v887, 0.0
  %v956 = vadd.f32 %v954, %v955
  %v957 = vsel %vm919, %v888, 0.0
  %v958 = vadd.f32 %v956, %v957
  %v959 = vsel %vm919, %v889, 0.0
  %v960 = vadd.f32 %v958, %v959
  %v961 = vsel %vm919, %v890, 0.0
  %v962 = vadd.f32 %v960, %v961
  %v963 = vsel %vm919, %v891, 0.0
  %v964 = vadd.f32 %v962, %v963
  %v965 = vsel %vm919, %v892, 0.0
  %v966 = vadd.f32 %v964, %v965
  %v967 = vsel %vm919, %v893, 0.0
  %v968 = vadd.f32 %v966, %v967
  %v969 = vsel %vm919, %v894, 0.0
  %v970 = vadd.f32 %v968, %v969
  %v971 = vsel %vm919, %v895, 0.0
  %v972 = vadd.f32 %v970, %v971
  %v973 = vsel %vm919, %v896, 0.0
  %v974 = vadd.f32 %v972, %v973
  %v975 = vsel %vm919, %v897, 0.0
  %v976 = vadd.f32 %v974, %v975
  %v977 = vsel %vm919, %v898, 0.0
  %v978 = vadd.f32 %v976, %v977
  %v979 = vsel %vm919, %v899, 0.0
  %v980 = vadd.f32 %v978, %v979
  %v981 = vsel %vm919, %v900, 0.0
  %v982 = vadd.f32 %v980, %v981
  %v983 = vsel %vm919, %v901, 0.0
  %v984 = vadd.f32 %v982, %v983
  %v985 = vsel %vm919, %v902, 0.0
  %v986 = vadd.f32 %v984, %v985
  %v987 = vsel %vm919, %v903, 0.0
  %v988 = vadd.f32 %v986, %v987
  %v989 = vsel %vm919, %v904, 0.0
  %v990 = vadd.f32 %v988, %v989
  %v991 = vsel %vm919, %v905, 0.0
  %v992 = vadd.f32 %v990, %v991
  %v993 = vsel %vm919, %v906, 0.0
  %v994 = vadd.f32 %v992, %v993
  %v995 = vsel %vm919, %v907, 0.0
  %v996 = vadd.f32 %v994, %v995
  %v997 = vsel %vm919, %v908, 0.0
  %v998 = vadd.f32 %v996, %v997
  %v999 = vsel %vm919, %v909, 0.0
  %v1000 = vadd.f32 %v998, %v999
  %v1001 = vsel %vm919, %v910, 0.0
  %v1002 = vadd.f32 %v1000, %v1001
  %v1003 = vsel %vm919, %v911, 0.0
  %v1004 = vadd.f32 %v1002, %v1003
  %v1005 = vsel %vm919, %v912, 0.0
  %v1006 = vadd.f32 %v1004, %v1005
  %v1007 = vsel %vm919, %v913, 0.0
  %v1008 = vadd.f32 %v1006, %v1007
  %v1009 = vsel %vm919, %v914, 0.0
  %v1010 = vadd.f32 %v1008, %v1009
  %v1011 = vsel %vm919, %v915, 0.0
  %v1012 = vadd.f32 %v1010, %v1011
  %v1013 = vsel %vm919, %v916, 0.0
  %v1014 = vadd.f32 %v1012, %v1013
  %v1015 = vsel %vm919, %v917, 0.0
  %v1016 = vadd.f32 %v1014, %v1015
  %v1017 = vsel %vm919, %v918, 0.0
  %v1018 = vadd.f32 %v1016, %v1017
  %v1019 = vrot.slane %v1018, 4
  %v1020 = vadd.f32 %v1018, %v1019
  %v1021 = vrot.slane %v1020, 2
  %v1022 = vadd.f32 %v1020, %v1021
  %v1023 = vrot.slane %v1022, 1
  %v1024 = vadd.f32 %v1022, %v1023
  %v1025 = vmul.f32 %v869, %v869
  %v1026 = vmul.f32 %v870, %v870
  %v1027 = vmul.f32 %v871, %v871
  %v1028 = vmul.f32 %v872, %v872
  %v1029 = vmul.f32 %v873, %v873
  %v1030 = vmul.f32 %v874, %v874
  %v1031 = vmul.f32 %v875, %v875
  %v1032 = vmul.f32 %v876, %v876
  %v1033 = vmul.f32 %v877, %v877
  %v1034 = vmul.f32 %v878, %v878
  %v1035 = vmul.f32 %v879, %v879
  %v1036 = vmul.f32 %v880, %v880
  %v1037 = vmul.f32 %v881, %v881
  %v1038 = vmul.f32 %v882, %v882
  %v1039 = vmul.f32 %v883, %v883
  %v1040 = vmul.f32 %v884, %v884
  %v1041 = vmul.f32 %v885, %v885
  %v1042 = vmul.f32 %v886, %v886
  %v1043 = vmul.f32 %v887, %v887
  %v1044 = vmul.f32 %v888, %v888
  %v1045 = vmul.f32 %v889, %v889
  %v1046 = vmul.f32 %v890, %v890
  %v1047 = vmul.f32 %v891, %v891
  %v1048 = vmul.f32 %v892, %v892
  %v1049 = vmul.f32 %v893, %v893
  %v1050 = vmul.f32 %v894, %v894
  %v1051 = vmul.f32 %v895, %v895
  %v1052 = vmul.f32 %v896, %v896
  %v1053 = vmul.f32 %v897, %v897
  %v1054 = vmul.f32 %v898, %v898
  %v1055 = vmul.f32 %v899, %v899
  %v1056 = vmul.f32 %v900, %v900
  %v1057 = vmul.f32 %v901, %v901
  %v1058 = vmul.f32 %v902, %v902
  %v1059 = vmul.f32 %v903, %v903
  %v1060 = vmul.f32 %v904, %v904
  %v1061 = vmul.f32 %v905, %v905
  %v1062 = vmul.f32 %v906, %v906
  %v1063 = vmul.f32 %v907, %v907
  %v1064 = vmul.f32 %v908, %v908
  %v1065 = vmul.f32 %v909, %v909
  %v1066 = vmul.f32 %v910, %v910
  %v1067 = vmul.f32 %v911, %v911
  %v1068 = vmul.f32 %v912, %v912
  %v1069 = vmul.f32 %v913, %v913
  %v1070 = vmul.f32 %v914, %v914
  %v1071 = vmul.f32 %v915, %v915
  %v1072 = vmul.f32 %v916, %v916
  %v1073 = vmul.f32 %v917, %v917
  %v1074 = vmul.f32 %v918, %v918
  %v1075 = vsel %vm919, %v1025, 0.0
  %v1076 = vsel %vm919, %v1026, 0.0
  %v1077 = vadd.f32 %v1075, %v1076
  %v1078 = vsel %vm919, %v1027, 0.0
  %v1079 = vadd.f32 %v1077, %v1078
  %v1080 = vsel %vm919, %v1028, 0.0
  %v1081 = vadd.f32 %v1079, %v1080
  %v1082 = vsel %vm919, %v1029, 0.0
  %v1083 = vadd.f32 %v1081, %v1082
  %v1084 = vsel %vm919, %v1030, 0.0
  %v1085 = vadd.f32 %v1083, %v1084
  %v1086 = vsel %vm919, %v1031, 0.0
  %v1087 = vadd.f32 %v1085, %v1086
  %v1088 = vsel %vm919, %v1032, 0.0
  %v1089 = vadd.f32 %v1087, %v1088
  %v1090 = vsel %vm919, %v1033, 0.0
  %v1091 = vadd.f32 %v1089, %v1090
  %v1092 = vsel %vm919, %v1034, 0.0
  %v1093 = vadd.f32 %v1091, %v1092
  %v1094 = vsel %vm919, %v1035, 0.0
  %v1095 = vadd.f32 %v1093, %v1094
  %v1096 = vsel %vm919, %v1036, 0.0
  %v1097 = vadd.f32 %v1095, %v1096
  %v1098 = vsel %vm919, %v1037, 0.0
  %v1099 = vadd.f32 %v1097, %v1098
  %v1100 = vsel %vm919, %v1038, 0.0
  %v1101 = vadd.f32 %v1099, %v1100
  %v1102 = vsel %vm919, %v1039, 0.0
  %v1103 = vadd.f32 %v1101, %v1102
  %v1104 = vsel %vm919, %v1040, 0.0
  %v1105 = vadd.f32 %v1103, %v1104
  %v1106 = vsel %vm919, %v1041, 0.0
  %v1107 = vadd.f32 %v1105, %v1106
  %v1108 = vsel %vm919, %v1042, 0.0
  %v1109 = vadd.f32 %v1107, %v1108
  %v1110 = vsel %vm919, %v1043, 0.0
  %v1111 = vadd.f32 %v1109, %v1110
  %v1112 = vsel %vm919, %v1044, 0.0
  %v1113 = vadd.f32 %v1111, %v1112
  %v1114 = vsel %vm919, %v1045, 0.0
  %v1115 = vadd.f32 %v1113, %v1114
  %v1116 = vsel %vm919, %v1046, 0.0
  %v1117 = vadd.f32 %v1115, %v1116
  %v1118 = vsel %vm919, %v1047, 0.0
  %v1119 = vadd.f32 %v1117, %v1118
  %v1120 = vsel %vm919, %v1048, 0.0
  %v1121 = vadd.f32 %v1119, %v1120
  %v1122 = vsel %vm919, %v1049, 0.0
  %v1123 = vadd.f32 %v1121, %v1122
  %v1124 = vsel %vm919, %v1050, 0.0
  %v1125 = vadd.f32 %v1123, %v1124
  %v1126 = vsel %vm919, %v1051, 0.0
  %v1127 = vadd.f32 %v1125, %v1126
  %v1128 = vsel %vm919, %v1052, 0.0
  %v1129 = vadd.f32 %v1127, %v1128
  %v1130 = vsel %vm919, %v1053, 0.0
  %v1131 = vadd.f32 %v1129, %v1130
  %v1132 = vsel %vm919, %v1054, 0.0
  %v1133 = vadd.f32 %v1131, %v1132
  %v1134 = vsel %vm919, %v1055, 0.0
  %v1135 = vadd.f32 %v1133, %v1134
  %v1136 = vsel %vm919, %v1056, 0.0
  %v1137 = vadd.f32 %v1135, %v1136
  %v1138 = vsel %vm919, %v1057, 0.0
  %v1139 = vadd.f32 %v1137, %v1138
  %v1140 = vsel %vm919, %v1058, 0.0
  %v1141 = vadd.f32 %v1139, %v1140
  %v1142 = vsel %vm919, %v1059, 0.0
  %v1143 = vadd.f32 %v1141, %v1142
  %v1144 = vsel %vm919, %v1060, 0.0
  %v1145 = vadd.f32 %v1143, %v1144
  %v1146 = vsel %vm919, %v1061, 0.0
  %v1147 = vadd.f32 %v1145, %v1146
  %v1148 = vsel %vm919, %v1062, 0.0
  %v1149 = vadd.f32 %v1147, %v1148
  %v1150 = vsel %vm919, %v1063, 0.0
  %v1151 = vadd.f32 %v1149, %v1150
  %v1152 = vsel %vm919, %v1064, 0.0
  %v1153 = vadd.f32 %v1151, %v1152
  %v1154 = vsel %vm919, %v1065, 0.0
  %v1155 = vadd.f32 %v1153, %v1154
  %v1156 = vsel %vm919, %v1066, 0.0
  %v1157 = vadd.f32 %v1155, %v1156
  %v1158 = vsel %vm919, %v1067, 0.0
  %v1159 = vadd.f32 %v1157, %v1158
  %v1160 = vsel %vm919, %v1068, 0.0
  %v1161 = vadd.f32 %v1159, %v1160
  %v1162 = vsel %vm919, %v1069, 0.0
  %v1163 = vadd.f32 %v1161, %v1162
  %v1164 = vsel %vm919, %v1070, 0.0
  %v1165 = vadd.f32 %v1163, %v1164
  %v1166 = vsel %vm919, %v1071, 0.0
  %v1167 = vadd.f32 %v1165, %v1166
  %v1168 = vsel %vm919, %v1072, 0.0
  %v1169 = vadd.f32 %v1167, %v1168
  %v1170 = vsel %vm919, %v1073, 0.0
  %v1171 = vadd.f32 %v1169, %v1170
  %v1172 = vsel %vm919, %v1074, 0.0
  %v1173 = vadd.f32 %v1171, %v1172
  %v1174 = vrot.slane %v1173, 4
  %v1175 = vadd.f32 %v1173, %v1174
  %v1176 = vrot.slane %v1175, 2
  %v1177 = vadd.f32 %v1175, %v1176
  %v1178 = vrot.slane %v1177, 1
  %v1179 = vadd.f32 %v1177, %v1178
  %1180 = vst.msk [vmem:[%s4] sm:$0xff] %vm919, %v1024
  %1181 = vst.msk [vmem:[%s5] sm:$0xff] %vm919, %v1179
  // Predicated region
  $region14: #{discriminator_forward.4} parent=0 // pred_check
    _
  $region15: #{discriminator_forward.4} parent=0 // pred_check_branch
    %1183 = sbr.rel (0) target = $region17
  $region16: #{discriminator_forward.4} parent=0 // pred_region
    _
  $region17: #{discriminator_forward.4} parent=0 // pred_fallthru
    _
  // Predicated region
  $region18: #{discriminator_forward.4} parent=0 // pred_check
    _
  $region19: #{discriminator_forward.4} parent=0 // pred_check_branch
    %1185 = sbr.rel (0) target = $region21
  $region20: #{discriminator_forward.4} parent=0 // pred_region
    _
  $region21: #{discriminator_forward.4} parent=0 // pred_fallthru
    _
  // Predicated region
  $region22: #{discriminator_forward.4} parent=0 // pred_check
    _
  $region23: #{discriminator_forward.4} parent=0 // pred_check_branch
    %1187 = sbr.rel (0) target = $region25
  $region24: #{discriminator_forward.4} parent=0 // pred_region
    _
  $region25: #{discriminator_forward.4} parent=0 // pred_fallthru
    _
  // Predicated region
  $region26: #{discriminator_forward.4} parent=0 // pred_check
    _
  $region27: #{discriminator_forward.4} parent=0 // pred_check_branch
    %1189 = sbr.rel (0) target = $region29
  $region28: #{discriminator_forward.4} parent=0 // pred_region
    _
  $region29: #{discriminator_forward.4} parent=0 // pred_fallthru
    _
  // Predicated region
  $region30: #{discriminator_forward.4} parent=0 // pred_check
    _
  $region31: #{discriminator_forward.4} parent=0 // pred_check_branch
    %1191 = sbr.rel (0) target = $region33
  $region32: #{discriminator_forward.4} parent=0 // pred_region
    _
  $region33: #{discriminator_forward.4} parent=0 // pred_fallthru
    _
  // Predicated region
  $region34: #{discriminator_forward.4} parent=0 // pred_check
    _
  $region35: #{discriminator_forward.4} parent=0 // pred_check_branch
    %1193 = sbr.rel (0) target = $region37
  $region36: #{discriminator_forward.4} parent=0 // pred_region
    _
  $region37: #{discriminator_forward.4} parent=0 // pred_fallthru
    _

// kernel: discriminator_forward.5
$region0: #{discriminator_forward.5}
  #allocation0 [shape = 'u32[]', space=smem, size = 0x4, offset = 0x4, fixed_abs, tag = 'smem constant byte address 0x4 - core index']
  #allocation1 [shape = 'u32[72,128]{1,0:T(1,128)}', space=vmem, size = 0x9000, scoped, tag = 'internal scratch']
  %s0 = inlined_call_operand.vmem [shape: bf16[112,1024], index: 0, kind: input, shape index: {}]
  %s1 = inlined_call_operand.vmem [shape: bf16[1024,128], index: 1, kind: input, shape index: {}]
  %s2 = inlined_call_operand.vmem [shape: f32[1,128], index: 2, kind: input, shape index: {}]
  %s3 = inlined_call_operand.vmem [shape: bf16[112,128], index: 3, kind: output, shape index: {0}]
  %s4 = inlined_call_operand.vmem [shape: f32[8,128], index: 4, kind: output, shape index: {1}]
  %s5 = inlined_call_operand.vmem [shape: f32[8,128], index: 5, kind: output, shape index: {2}]
  %6 = xla_tuple %s3, %s4, %s5
  %s7 = sld [smem:[#allocation0]]
  $region38: #{discriminator_forward.5} parent=0
    _
  %s9 = ssub.s32 1, %s7
  %s10 = scalar_select 0, %s9, %s7
  // Predicated region
  $region2: #{discriminator_forward.5} parent=0 // pred_check
    _
  $region3: #{discriminator_forward.5} parent=0 // pred_check_branch
    %12 = sbr.rel (0) target = $region5
  $region4: #{discriminator_forward.5} parent=0 // pred_region
    _
  $region5: #{discriminator_forward.5} parent=0 // pred_fallthru
    _
  // Predicated region
  $region6: #{discriminator_forward.5} parent=0 // pred_check
    _
  $region7: #{discriminator_forward.5} parent=0 // pred_check_branch
    %14 = sbr.rel (0) target = $region9
  $region8: #{discriminator_forward.5} parent=0 // pred_region
    _
  $region9: #{discriminator_forward.5} parent=0 // pred_fallthru
    _
  // Predicated region
  $region10: #{discriminator_forward.5} parent=0 // pred_check
    _
  $region11: #{discriminator_forward.5} parent=0 // pred_check_branch
    %16 = sbr.rel (0) target = $region13
  $region12: #{discriminator_forward.5} parent=0 // pred_region
    _
  $region13: #{discriminator_forward.5} parent=0 // pred_fallthru
    _
  %v17 = vld [vmem:[%s0] sm:$0xff]
  %v18 = vld [vmem:[%s0 + $0x8] sm:$0xff]
  %v19 = vld [vmem:[%s0 + $0x10] sm:$0xff]
  %v20 = vld [vmem:[%s0 + $0x18] sm:$0xff]
  %v21 = vld [vmem:[%s0 + $0x20] sm:$0xff]
  %v22 = vld [vmem:[%s0 + $0x28] sm:$0xff]
  %v23 = vld [vmem:[%s0 + $0x30] sm:$0xff]
  %v24 = vld [vmem:[%s0 + $0x38] sm:$0xff]
  %v25 = vld [vmem:[%s0 + $0x40] sm:$0xff]
  %v26 = vld [vmem:[%s0 + $0x48] sm:$0xff]
  %v27 = vld [vmem:[%s0 + $0x50] sm:$0xff]
  %v28 = vld [vmem:[%s0 + $0x58] sm:$0xff]
  %v29 = vld [vmem:[%s0 + $0x60] sm:$0xff]
  %v30 = vld [vmem:[%s0 + $0x68] sm:$0xff]
  %v31 = vld [vmem:[%s0 + $0x70] sm:$0xff]
  %v32 = vld [vmem:[%s0 + $0x78] sm:$0xff]
  %v33 = vld [vmem:[%s0 + $0x80] sm:$0xff]
  %v34 = vld [vmem:[%s0 + $0x88] sm:$0xff]
  %v35 = vld [vmem:[%s0 + $0x90] sm:$0xff]
  %v36 = vld [vmem:[%s0 + $0x98] sm:$0xff]
  %v37 = vld [vmem:[%s0 + $0xa0] sm:$0xff]
  %v38 = vld [vmem:[%s0 + $0xa8] sm:$0xff]
  %v39 = vld [vmem:[%s0 + $0xb0] sm:$0xff]
  %v40 = vld [vmem:[%s0 + $0xb8] sm:$0xff]
  %v41 = vld [vmem:[%s0 + $0xc0] sm:$0xff]
  %v42 = vld [vmem:[%s0 + $0xc8] sm:$0xff]
  %v43 = vld [vmem:[%s0 + $0xd0] sm:$0xff]
  %v44 = vld [vmem:[%s0 + $0xd8] sm:$0xff]
  %v45 = vld [vmem:[%s0 + $0xe0] sm:$0xff]
  %v46 = vld [vmem:[%s0 + $0xe8] sm:$0xff]
  %v47 = vld [vmem:[%s0 + $0xf0] sm:$0xff]
  %v48 = vld [vmem:[%s0 + $0xf8] sm:$0xff]
  %v49 = vld [vmem:[%s0 + $0x100] sm:$0xff]
  %v50 = vld [vmem:[%s0 + $0x108] sm:$0xff]
  %v51 = vld [vmem:[%s0 + $0x110] sm:$0xff]
  %v52 = vld [vmem:[%s0 + $0x118] sm:$0xff]
  %v53 = vld [vmem:[%s0 + $0x120] sm:$0xff]
  %v54 = vld [vmem:[%s0 + $0x128] sm:$0xff]
  %v55 = vld [vmem:[%s0 + $0x130] sm:$0xff]
  %v56 = vld [vmem:[%s0 + $0x138] sm:$0xff]
  %v57 = vld [vmem:[%s0 + $0x140] sm:$0xff]
  %v58 = vld [vmem:[%s0 + $0x148] sm:$0xff]
  %v59 = vld [vmem:[%s0 + $0x150] sm:$0xff]
  %v60 = vld [vmem:[%s0 + $0x158] sm:$0xff]
  %v61 = vld [vmem:[%s0 + $0x160] sm:$0xff]
  %v62 = vld [vmem:[%s0 + $0x168] sm:$0xff]
  %v63 = vld [vmem:[%s0 + $0x170] sm:$0xff]
  %v64 = vld [vmem:[%s0 + $0x178] sm:$0xff]
  %v65 = vld [vmem:[%s0 + $0x180] sm:$0xff]
  %v66 = vld [vmem:[%s0 + $0x188] sm:$0xff]
  %v67 = vld [vmem:[%s0 + $0x190] sm:$0xff]
  %v68 = vld [vmem:[%s0 + $0x198] sm:$0xff]
  %v69 = vld [vmem:[%s0 + $0x1a0] sm:$0xff]
  %v70 = vld [vmem:[%s0 + $0x1a8] sm:$0xff]
  %v71 = vld [vmem:[%s0 + $0x1b0] sm:$0xff]
  %v72 = vld [vmem:[%s0 + $0x1b8] sm:$0xff]
  %v73 = vld [vmem:[%s1] sm:$0xf]
  %v74 = vld [vmem:[%s1 + $0x4] sm:$0xf]
  %v75 = vld [vmem:[%s1 + $0x8] sm:$0xf]
  %v76 = vld [vmem:[%s1 + $0xc] sm:$0xf]
  %v77 = vld [vmem:[%s1 + $0x10] sm:$0xf]
  %v78 = vld [vmem:[%s1 + $0x14] sm:$0xf]
  %v79 = vld [vmem:[%s1 + $0x18] sm:$0xf]
  %v80 = vld [vmem:[%s1 + $0x1c] sm:$0xf]
  %v81 = vld [vmem:[%s1 + $0x20] sm:$0xf]
  %v82 = vld [vmem:[%s1 + $0x24] sm:$0xf]
  %v83 = vld [vmem:[%s1 + $0x28] sm:$0xf]
  %v84 = vld [vmem:[%s1 + $0x2c] sm:$0xf]
  %v85 = vld [vmem:[%s1 + $0x30] sm:$0xf]
  %v86 = vld [vmem:[%s1 + $0x34] sm:$0xf]
  %v87 = vld [vmem:[%s1 + $0x38] sm:$0xf]
  %v88 = vld [vmem:[%s1 + $0x3c] sm:$0xf]
  %v89 = vld [vmem:[%s1 + $0x40] sm:$0xf]
  %v90 = vld [vmem:[%s1 + $0x44] sm:$0xf]
  %v91 = vld [vmem:[%s1 + $0x48] sm:$0xf]
  %v92 = vld [vmem:[%s1 + $0x4c] sm:$0xf]
  %v93 = vld [vmem:[%s1 + $0x50] sm:$0xf]
  %v94 = vld [vmem:[%s1 + $0x54] sm:$0xf]
  %v95 = vld [vmem:[%s1 + $0x58] sm:$0xf]
  %v96 = vld [vmem:[%s1 + $0x5c] sm:$0xf]
  %v97 = vld [vmem:[%s1 + $0x60] sm:$0xf]
  %v98 = vld [vmem:[%s1 + $0x64] sm:$0xf]
  %v99 = vld [vmem:[%s1 + $0x68] sm:$0xf]
  %v100 = vld [vmem:[%s1 + $0x6c] sm:$0xf]
  %v101 = vld [vmem:[%s1 + $0x70] sm:$0xf]
  %v102 = vld [vmem:[%s1 + $0x74] sm:$0xf]
  %v103 = vld [vmem:[%s1 + $0x78] sm:$0xf]
  %v104 = vld [vmem:[%s1 + $0x7c] sm:$0xf]
  %v105 = vld [vmem:[%s1 + $0x80] sm:$0xf]
  %v106 = vld [vmem:[%s1 + $0x84] sm:$0xf]
  %v107 = vld [vmem:[%s1 + $0x88] sm:$0xf]
  %v108 = vld [vmem:[%s1 + $0x8c] sm:$0xf]
  %v109 = vld [vmem:[%s1 + $0x90] sm:$0xf]
  %v110 = vld [vmem:[%s1 + $0x94] sm:$0xf]
  %v111 = vld [vmem:[%s1 + $0x98] sm:$0xf]
  %v112 = vld [vmem:[%s1 + $0x9c] sm:$0xf]
  %v113 = vld [vmem:[%s1 + $0xa0] sm:$0xf]
  %v114 = vld [vmem:[%s1 + $0xa4] sm:$0xf]
  %v115 = vld [vmem:[%s1 + $0xa8] sm:$0xf]
  %v116 = vld [vmem:[%s1 + $0xac] sm:$0xf]
  %v117 = vld [vmem:[%s1 + $0xb0] sm:$0xf]
  %v118 = vld [vmem:[%s1 + $0xb4] sm:$0xf]
  %v119 = vld [vmem:[%s1 + $0xb8] sm:$0xf]
  %v120 = vld [vmem:[%s1 + $0xbc] sm:$0xf]
  %v121 = vld [vmem:[%s1 + $0xc0] sm:$0xf]
  %v122 = vld [vmem:[%s1 + $0xc4] sm:$0xf]
  %v123 = vld [vmem:[%s1 + $0xc8] sm:$0xf]
  %v124 = vld [vmem:[%s1 + $0xcc] sm:$0xf]
  %v125 = vld [vmem:[%s1 + $0xd0] sm:$0xf]
  %v126 = vld [vmem:[%s1 + $0xd4] sm:$0xf]
  %v127 = vld [vmem:[%s1 + $0xd8] sm:$0xf]
  %v128 = vld [vmem:[%s1 + $0xdc] sm:$0xf]
  %v129 = vld [vmem:[%s1 + $0xe0] sm:$0xf]
  %v130 = vld [vmem:[%s1 + $0xe4] sm:$0xf]
  %v131 = vld [vmem:[%s1 + $0xe8] sm:$0xf]
  %v132 = vld [vmem:[%s1 + $0xec] sm:$0xf]
  %v133 = vld [vmem:[%s1 + $0xf0] sm:$0xf]
  %v134 = vld [vmem:[%s1 + $0xf4] sm:$0xf]
  %v135 = vld [vmem:[%s1 + $0xf8] sm:$0xf]
  %v136 = vld [vmem:[%s1 + $0xfc] sm:$0xf]
  %v137 = vld [vmem:[%s1 + $0x100] sm:$0xf]
  %v138 = vld [vmem:[%s1 + $0x104] sm:$0xf]
  %v139 = vld [vmem:[%s1 + $0x108] sm:$0xf]
  %v140 = vld [vmem:[%s1 + $0x10c] sm:$0xf]
  %v141 = vld [vmem:[%s1 + $0x110] sm:$0xf]
  %v142 = vld [vmem:[%s1 + $0x114] sm:$0xf]
  %v143 = vld [vmem:[%s1 + $0x118] sm:$0xf]
  %v144 = vld [vmem:[%s1 + $0x11c] sm:$0xf]
  %v145 = vld [vmem:[%s1 + $0x120] sm:$0xf]
  %v146 = vld [vmem:[%s1 + $0x124] sm:$0xf]
  %v147 = vld [vmem:[%s1 + $0x128] sm:$0xf]
  %v148 = vld [vmem:[%s1 + $0x12c] sm:$0xf]
  %v149 = vld [vmem:[%s1 + $0x130] sm:$0xf]
  %v150 = vld [vmem:[%s1 + $0x134] sm:$0xf]
  %v151 = vld [vmem:[%s1 + $0x138] sm:$0xf]
  %v152 = vld [vmem:[%s1 + $0x13c] sm:$0xf]
  %v153 = vld [vmem:[%s1 + $0x140] sm:$0xf]
  %v154 = vld [vmem:[%s1 + $0x144] sm:$0xf]
  %v155 = vld [vmem:[%s1 + $0x148] sm:$0xf]
  %v156 = vld [vmem:[%s1 + $0x14c] sm:$0xf]
  %v157 = vld [vmem:[%s1 + $0x150] sm:$0xf]
  %v158 = vld [vmem:[%s1 + $0x154] sm:$0xf]
  %v159 = vld [vmem:[%s1 + $0x158] sm:$0xf]
  %v160 = vld [vmem:[%s1 + $0x15c] sm:$0xf]
  %v161 = vld [vmem:[%s1 + $0x160] sm:$0xf]
  %v162 = vld [vmem:[%s1 + $0x164] sm:$0xf]
  %v163 = vld [vmem:[%s1 + $0x168] sm:$0xf]
  %v164 = vld [vmem:[%s1 + $0x16c] sm:$0xf]
  %v165 = vld [vmem:[%s1 + $0x170] sm:$0xf]
  %v166 = vld [vmem:[%s1 + $0x174] sm:$0xf]
  %v167 = vld [vmem:[%s1 + $0x178] sm:$0xf]
  %v168 = vld [vmem:[%s1 + $0x17c] sm:$0xf]
  %v169 = vld [vmem:[%s1 + $0x180] sm:$0xf]
  %v170 = vld [vmem:[%s1 + $0x184] sm:$0xf]
  %v171 = vld [vmem:[%s1 + $0x188] sm:$0xf]
  %v172 = vld [vmem:[%s1 + $0x18c] sm:$0xf]
  %v173 = vld [vmem:[%s1 + $0x190] sm:$0xf]
  %v174 = vld [vmem:[%s1 + $0x194] sm:$0xf]
  %v175 = vld [vmem:[%s1 + $0x198] sm:$0xf]
  %v176 = vld [vmem:[%s1 + $0x19c] sm:$0xf]
  %v177 = vld [vmem:[%s1 + $0x1a0] sm:$0xf]
  %v178 = vld [vmem:[%s1 + $0x1a4] sm:$0xf]
  %v179 = vld [vmem:[%s1 + $0x1a8] sm:$0xf]
  %v180 = vld [vmem:[%s1 + $0x1ac] sm:$0xf]
  %v181 = vld [vmem:[%s1 + $0x1b0] sm:$0xf]
  %v182 = vld [vmem:[%s1 + $0x1b4] sm:$0xf]
  %v183 = vld [vmem:[%s1 + $0x1b8] sm:$0xf]
  %v184 = vld [vmem:[%s1 + $0x1bc] sm:$0xf]
  %v185 = vld [vmem:[%s1 + $0x1c0] sm:$0xf]
  %v186 = vld [vmem:[%s1 + $0x1c4] sm:$0xf]
  %v187 = vld [vmem:[%s1 + $0x1c8] sm:$0xf]
  %v188 = vld [vmem:[%s1 + $0x1cc] sm:$0xf]
  %v189 = vld [vmem:[%s1 + $0x1d0] sm:$0xf]
  %v190 = vld [vmem:[%s1 + $0x1d4] sm:$0xf]
  %v191 = vld [vmem:[%s1 + $0x1d8] sm:$0xf]
  %v192 = vld [vmem:[%s1 + $0x1dc] sm:$0xf]
  %v193 = vld [vmem:[%s1 + $0x1e0] sm:$0xf]
  %v194 = vld [vmem:[%s1 + $0x1e4] sm:$0xf]
  %v195 = vld [vmem:[%s1 + $0x1e8] sm:$0xf]
  %v196 = vld [vmem:[%s1 + $0x1ec] sm:$0xf]
  %v197 = vld [vmem:[%s1 + $0x1f0] sm:$0xf]
  %v198 = vld [vmem:[%s1 + $0x1f4] sm:$0xf]
  %v199 = vld [vmem:[%s1 + $0x1f8] sm:$0xf]
  %v200 = vld [vmem:[%s1 + $0x1fc] sm:$0xf]
  %v201 = vld [vmem:[%s2] sm:$0x1]
  %v203 = vperm.slane %v201, 0
  %v261 = vunpack.c.l.b16 %v17
  %v262 = vunpack.c.h.b16 %v17
  %v263 = vunpack.c.l.b16 %v18
  %v264 = vunpack.c.h.b16 %v18
  %v265 = vunpack.c.l.b16 %v19
  %v266 = vunpack.c.h.b16 %v19
  %v267 = vunpack.c.l.b16 %v20
  %v268 = vunpack.c.h.b16 %v20
  %v269 = vunpack.c.l.b16 %v21
  %v270 = vunpack.c.h.b16 %v21
  %v271 = vunpack.c.l.b16 %v22
  %v272 = vunpack.c.h.b16 %v22
  %v273 = vunpack.c.l.b16 %v23
  %v274 = vunpack.c.h.b16 %v23
  %v275 = vunpack.c.l.b16 %v24
  %v276 = vunpack.c.h.b16 %v24
  %v277 = vunpack.c.l.b16 %v25
  %v278 = vunpack.c.h.b16 %v25
  %v279 = vunpack.c.l.b16 %v26
  %v280 = vunpack.c.h.b16 %v26
  %v281 = vunpack.c.l.b16 %v27
  %v282 = vunpack.c.h.b16 %v27
  %v283 = vunpack.c.l.b16 %v28
  %v284 = vunpack.c.h.b16 %v28
  %v285 = vunpack.c.l.b16 %v29
  %v286 = vunpack.c.h.b16 %v29
  %v287 = vunpack.c.l.b16 %v30
  %v288 = vunpack.c.h.b16 %v30
  %v289 = vunpack.c.l.b16 %v31
  %v290 = vunpack.c.h.b16 %v31
  %v291 = vunpack.c.l.b16 %v32
  %v292 = vunpack.c.h.b16 %v32
  %v293 = vunpack.c.l.b16 %v33
  %v294 = vunpack.c.h.b16 %v33
  %v295 = vunpack.c.l.b16 %v34
  %v296 = vunpack.c.h.b16 %v34
  %v297 = vunpack.c.l.b16 %v35
  %v298 = vunpack.c.h.b16 %v35
  %v299 = vunpack.c.l.b16 %v36
  %v300 = vunpack.c.h.b16 %v36
  %v301 = vunpack.c.l.b16 %v37
  %v302 = vunpack.c.h.b16 %v37
  %v303 = vunpack.c.l.b16 %v38
  %v304 = vunpack.c.h.b16 %v38
  %v305 = vunpack.c.l.b16 %v39
  %v306 = vunpack.c.h.b16 %v39
  %v307 = vunpack.c.l.b16 %v40
  %v308 = vunpack.c.h.b16 %v40
  %v309 = vunpack.c.l.b16 %v41
  %v310 = vunpack.c.h.b16 %v41
  %v311 = vunpack.c.l.b16 %v42
  %v312 = vunpack.c.h.b16 %v42
  %v313 = vunpack.c.l.b16 %v43
  %v314 = vunpack.c.h.b16 %v43
  %v315 = vunpack.c.l.b16 %v44
  %v316 = vunpack.c.h.b16 %v44
  %v317 = vunpack.c.l.b16 %v45
  %v318 = vunpack.c.h.b16 %v45
  %v319 = vunpack.c.l.b16 %v46
  %v320 = vunpack.c.h.b16 %v46
  %v321 = vunpack.c.l.b16 %v47
  %v322 = vunpack.c.h.b16 %v47
  %v323 = vunpack.c.l.b16 %v48
  %v324 = vunpack.c.h.b16 %v48
  %v325 = vunpack.c.l.b16 %v49
  %v326 = vunpack.c.h.b16 %v49
  %v327 = vunpack.c.l.b16 %v50
  %v328 = vunpack.c.h.b16 %v50
  %v329 = vunpack.c.l.b16 %v51
  %v330 = vunpack.c.h.b16 %v51
  %v331 = vunpack.c.l.b16 %v52
  %v332 = vunpack.c.h.b16 %v52
  %v333 = vunpack.c.l.b16 %v53
  %v334 = vunpack.c.h.b16 %v53
  %v335 = vunpack.c.l.b16 %v54
  %v336 = vunpack.c.h.b16 %v54
  %v337 = vunpack.c.l.b16 %v55
  %v338 = vunpack.c.h.b16 %v55
  %v339 = vunpack.c.l.b16 %v56
  %v340 = vunpack.c.h.b16 %v56
  %v341 = vunpack.c.l.b16 %v57
  %v342 = vunpack.c.h.b16 %v57
  %v343 = vunpack.c.l.b16 %v58
  %v344 = vunpack.c.h.b16 %v58
  %v345 = vunpack.c.l.b16 %v59
  %v346 = vunpack.c.h.b16 %v59
  %v347 = vunpack.c.l.b16 %v60
  %v348 = vunpack.c.h.b16 %v60
  %v349 = vunpack.c.l.b16 %v61
  %v350 = vunpack.c.h.b16 %v61
  %v351 = vunpack.c.l.b16 %v62
  %v352 = vunpack.c.h.b16 %v62
  %v353 = vunpack.c.l.b16 %v63
  %v354 = vunpack.c.h.b16 %v63
  %v355 = vunpack.c.l.b16 %v64
  %v356 = vunpack.c.h.b16 %v64
  %v357 = vunpack.c.l.b16 %v65
  %v358 = vunpack.c.h.b16 %v65
  %v359 = vunpack.c.l.b16 %v66
  %v360 = vunpack.c.h.b16 %v66
  %v361 = vunpack.c.l.b16 %v67
  %v362 = vunpack.c.h.b16 %v67
  %v363 = vunpack.c.l.b16 %v68
  %v364 = vunpack.c.h.b16 %v68
  %v365 = vunpack.c.l.b16 %v69
  %v366 = vunpack.c.h.b16 %v69
  %v367 = vunpack.c.l.b16 %v70
  %v368 = vunpack.c.h.b16 %v70
  %v369 = vunpack.c.l.b16 %v71
  %v370 = vunpack.c.h.b16 %v71
  %v371 = vunpack.c.l.b16 %v72
  %v372 = vunpack.c.h.b16 %v72
  %v373 = vpack.c.b16 %v269, %v261
  %v374 = vpack.c.b16 %v270, %v262
  %v375 = vpack.c.b16 %v271, %v263
  %v376 = vpack.c.b16 %v272, %v264
  %v377 = vpack.c.b16 %v273, %v265
  %v378 = vpack.c.b16 %v274, %v266
  %v379 = vpack.c.b16 %v275, %v267
  %v380 = vpack.c.b16 %v276, %v268
  %v381 = vpack.c.b16 %v285, %v277
  %v382 = vpack.c.b16 %v286, %v278
  %v383 = vpack.c.b16 %v287, %v279
  %v384 = vpack.c.b16 %v288, %v280
  %v385 = vpack.c.b16 %v289, %v281
  %v386 = vpack.c.b16 %v290, %v282
  %v387 = vpack.c.b16 %v291, %v283
  %v388 = vpack.c.b16 %v292, %v284
  %v389 = vpack.c.b16 %v301, %v293
  %v390 = vpack.c.b16 %v302, %v294
  %v391 = vpack.c.b16 %v303, %v295
  %v392 = vpack.c.b16 %v304, %v296
  %v393 = vpack.c.b16 %v305, %v297
  %v394 = vpack.c.b16 %v306, %v298
  %v395 = vpack.c.b16 %v307, %v299
  %v396 = vpack.c.b16 %v308, %v300
  %v397 = vpack.c.b16 %v317, %v309
  %v398 = vpack.c.b16 %v318, %v310
  %v399 = vpack.c.b16 %v319, %v311
  %v400 = vpack.c.b16 %v320, %v312
  %v401 = vpack.c.b16 %v321, %v313
  %v402 = vpack.c.b16 %v322, %v314
  %v403 = vpack.c.b16 %v323, %v315
  %v404 = vpack.c.b16 %v324, %v316
  %v405 = vpack.c.b16 %v333, %v325
  %v406 = vpack.c.b16 %v334, %v326
  %v407 = vpack.c.b16 %v335, %v327
  %v408 = vpack.c.b16 %v336, %v328
  %v409 = vpack.c.b16 %v337, %v329
  %v410 = vpack.c.b16 %v338, %v330
  %v411 = vpack.c.b16 %v339, %v331
  %v412 = vpack.c.b16 %v340, %v332
  %v413 = vpack.c.b16 %v349, %v341
  %v414 = vpack.c.b16 %v350, %v342
  %v415 = vpack.c.b16 %v351, %v343
  %v416 = vpack.c.b16 %v352, %v344
  %v417 = vpack.c.b16 %v353, %v345
  %v418 = vpack.c.b16 %v354, %v346
  %v419 = vpack.c.b16 %v355, %v347
  %v420 = vpack.c.b16 %v356, %v348
  %v421 = vpack.c.b16 %v365, %v357
  %v422 = vpack.c.b16 %v366, %v358
  %v423 = vpack.c.b16 %v367, %v359
  %v424 = vpack.c.b16 %v368, %v360
  %v425 = vpack.c.b16 %v369, %v361
  %v426 = vpack.c.b16 %v370, %v362
  %v427 = vpack.c.b16 %v371, %v363
  %v428 = vpack.c.b16 %v372, %v364
  %v613 = vunpack.c.l.b16 %v73
  %v614 = vunpack.c.l.b16 %v74
  %v615 = vunpack.c.l.b16 %v75
  %v616 = vunpack.c.l.b16 %v76
  %v617 = vunpack.c.l.b16 %v77
  %v618 = vunpack.c.l.b16 %v78
  %v619 = vunpack.c.l.b16 %v79
  %v620 = vunpack.c.l.b16 %v80
  %v621 = vunpack.c.l.b16 %v81
  %v622 = vunpack.c.l.b16 %v82
  %v623 = vunpack.c.l.b16 %v83
  %v624 = vunpack.c.l.b16 %v84
  %v625 = vunpack.c.l.b16 %v85
  %v626 = vunpack.c.l.b16 %v86
  %v627 = vunpack.c.l.b16 %v87
  %v628 = vunpack.c.l.b16 %v88
  %v629 = vunpack.c.l.b16 %v89
  %v630 = vunpack.c.l.b16 %v90
  %v631 = vunpack.c.l.b16 %v91
  %v632 = vunpack.c.l.b16 %v92
  %v633 = vunpack.c.l.b16 %v93
  %v634 = vunpack.c.l.b16 %v94
  %v635 = vunpack.c.l.b16 %v95
  %v636 = vunpack.c.l.b16 %v96
  %v637 = vunpack.c.l.b16 %v97
  %v638 = vunpack.c.l.b16 %v98
  %v639 = vunpack.c.l.b16 %v99
  %v640 = vunpack.c.l.b16 %v100
  %v641 = vunpack.c.l.b16 %v101
  %v642 = vunpack.c.l.b16 %v102
  %v643 = vunpack.c.l.b16 %v103
  %v644 = vunpack.c.l.b16 %v104
  %v645 = vunpack.c.l.b16 %v105
  %v646 = vunpack.c.l.b16 %v106
  %v647 = vunpack.c.l.b16 %v107
  %v648 = vunpack.c.l.b16 %v108
  %v649 = vunpack.c.l.b16 %v109
  %v650 = vunpack.c.l.b16 %v110
  %v651 = vunpack.c.l.b16 %v111
  %v652 = vunpack.c.l.b16 %v112
  %v653 = vunpack.c.l.b16 %v113
  %v654 = vunpack.c.l.b16 %v114
  %v655 = vunpack.c.l.b16 %v115
  %v656 = vunpack.c.l.b16 %v116
  %v657 = vunpack.c.l.b16 %v117
  %v658 = vunpack.c.l.b16 %v118
  %v659 = vunpack.c.l.b16 %v119
  %v660 = vunpack.c.l.b16 %v120
  %v661 = vunpack.c.l.b16 %v121
  %v662 = vunpack.c.l.b16 %v122
  %v663 = vunpack.c.l.b16 %v123
  %v664 = vunpack.c.l.b16 %v124
  %v665 = vunpack.c.l.b16 %v125
  %v666 = vunpack.c.l.b16 %v126
  %v667 = vunpack.c.l.b16 %v127
  %v668 = vunpack.c.l.b16 %v128
  %v669 = vunpack.c.l.b16 %v129
  %v670 = vunpack.c.l.b16 %v130
  %v671 = vunpack.c.l.b16 %v131
  %v672 = vunpack.c.l.b16 %v132
  %v673 = vunpack.c.l.b16 %v133
  %v674 = vunpack.c.l.b16 %v134
  %v675 = vunpack.c.l.b16 %v135
  %v676 = vunpack.c.l.b16 %v136
  %v677 = vunpack.c.l.b16 %v137
  %v678 = vunpack.c.l.b16 %v138
  %v679 = vunpack.c.l.b16 %v139
  %v680 = vunpack.c.l.b16 %v140
  %v681 = vunpack.c.l.b16 %v141
  %v682 = vunpack.c.l.b16 %v142
  %v683 = vunpack.c.l.b16 %v143
  %v684 = vunpack.c.l.b16 %v144
  %v685 = vunpack.c.l.b16 %v145
  %v686 = vunpack.c.l.b16 %v146
  %v687 = vunpack.c.l.b16 %v147
  %v688 = vunpack.c.l.b16 %v148
  %v689 = vunpack.c.l.b16 %v149
  %v690 = vunpack.c.l.b16 %v150
  %v691 = vunpack.c.l.b16 %v151
  %v692 = vunpack.c.l.b16 %v152
  %v693 = vunpack.c.l.b16 %v153
  %v694 = vunpack.c.l.b16 %v154
  %v695 = vunpack.c.l.b16 %v155
  %v696 = vunpack.c.l.b16 %v156
  %v697 = vunpack.c.l.b16 %v157
  %v698 = vunpack.c.l.b16 %v158
  %v699 = vunpack.c.l.b16 %v159
  %v700 = vunpack.c.l.b16 %v160
  %v701 = vunpack.c.l.b16 %v161
  %v702 = vunpack.c.l.b16 %v162
  %v703 = vunpack.c.l.b16 %v163
  %v704 = vunpack.c.l.b16 %v164
  %v705 = vunpack.c.l.b16 %v165
  %v706 = vunpack.c.l.b16 %v166
  %v707 = vunpack.c.l.b16 %v167
  %v708 = vunpack.c.l.b16 %v168
  %v709 = vunpack.c.l.b16 %v169
  %v710 = vunpack.c.l.b16 %v170
  %v711 = vunpack.c.l.b16 %v171
  %v712 = vunpack.c.l.b16 %v172
  %v713 = vunpack.c.l.b16 %v173
  %v714 = vunpack.c.l.b16 %v174
  %v715 = vunpack.c.l.b16 %v175
  %v716 = vunpack.c.l.b16 %v176
  %v717 = vunpack.c.l.b16 %v177
  %v718 = vunpack.c.l.b16 %v178
  %v719 = vunpack.c.l.b16 %v179
  %v720 = vunpack.c.l.b16 %v180
  %v721 = vunpack.c.l.b16 %v181
  %v722 = vunpack.c.l.b16 %v182
  %v723 = vunpack.c.l.b16 %v183
  %v724 = vunpack.c.l.b16 %v184
  %v725 = vunpack.c.l.b16 %v185
  %v726 = vunpack.c.l.b16 %v186
  %v727 = vunpack.c.l.b16 %v187
  %v728 = vunpack.c.l.b16 %v188
  %v729 = vunpack.c.l.b16 %v189
  %v730 = vunpack.c.l.b16 %v190
  %v731 = vunpack.c.l.b16 %v191
  %v732 = vunpack.c.l.b16 %v192
  %v733 = vunpack.c.l.b16 %v193
  %v734 = vunpack.c.l.b16 %v194
  %v735 = vunpack.c.l.b16 %v195
  %v736 = vunpack.c.l.b16 %v196
  %v737 = vunpack.c.l.b16 %v197
  %v738 = vunpack.c.l.b16 %v198
  %v739 = vunpack.c.l.b16 %v199
  %v740 = vunpack.c.l.b16 %v200
  %v741 = vpack.c.b16 %v614, %v613
  %v742 = vpack.c.b16 %v616, %v615
  %v743 = vpack.c.b16 %v618, %v617
  %v744 = vpack.c.b16 %v620, %v619
  %v745 = vpack.c.b16 %v622, %v621
  %v746 = vpack.c.b16 %v624, %v623
  %v747 = vpack.c.b16 %v626, %v625
  %v748 = vpack.c.b16 %v628, %v627
  %v749 = vpack.c.b16 %v630, %v629
  %v750 = vpack.c.b16 %v632, %v631
  %v751 = vpack.c.b16 %v634, %v633
  %v752 = vpack.c.b16 %v636, %v635
  %v753 = vpack.c.b16 %v638, %v637
  %v754 = vpack.c.b16 %v640, %v639
  %v755 = vpack.c.b16 %v642, %v641
  %v756 = vpack.c.b16 %v644, %v643
  %v757 = vpack.c.b16 %v646, %v645
  %v758 = vpack.c.b16 %v648, %v647
  %v759 = vpack.c.b16 %v650, %v649
  %v760 = vpack.c.b16 %v652, %v651
  %v761 = vpack.c.b16 %v654, %v653
  %v762 = vpack.c.b16 %v656, %v655
  %v763 = vpack.c.b16 %v658, %v657
  %v764 = vpack.c.b16 %v660, %v659
  %v765 = vpack.c.b16 %v662, %v661
  %v766 = vpack.c.b16 %v664, %v663
  %v767 = vpack.c.b16 %v666, %v665
  %v768 = vpack.c.b16 %v668, %v667
  %v769 = vpack.c.b16 %v670, %v669
  %v770 = vpack.c.b16 %v672, %v671
  %v771 = vpack.c.b16 %v674, %v673
  %v772 = vpack.c.b16 %v676, %v675
  %v773 = vpack.c.b16 %v678, %v677
  %v774 = vpack.c.b16 %v680, %v679
  %v775 = vpack.c.b16 %v682, %v681
  %v776 = vpack.c.b16 %v684, %v683
  %v777 = vpack.c.b16 %v686, %v685
  %v778 = vpack.c.b16 %v688, %v687
  %v779 = vpack.c.b16 %v690, %v689
  %v780 = vpack.c.b16 %v692, %v691
  %v781 = vpack.c.b16 %v694, %v693
  %v782 = vpack.c.b16 %v696, %v695
  %v783 = vpack.c.b16 %v698, %v697
  %v784 = vpack.c.b16 %v700, %v699
  %v785 = vpack.c.b16 %v702, %v701
  %v786 = vpack.c.b16 %v704, %v703
  %v787 = vpack.c.b16 %v706, %v705
  %v788 = vpack.c.b16 %v708, %v707
  %v789 = vpack.c.b16 %v710, %v709
  %v790 = vpack.c.b16 %v712, %v711
  %v791 = vpack.c.b16 %v714, %v713
  %v792 = vpack.c.b16 %v716, %v715
  %v793 = vpack.c.b16 %v718, %v717
  %v794 = vpack.c.b16 %v720, %v719
  %v795 = vpack.c.b16 %v722, %v721
  %v796 = vpack.c.b16 %v724, %v723
  %v797 = vpack.c.b16 %v726, %v725
  %v798 = vpack.c.b16 %v728, %v727
  %v799 = vpack.c.b16 %v730, %v729
  %v800 = vpack.c.b16 %v732, %v731
  %v801 = vpack.c.b16 %v734, %v733
  %v802 = vpack.c.b16 %v736, %v735
  %v803 = vpack.c.b16 %v738, %v737
  %v804 = vpack.c.b16 %v740, %v739
  %869 = vmatpush.bf16.msra.mxu0 %v748
  %870 = vmatpush.bf16.msra.mxu0 %v747
  %871 = vmatpush.bf16.msra.mxu0 %v746
  %872 = vmatpush.bf16.msra.mxu0 %v745
  %873 = vmatpush.bf16.msra.mxu0 %v744
  %874 = vmatpush.bf16.msra.mxu0 %v743
  %875 = vmatpush.bf16.msra.mxu0 %v742
  %876 = vmatpush.bf16.msra.mxu0 %v741
  %877 = vmatmul.bf16.gmra.mxu0 %v373
  %v878 = vpop.f32.mrf.mxu0
  %v879 = vadd.f32 %v203, %v878
  %v880 = vpop.f32.mrf.mxu0
  %v881 = vadd.f32 %v203, %v880
  %882 = vmatmul.bf16.gmra.mxu0 %v381
  %v883 = vpop.f32.mrf.mxu0
  %v884 = vadd.f32 %v203, %v883
  %v885 = vpop.f32.mrf.mxu0
  %v886 = vadd.f32 %v203, %v885
  %887 = vmatmul.bf16.gmra.mxu0 %v389
  %v888 = vpop.f32.mrf.mxu0
  %v889 = vadd.f32 %v203, %v888
  %v890 = vpop.f32.mrf.mxu0
  %v891 = vadd.f32 %v203, %v890
  %892 = vmatmul.bf16.gmra.mxu0 %v397
  %v893 = vpop.f32.mrf.mxu0
  %v894 = vadd.f32 %v203, %v893
  %v895 = vpop.f32.mrf.mxu0
  %v896 = vadd.f32 %v203, %v895
  %897 = vmatmul.bf16.gmra.mxu0 %v405
  %v898 = vpop.f32.mrf.mxu0
  %v899 = vadd.f32 %v203, %v898
  %v900 = vpop.f32.mrf.mxu0
  %v901 = vadd.f32 %v203, %v900
  %902 = vmatmul.bf16.gmra.mxu0 %v413
  %v903 = vpop.f32.mrf.mxu0
  %v904 = vadd.f32 %v203, %v903
  %v905 = vpop.f32.mrf.mxu0
  %v906 = vadd.f32 %v203, %v905
  %907 = vmatmul.bf16.gmra.mxu0 %v421
  %v908 = vpop.f32.mrf.mxu0
  %v909 = vadd.f32 %v203, %v908
  %v910 = vpop.f32.mrf.mxu0
  %v911 = vadd.f32 %v203, %v910
  %912 = vdwg.mxu0
  %913 = vmatpush.bf16.msra.mxu0 %v756
  %914 = vmatpush.bf16.msra.mxu0 %v755
  %915 = vmatpush.bf16.msra.mxu0 %v754
  %916 = vmatpush.bf16.msra.mxu0 %v753
  %917 = vmatpush.bf16.msra.mxu0 %v752
  %918 = vmatpush.bf16.msra.mxu0 %v751
  %919 = vmatpush.bf16.msra.mxu0 %v750
  %920 = vmatpush.bf16.msra.mxu0 %v749
  %921 = vmatmul.bf16.gmra.mxu0 %v374
  %v922 = vpop.f32.mrf.mxu0
  %v923 = vadd.f32 %v879, %v922
  %v924 = vpop.f32.mrf.mxu0
  %v925 = vadd.f32 %v881, %v924
  %926 = vmatmul.bf16.gmra.mxu0 %v382
  %v927 = vpop.f32.mrf.mxu0
  %v928 = vadd.f32 %v884, %v927
  %v929 = vpop.f32.mrf.mxu0
  %v930 = vadd.f32 %v886, %v929
  %931 = vmatmul.bf16.gmra.mxu0 %v390
  %v932 = vpop.f32.mrf.mxu0
  %v933 = vadd.f32 %v889, %v932
  %v934 = vpop.f32.mrf.mxu0
  %v935 = vadd.f32 %v891, %v934
  %936 = vmatmul.bf16.gmra.mxu0 %v398
  %v937 = vpop.f32.mrf.mxu0
  %v938 = vadd.f32 %v894, %v937
  %v939 = vpop.f32.mrf.mxu0
  %v940 = vadd.f32 %v896, %v939
  %941 = vmatmul.bf16.gmra.mxu0 %v406
  %v942 = vpop.f32.mrf.mxu0
  %v943 = vadd.f32 %v899, %v942
  %v944 = vpop.f32.mrf.mxu0
  %v945 = vadd.f32 %v901, %v944
  %946 = vmatmul.bf16.gmra.mxu0 %v414
  %v947 = vpop.f32.mrf.mxu0
  %v948 = vadd.f32 %v904, %v947
  %v949 = vpop.f32.mrf.mxu0
  %v950 = vadd.f32 %v906, %v949
  %951 = vmatmul.bf16.gmra.mxu0 %v422
  %v952 = vpop.f32.mrf.mxu0
  %v953 = vadd.f32 %v909, %v952
  %v954 = vpop.f32.mrf.mxu0
  %v955 = vadd.f32 %v911, %v954
  %956 = vdwg.mxu0
  %957 = vmatpush.bf16.msra.mxu0 %v764
  %958 = vmatpush.bf16.msra.mxu0 %v763
  %959 = vmatpush.bf16.msra.mxu0 %v762
  %960 = vmatpush.bf16.msra.mxu0 %v761
  %961 = vmatpush.bf16.msra.mxu0 %v760
  %962 = vmatpush.bf16.msra.mxu0 %v759
  %963 = vmatpush.bf16.msra.mxu0 %v758
  %964 = vmatpush.bf16.msra.mxu0 %v757
  %965 = vmatmul.bf16.gmra.mxu0 %v375
  %v966 = vpop.f32.mrf.mxu0
  %v967 = vadd.f32 %v923, %v966
  %v968 = vpop.f32.mrf.mxu0
  %v969 = vadd.f32 %v925, %v968
  %970 = vmatmul.bf16.gmra.mxu0 %v383
  %v971 = vpop.f32.mrf.mxu0
  %v972 = vadd.f32 %v928, %v971
  %v973 = vpop.f32.mrf.mxu0
  %v974 = vadd.f32 %v930, %v973
  %975 = vmatmul.bf16.gmra.mxu0 %v391
  %v976 = vpop.f32.mrf.mxu0
  %v977 = vadd.f32 %v933, %v976
  %v978 = vpop.f32.mrf.mxu0
  %v979 = vadd.f32 %v935, %v978
  %980 = vmatmul.bf16.gmra.mxu0 %v399
  %v981 = vpop.f32.mrf.mxu0
  %v982 = vadd.f32 %v938, %v981
  %v983 = vpop.f32.mrf.mxu0
  %v984 = vadd.f32 %v940, %v983
  %985 = vmatmul.bf16.gmra.mxu0 %v407
  %v986 = vpop.f32.mrf.mxu0
  %v987 = vadd.f32 %v943, %v986
  %v988 = vpop.f32.mrf.mxu0
  %v989 = vadd.f32 %v945, %v988
  %990 = vmatmul.bf16.gmra.mxu0 %v415
  %v991 = vpop.f32.mrf.mxu0
  %v992 = vadd.f32 %v948, %v991
  %v993 = vpop.f32.mrf.mxu0
  %v994 = vadd.f32 %v950, %v993
  %995 = vmatmul.bf16.gmra.mxu0 %v423
  %v996 = vpop.f32.mrf.mxu0
  %v997 = vadd.f32 %v953, %v996
  %v998 = vpop.f32.mrf.mxu0
  %v999 = vadd.f32 %v955, %v998
  %1000 = vdwg.mxu0
  %1001 = vmatpush.bf16.msra.mxu0 %v772
  %1002 = vmatpush.bf16.msra.mxu0 %v771
  %1003 = vmatpush.bf16.msra.mxu0 %v770
  %1004 = vmatpush.bf16.msra.mxu0 %v769
  %1005 = vmatpush.bf16.msra.mxu0 %v768
  %1006 = vmatpush.bf16.msra.mxu0 %v767
  %1007 = vmatpush.bf16.msra.mxu0 %v766
  %1008 = vmatpush.bf16.msra.mxu0 %v765
  %1009 = vmatmul.bf16.gmra.mxu0 %v376
  %v1010 = vpop.f32.mrf.mxu0
  %v1011 = vadd.f32 %v967, %v1010
  %v1012 = vpop.f32.mrf.mxu0
  %v1013 = vadd.f32 %v969, %v1012
  %1014 = vmatmul.bf16.gmra.mxu0 %v384
  %v1015 = vpop.f32.mrf.mxu0
  %v1016 = vadd.f32 %v972, %v1015
  %v1017 = vpop.f32.mrf.mxu0
  %v1018 = vadd.f32 %v974, %v1017
  %1019 = vmatmul.bf16.gmra.mxu0 %v392
  %v1020 = vpop.f32.mrf.mxu0
  %v1021 = vadd.f32 %v977, %v1020
  %v1022 = vpop.f32.mrf.mxu0
  %v1023 = vadd.f32 %v979, %v1022
  %1024 = vmatmul.bf16.gmra.mxu0 %v400
  %v1025 = vpop.f32.mrf.mxu0
  %v1026 = vadd.f32 %v982, %v1025
  %v1027 = vpop.f32.mrf.mxu0
  %v1028 = vadd.f32 %v984, %v1027
  %1029 = vmatmul.bf16.gmra.mxu0 %v408
  %v1030 = vpop.f32.mrf.mxu0
  %v1031 = vadd.f32 %v987, %v1030
  %v1032 = vpop.f32.mrf.mxu0
  %v1033 = vadd.f32 %v989, %v1032
  %1034 = vmatmul.bf16.gmra.mxu0 %v416
  %v1035 = vpop.f32.mrf.mxu0
  %v1036 = vadd.f32 %v992, %v1035
  %v1037 = vpop.f32.mrf.mxu0
  %v1038 = vadd.f32 %v994, %v1037
  %1039 = vmatmul.bf16.gmra.mxu0 %v424
  %v1040 = vpop.f32.mrf.mxu0
  %v1041 = vadd.f32 %v997, %v1040
  %v1042 = vpop.f32.mrf.mxu0
  %v1043 = vadd.f32 %v999, %v1042
  %1044 = vdwg.mxu0
  %1045 = vmatpush.bf16.msra.mxu0 %v780
  %1046 = vmatpush.bf16.msra.mxu0 %v779
  %1047 = vmatpush.bf16.msra.mxu0 %v778
  %1048 = vmatpush.bf16.msra.mxu0 %v777
  %1049 = vmatpush.bf16.msra.mxu0 %v776
  %1050 = vmatpush.bf16.msra.mxu0 %v775
  %1051 = vmatpush.bf16.msra.mxu0 %v774
  %1052 = vmatpush.bf16.msra.mxu0 %v773
  %1053 = vmatmul.bf16.gmra.mxu0 %v377
  %v1054 = vpop.f32.mrf.mxu0
  %v1055 = vadd.f32 %v1011, %v1054
  %v1056 = vpop.f32.mrf.mxu0
  %v1057 = vadd.f32 %v1013, %v1056
  %1058 = vmatmul.bf16.gmra.mxu0 %v385
  %v1059 = vpop.f32.mrf.mxu0
  %v1060 = vadd.f32 %v1016, %v1059
  %v1061 = vpop.f32.mrf.mxu0
  %v1062 = vadd.f32 %v1018, %v1061
  %1063 = vmatmul.bf16.gmra.mxu0 %v393
  %v1064 = vpop.f32.mrf.mxu0
  %v1065 = vadd.f32 %v1021, %v1064
  %v1066 = vpop.f32.mrf.mxu0
  %v1067 = vadd.f32 %v1023, %v1066
  %1068 = vmatmul.bf16.gmra.mxu0 %v401
  %v1069 = vpop.f32.mrf.mxu0
  %v1070 = vadd.f32 %v1026, %v1069
  %v1071 = vpop.f32.mrf.mxu0
  %v1072 = vadd.f32 %v1028, %v1071
  %1073 = vmatmul.bf16.gmra.mxu0 %v409
  %v1074 = vpop.f32.mrf.mxu0
  %v1075 = vadd.f32 %v1031, %v1074
  %v1076 = vpop.f32.mrf.mxu0
  %v1077 = vadd.f32 %v1033, %v1076
  %1078 = vmatmul.bf16.gmra.mxu0 %v417
  %v1079 = vpop.f32.mrf.mxu0
  %v1080 = vadd.f32 %v1036, %v1079
  %v1081 = vpop.f32.mrf.mxu0
  %v1082 = vadd.f32 %v1038, %v1081
  %1083 = vmatmul.bf16.gmra.mxu0 %v425
  %v1084 = vpop.f32.mrf.mxu0
  %v1085 = vadd.f32 %v1041, %v1084
  %v1086 = vpop.f32.mrf.mxu0
  %v1087 = vadd.f32 %v1043, %v1086
  %1088 = vdwg.mxu0
  %1089 = vmatpush.bf16.msra.mxu0 %v788
  %1090 = vmatpush.bf16.msra.mxu0 %v787
  %1091 = vmatpush.bf16.msra.mxu0 %v786
  %1092 = vmatpush.bf16.msra.mxu0 %v785
  %1093 = vmatpush.bf16.msra.mxu0 %v784
  %1094 = vmatpush.bf16.msra.mxu0 %v783
  %1095 = vmatpush.bf16.msra.mxu0 %v782
  %1096 = vmatpush.bf16.msra.mxu0 %v781
  %1097 = vmatmul.bf16.gmra.mxu0 %v378
  %v1098 = vpop.f32.mrf.mxu0
  %v1099 = vadd.f32 %v1055, %v1098
  %v1100 = vpop.f32.mrf.mxu0
  %v1101 = vadd.f32 %v1057, %v1100
  %1102 = vmatmul.bf16.gmra.mxu0 %v386
  %v1103 = vpop.f32.mrf.mxu0
  %v1104 = vadd.f32 %v1060, %v1103
  %v1105 = vpop.f32.mrf.mxu0
  %v1106 = vadd.f32 %v1062, %v1105
  %1107 = vmatmul.bf16.gmra.mxu0 %v394
  %v1108 = vpop.f32.mrf.mxu0
  %v1109 = vadd.f32 %v1065, %v1108
  %v1110 = vpop.f32.mrf.mxu0
  %v1111 = vadd.f32 %v1067, %v1110
  %1112 = vmatmul.bf16.gmra.mxu0 %v402
  %v1113 = vpop.f32.mrf.mxu0
  %v1114 = vadd.f32 %v1070, %v1113
  %v1115 = vpop.f32.mrf.mxu0
  %v1116 = vadd.f32 %v1072, %v1115
  %1117 = vmatmul.bf16.gmra.mxu0 %v410
  %v1118 = vpop.f32.mrf.mxu0
  %v1119 = vadd.f32 %v1075, %v1118
  %v1120 = vpop.f32.mrf.mxu0
  %v1121 = vadd.f32 %v1077, %v1120
  %1122 = vmatmul.bf16.gmra.mxu0 %v418
  %v1123 = vpop.f32.mrf.mxu0
  %v1124 = vadd.f32 %v1080, %v1123
  %v1125 = vpop.f32.mrf.mxu0
  %v1126 = vadd.f32 %v1082, %v1125
  %1127 = vmatmul.bf16.gmra.mxu0 %v426
  %v1128 = vpop.f32.mrf.mxu0
  %v1129 = vadd.f32 %v1085, %v1128
  %v1130 = vpop.f32.mrf.mxu0
  %v1131 = vadd.f32 %v1087, %v1130
  %1132 = vdwg.mxu0
  %1133 = vmatpush.bf16.msra.mxu0 %v796
  %1134 = vmatpush.bf16.msra.mxu0 %v795
  %1135 = vmatpush.bf16.msra.mxu0 %v794
  %1136 = vmatpush.bf16.msra.mxu0 %v793
  %1137 = vmatpush.bf16.msra.mxu0 %v792
  %1138 = vmatpush.bf16.msra.mxu0 %v791
  %1139 = vmatpush.bf16.msra.mxu0 %v790
  %1140 = vmatpush.bf16.msra.mxu0 %v789
  %1141 = vmatmul.bf16.gmra.mxu0 %v379
  %v1142 = vpop.f32.mrf.mxu0
  %v1143 = vadd.f32 %v1099, %v1142
  %v1144 = vpop.f32.mrf.mxu0
  %v1145 = vadd.f32 %v1101, %v1144
  %1146 = vmatmul.bf16.gmra.mxu0 %v387
  %v1147 = vpop.f32.mrf.mxu0
  %v1148 = vadd.f32 %v1104, %v1147
  %v1149 = vpop.f32.mrf.mxu0
  %v1150 = vadd.f32 %v1106, %v1149
  %1151 = vmatmul.bf16.gmra.mxu0 %v395
  %v1152 = vpop.f32.mrf.mxu0
  %v1153 = vadd.f32 %v1109, %v1152
  %v1154 = vpop.f32.mrf.mxu0
  %v1155 = vadd.f32 %v1111, %v1154
  %1156 = vmatmul.bf16.gmra.mxu0 %v403
  %v1157 = vpop.f32.mrf.mxu0
  %v1158 = vadd.f32 %v1114, %v1157
  %v1159 = vpop.f32.mrf.mxu0
  %v1160 = vadd.f32 %v1116, %v1159
  %1161 = vmatmul.bf16.gmra.mxu0 %v411
  %v1162 = vpop.f32.mrf.mxu0
  %v1163 = vadd.f32 %v1119, %v1162
  %v1164 = vpop.f32.mrf.mxu0
  %v1165 = vadd.f32 %v1121, %v1164
  %1166 = vmatmul.bf16.gmra.mxu0 %v419
  %v1167 = vpop.f32.mrf.mxu0
  %v1168 = vadd.f32 %v1124, %v1167
  %v1169 = vpop.f32.mrf.mxu0
  %v1170 = vadd.f32 %v1126, %v1169
  %1171 = vmatmul.bf16.gmra.mxu0 %v427
  %v1172 = vpop.f32.mrf.mxu0
  %v1173 = vadd.f32 %v1129, %v1172
  %v1174 = vpop.f32.mrf.mxu0
  %v1175 = vadd.f32 %v1131, %v1174
  %1176 = vdwg.mxu0
  %1177 = vmatpush.bf16.msra.mxu0 %v804
  %1178 = vmatpush.bf16.msra.mxu0 %v803
  %1179 = vmatpush.bf16.msra.mxu0 %v802
  %1180 = vmatpush.bf16.msra.mxu0 %v801
  %1181 = vmatpush.bf16.msra.mxu0 %v800
  %1182 = vmatpush.bf16.msra.mxu0 %v799
  %1183 = vmatpush.bf16.msra.mxu0 %v798
  %1184 = vmatpush.bf16.msra.mxu0 %v797
  %1185 = vmatmul.bf16.gmra.mxu0 %v380
  %v1186 = vpop.f32.mrf.mxu0
  %v1187 = vadd.f32 %v1143, %v1186
  %v1188 = vpop.f32.mrf.mxu0
  %v1189 = vadd.f32 %v1145, %v1188
  %1190 = vmatmul.bf16.gmra.mxu0 %v388
  %v1191 = vpop.f32.mrf.mxu0
  %v1192 = vadd.f32 %v1148, %v1191
  %v1193 = vpop.f32.mrf.mxu0
  %v1194 = vadd.f32 %v1150, %v1193
  %1195 = vmatmul.bf16.gmra.mxu0 %v396
  %v1196 = vpop.f32.mrf.mxu0
  %v1197 = vadd.f32 %v1153, %v1196
  %v1198 = vpop.f32.mrf.mxu0
  %v1199 = vadd.f32 %v1155, %v1198
  %1200 = vmatmul.bf16.gmra.mxu0 %v404
  %v1201 = vpop.f32.mrf.mxu0
  %v1202 = vadd.f32 %v1158, %v1201
  %v1203 = vpop.f32.mrf.mxu0
  %v1204 = vadd.f32 %v1160, %v1203
  %1205 = vmatmul.bf16.gmra.mxu0 %v412
  %v1206 = vpop.f32.mrf.mxu0
  %v1207 = vadd.f32 %v1163, %v1206
  %v1208 = vpop.f32.mrf.mxu0
  %v1209 = vadd.f32 %v1165, %v1208
  %1210 = vmatmul.bf16.gmra.mxu0 %v420
  %v1211 = vpop.f32.mrf.mxu0
  %v1212 = vadd.f32 %v1168, %v1211
  %v1213 = vpop.f32.mrf.mxu0
  %v1214 = vadd.f32 %v1170, %v1213
  %1215 = vmatmul.bf16.gmra.mxu0 %v428
  %v1216 = vpop.f32.mrf.mxu0
  %v1217 = vadd.f32 %v1173, %v1216
  %v1218 = vpop.f32.mrf.mxu0
  %v1219 = vadd.f32 %v1175, %v1218
  %1220 = vdwg.mxu0
  %v1221 = vmul.f32 %v1187, 0.2
  %v1222 = vmul.f32 %v1189, 0.2
  %v1223 = vmul.f32 %v1192, 0.2
  %v1224 = vmul.f32 %v1194, 0.2
  %v1225 = vmul.f32 %v1197, 0.2
  %v1226 = vmul.f32 %v1199, 0.2
  %v1227 = vmul.f32 %v1202, 0.2
  %v1228 = vmul.f32 %v1204, 0.2
  %v1229 = vmul.f32 %v1207, 0.2
  %v1230 = vmul.f32 %v1209, 0.2
  %v1231 = vmul.f32 %v1212, 0.2
  %v1232 = vmul.f32 %v1214, 0.2
  %v1233 = vmul.f32 %v1217, 0.2
  %v1234 = vmul.f32 %v1219, 0.2
  %v1235 = vmax.f32 %v1187, %v1221
  %v1236 = vmax.f32 %v1189, %v1222
  %v1237 = vmax.f32 %v1192, %v1223
  %v1238 = vmax.f32 %v1194, %v1224
  %v1239 = vmax.f32 %v1197, %v1225
  %v1240 = vmax.f32 %v1199, %v1226
  %v1241 = vmax.f32 %v1202, %v1227
  %v1242 = vmax.f32 %v1204, %v1228
  %v1243 = vmax.f32 %v1207, %v1229
  %v1244 = vmax.f32 %v1209, %v1230
  %v1245 = vmax.f32 %v1212, %v1231
  %v1246 = vmax.f32 %v1214, %v1232
  %v1247 = vmax.f32 %v1217, %v1233
  %v1248 = vmax.f32 %v1219, %v1234
  %v1249 = vpack.c.bf16 %v1235, %v1235
  %v1250 = vpack.c.bf16 %v1236, %v1236
  %v1251 = vpack.c.bf16 %v1237, %v1237
  %v1252 = vpack.c.bf16 %v1238, %v1238
  %v1253 = vpack.c.bf16 %v1239, %v1239
  %v1254 = vpack.c.bf16 %v1240, %v1240
  %v1255 = vpack.c.bf16 %v1241, %v1241
  %v1256 = vpack.c.bf16 %v1242, %v1242
  %v1257 = vpack.c.bf16 %v1243, %v1243
  %v1258 = vpack.c.bf16 %v1244, %v1244
  %v1259 = vpack.c.bf16 %v1245, %v1245
  %v1260 = vpack.c.bf16 %v1246, %v1246
  %v1261 = vpack.c.bf16 %v1247, %v1247
  %v1262 = vpack.c.bf16 %v1248, %v1248
  %1263 = vst [vmem:[%s3] sm:$0xf] %v1249
  %1264 = vst [vmem:[%s3 + $0x4] sm:$0xf] %v1250
  %1265 = vst [vmem:[%s3 + $0x8] sm:$0xf] %v1251
  %1266 = vst [vmem:[%s3 + $0xc] sm:$0xf] %v1252
  %1267 = vst [vmem:[%s3 + $0x10] sm:$0xf] %v1253
  %1268 = vst [vmem:[%s3 + $0x14] sm:$0xf] %v1254
  %1269 = vst [vmem:[%s3 + $0x18] sm:$0xf] %v1255
  %1270 = vst [vmem:[%s3 + $0x1c] sm:$0xf] %v1256
  %1271 = vst [vmem:[%s3 + $0x20] sm:$0xf] %v1257
  %1272 = vst [vmem:[%s3 + $0x24] sm:$0xf] %v1258
  %1273 = vst [vmem:[%s3 + $0x28] sm:$0xf] %v1259
  %1274 = vst [vmem:[%s3 + $0x2c] sm:$0xf] %v1260
  %1275 = vst [vmem:[%s3 + $0x30] sm:$0xf] %v1261
  %1276 = vst [vmem:[%s3 + $0x34] sm:$0xf] %v1262
  %s1277 = smul.u32 0, 112
  %v1278 = vlaneseq
  %v1279 = vshrl.u32 %v1278, 7
  %v1280 = vadd.s32 %v1279, 8
  %v1281 = vadd.s32 %v1279, 16
  %v1282 = vadd.s32 %v1279, 24
  %v1283 = vadd.s32 %v1279, 32
  %v1284 = vadd.s32 %v1279, 40
  %v1285 = vadd.s32 %v1279, 48
  %v1286 = vadd.s32 %v1279, 56
  %v1287 = vadd.s32 %v1279, 64
  %v1288 = vadd.s32 %v1279, 72
  %v1289 = vadd.s32 %v1279, 80
  %v1290 = vadd.s32 %v1279, 88
  %v1291 = vadd.s32 %v1279, 96
  %v1292 = vadd.s32 %v1279, 104
  %v1293 = vstv %s1277
  %v1294 = vadd.s32 %v1293, %v1279
  %v1295 = vadd.s32 %v1293, %v1280
  %v1296 = vadd.s32 %v1293, %v1281
  %v1297 = vadd.s32 %v1293, %v1282
  %v1298 = vadd.s32 %v1293, %v1283
  %v1299 = vadd.s32 %v1293, %v1284
  %v1300 = vadd.s32 %v1293, %v1285
  %v1301 = vadd.s32 %v1293, %v1286
  %v1302 = vadd.s32 %v1293, %v1287
  %v1303 = vadd.s32 %v1293, %v1288
  %v1304 = vadd.s32 %v1293, %v1289
  %v1305 = vadd.s32 %v1293, %v1290
  %v1306 = vadd.s32 %v1293, %v1291
  %v1307 = vadd.s32 %v1293, %v1292
  %vm1308 = vcmp.lt.s32.totalorder %v1294, 98
  %vm1309 = vcmp.lt.s32.totalorder %v1295, 98
  %vm1310 = vcmp.lt.s32.totalorder %v1296, 98
  %vm1311 = vcmp.lt.s32.totalorder %v1297, 98
  %vm1312 = vcmp.lt.s32.totalorder %v1298, 98
  %vm1313 = vcmp.lt.s32.totalorder %v1299, 98
  %vm1314 = vcmp.lt.s32.totalorder %v1300, 98
  %vm1315 = vcmp.lt.s32.totalorder %v1301, 98
  %vm1316 = vcmp.lt.s32.totalorder %v1302, 98
  %vm1317 = vcmp.lt.s32.totalorder %v1303, 98
  %vm1318 = vcmp.lt.s32.totalorder %v1304, 98
  %vm1319 = vcmp.lt.s32.totalorder %v1305, 98
  %vm1320 = vcmp.lt.s32.totalorder %v1306, 98
  %vm1321 = vcmp.lt.s32.totalorder %v1307, 98
  %v1322 = vsel %vm1308, 1, 0
  %v1323 = vsel %vm1309, 1, 0
  %v1324 = vsel %vm1310, 1, 0
  %v1325 = vsel %vm1311, 1, 0
  %v1326 = vsel %vm1312, 1, 0
  %v1327 = vsel %vm1313, 1, 0
  %v1328 = vsel %vm1314, 1, 0
  %v1329 = vsel %vm1315, 1, 0
  %v1330 = vsel %vm1316, 1, 0
  %v1331 = vsel %vm1317, 1, 0
  %v1332 = vsel %vm1318, 1, 0
  %v1333 = vsel %vm1319, 1, 0
  %v1334 = vsel %vm1320, 1, 0
  %v1335 = vsel %vm1321, 1, 0
  %vm1336 = vcmp.eq.s32.totalorder %v1322, 1
  %vm1337 = vcmp.eq.s32.totalorder %v1323, 1
  %vm1338 = vcmp.eq.s32.totalorder %v1324, 1
  %vm1339 = vcmp.eq.s32.totalorder %v1325, 1
  %vm1340 = vcmp.eq.s32.totalorder %v1326, 1
  %vm1341 = vcmp.eq.s32.totalorder %v1327, 1
  %vm1342 = vcmp.eq.s32.totalorder %v1328, 1
  %vm1343 = vcmp.eq.s32.totalorder %v1329, 1
  %vm1344 = vcmp.eq.s32.totalorder %v1330, 1
  %vm1345 = vcmp.eq.s32.totalorder %v1331, 1
  %vm1346 = vcmp.eq.s32.totalorder %v1332, 1
  %vm1347 = vcmp.eq.s32.totalorder %v1333, 1
  %vm1348 = vcmp.eq.s32.totalorder %v1334, 1
  %vm1349 = vcmp.eq.s32.totalorder %v1335, 1
  %v1350 = vsel %vm1336, %v1235, 0.0
  %v1351 = vsel %vm1337, %v1236, 0.0
  %v1352 = vsel %vm1338, %v1237, 0.0
  %v1353 = vsel %vm1339, %v1238, 0.0
  %v1354 = vsel %vm1340, %v1239, 0.0
  %v1355 = vsel %vm1341, %v1240, 0.0
  %v1356 = vsel %vm1342, %v1241, 0.0
  %v1357 = vsel %vm1343, %v1242, 0.0
  %v1358 = vsel %vm1344, %v1243, 0.0
  %v1359 = vsel %vm1345, %v1244, 0.0
  %v1360 = vsel %vm1346, %v1245, 0.0
  %v1361 = vsel %vm1347, %v1246, 0.0
  %v1362 = vsel %vm1348, %v1247, 0.0
  %v1363 = vsel %vm1349, %v1248, 0.0
  %v1364 = vadd.f32 %v1350, %v1351
  %v1365 = vadd.f32 %v1364, %v1352
  %v1366 = vadd.f32 %v1365, %v1353
  %v1367 = vadd.f32 %v1366, %v1354
  %v1368 = vadd.f32 %v1367, %v1355
  %v1369 = vadd.f32 %v1368, %v1356
  %v1370 = vadd.f32 %v1369, %v1357
  %v1371 = vadd.f32 %v1370, %v1358
  %v1372 = vadd.f32 %v1371, %v1359
  %v1373 = vadd.f32 %v1372, %v1360
  %v1374 = vadd.f32 %v1373, %v1361
  %v1375 = vadd.f32 %v1374, %v1362
  %v1376 = vadd.f32 %v1375, %v1363
  %v1377 = vrot.slane %v1376, 4
  %v1378 = vadd.f32 %v1376, %v1377
  %v1379 = vrot.slane %v1378, 2
  %v1380 = vadd.f32 %v1378, %v1379
  %v1381 = vrot.slane %v1380, 1
  %v1382 = vadd.f32 %v1380, %v1381
  %v1383 = vmul.f32 %v1350, %v1350
  %v1384 = vmul.f32 %v1351, %v1351
  %v1385 = vmul.f32 %v1352, %v1352
  %v1386 = vmul.f32 %v1353, %v1353
  %v1387 = vmul.f32 %v1354, %v1354
  %v1388 = vmul.f32 %v1355, %v1355
  %v1389 = vmul.f32 %v1356, %v1356
  %v1390 = vmul.f32 %v1357, %v1357
  %v1391 = vmul.f32 %v1358, %v1358
  %v1392 = vmul.f32 %v1359, %v1359
  %v1393 = vmul.f32 %v1360, %v1360
  %v1394 = vmul.f32 %v1361, %v1361
  %v1395 = vmul.f32 %v1362, %v1362
  %v1396 = vmul.f32 %v1363, %v1363
  %v1397 = vadd.f32 %v1383, %v1384
  %v1398 = vadd.f32 %v1397, %v1385
  %v1399 = vadd.f32 %v1398, %v1386
  %v1400 = vadd.f32 %v1399, %v1387
  %v1401 = vadd.f32 %v1400, %v1388
  %v1402 = vadd.f32 %v1401, %v1389
  %v1403 = vadd.f32 %v1402, %v1390
  %v1404 = vadd.f32 %v1403, %v1391
  %v1405 = vadd.f32 %v1404, %v1392
  %v1406 = vadd.f32 %v1405, %v1393
  %v1407 = vadd.f32 %v1406, %v1394
  %v1408 = vadd.f32 %v1407, %v1395
  %v1409 = vadd.f32 %v1408, %v1396
  %v1410 = vrot.slane %v1409, 4
  %v1411 = vadd.f32 %v1409, %v1410
  %v1412 = vrot.slane %v1411, 2
  %v1413 = vadd.f32 %v1411, %v1412
  %v1414 = vrot.slane %v1413, 1
  %v1415 = vadd.f32 %v1413, %v1414
  %1416 = vst [vmem:[%s4] sm:$0xff] %v1382
  %1417 = vst [vmem:[%s5] sm:$0xff] %v1415
  // Predicated region
  $region14: #{discriminator_forward.5} parent=0 // pred_check
    _
  $region15: #{discriminator_forward.5} parent=0 // pred_check_branch
    %1419 = sbr.rel (0) target = $region17
  $region16: #{discriminator_forward.5} parent=0 // pred_region
    _
  $region17: #{discriminator_forward.5} parent=0 // pred_fallthru
    _
  // Predicated region
  $region18: #{discriminator_forward.5} parent=0 // pred_check
    _
  $region19: #{discriminator_forward.5} parent=0 // pred_check_branch
    %1421 = sbr.rel (0) target = $region21
  $region20: #{discriminator_forward.5} parent=0 // pred_region
    _
  $region21: #{discriminator_forward.5} parent=0 // pred_fallthru
    _
  // Predicated region
  $region22: #{discriminator_forward.5} parent=0 // pred_check
    _
  $region23: #{discriminator_forward.5} parent=0 // pred_check_branch
    %1423 = sbr.rel (0) target = $region25
  $region24: #{discriminator_forward.5} parent=0 // pred_region
    _
  $region25: #{discriminator_forward.5} parent=0 // pred_fallthru
    _
  // Predicated region
  $region26: #{discriminator_forward.5} parent=0 // pred_check
    _
  $region27: #{discriminator_forward.5} parent=0 // pred_check_branch
    %1425 = sbr.rel (0) target = $region29
  $region28: #{discriminator_forward.5} parent=0 // pred_region
    _
  $region29: #{discriminator_forward.5} parent=0 // pred_fallthru
    _
  // Predicated region
  $region30: #{discriminator_forward.5} parent=0 // pred_check
    _
  $region31: #{discriminator_forward.5} parent=0 // pred_check_branch
    %1427 = sbr.rel (0) target = $region33
  $region32: #{discriminator_forward.5} parent=0 // pred_region
    _
  $region33: #{discriminator_forward.5} parent=0 // pred_fallthru
    _
  // Predicated region
  $region34: #{discriminator_forward.5} parent=0 // pred_check
    _
  $region35: #{discriminator_forward.5} parent=0 // pred_check_branch
    %1429 = sbr.rel (0) target = $region37
  $region36: #{discriminator_forward.5} parent=0 // pred_region
    _
  $region37: #{discriminator_forward.5} parent=0 // pred_fallthru
    _

// kernel: discriminator_forward.6
$region0: #{discriminator_forward.6}
  #allocation0 [shape = 'u32[]', space=smem, size = 0x4, offset = 0x4, fixed_abs, tag = 'smem constant byte address 0x4 - core index']
  #allocation1 [shape = 'u32[72,128]{1,0:T(1,128)}', space=vmem, size = 0x9000, scoped, tag = 'internal scratch']
  %s0 = inlined_call_operand.vmem [shape: bf16[32,1152], index: 0, kind: input, shape index: {}]
  %s1 = inlined_call_operand.vmem [shape: bf16[1152,256], index: 1, kind: input, shape index: {}]
  %s2 = inlined_call_operand.vmem [shape: f32[1,256], index: 2, kind: input, shape index: {}]
  %s3 = inlined_call_operand.vmem [shape: bf16[32,256], index: 3, kind: output, shape index: {0}]
  %s4 = inlined_call_operand.vmem [shape: f32[8,256], index: 4, kind: output, shape index: {1}]
  %s5 = inlined_call_operand.vmem [shape: f32[8,256], index: 5, kind: output, shape index: {2}]
  %6 = xla_tuple %s3, %s4, %s5
  %s7 = sld [smem:[#allocation0]]
  $region38: #{discriminator_forward.6} parent=0
    _
  %s9 = ssub.s32 1, %s7
  %s10 = scalar_select 0, %s9, %s7
  // Predicated region
  $region2: #{discriminator_forward.6} parent=0 // pred_check
    _
  $region3: #{discriminator_forward.6} parent=0 // pred_check_branch
    %12 = sbr.rel (0) target = $region5
  $region4: #{discriminator_forward.6} parent=0 // pred_region
    _
  $region5: #{discriminator_forward.6} parent=0 // pred_fallthru
    _
  // Predicated region
  $region6: #{discriminator_forward.6} parent=0 // pred_check
    _
  $region7: #{discriminator_forward.6} parent=0 // pred_check_branch
    %14 = sbr.rel (0) target = $region9
  $region8: #{discriminator_forward.6} parent=0 // pred_region
    _
  $region9: #{discriminator_forward.6} parent=0 // pred_fallthru
    _
  // Predicated region
  $region10: #{discriminator_forward.6} parent=0 // pred_check
    _
  $region11: #{discriminator_forward.6} parent=0 // pred_check_branch
    %16 = sbr.rel (0) target = $region13
  $region12: #{discriminator_forward.6} parent=0 // pred_region
    _
  $region13: #{discriminator_forward.6} parent=0 // pred_fallthru
    _
  %v17 = vld [vmem:[%s0] sm:$0xff]
  %v18 = vld [vmem:[%s0 + $0x8] sm:$0xff]
  %v19 = vld [vmem:[%s0 + $0x10] sm:$0xff]
  %v20 = vld [vmem:[%s0 + $0x18] sm:$0xff]
  %v21 = vld [vmem:[%s0 + $0x20] sm:$0xf]
  %v22 = vld [vmem:[%s0 + $0x24] sm:$0xff]
  %v23 = vld [vmem:[%s0 + $0x2c] sm:$0xff]
  %v24 = vld [vmem:[%s0 + $0x34] sm:$0xff]
  %v25 = vld [vmem:[%s0 + $0x3c] sm:$0xff]
  %v26 = vld [vmem:[%s0 + $0x44] sm:$0xf]
  %v27 = vld [vmem:[%s0 + $0x48] sm:$0xff]
  %v28 = vld [vmem:[%s0 + $0x50] sm:$0xff]
  %v29 = vld [vmem:[%s0 + $0x58] sm:$0xff]
  %v30 = vld [vmem:[%s0 + $0x60] sm:$0xff]
  %v31 = vld [vmem:[%s0 + $0x68] sm:$0xf]
  %v32 = vld [vmem:[%s0 + $0x6c] sm:$0xff]
  %v33 = vld [vmem:[%s0 + $0x74] sm:$0xff]
  %v34 = vld [vmem:[%s0 + $0x7c] sm:$0xff]
  %v35 = vld [vmem:[%s0 + $0x84] sm:$0xff]
  %v36 = vld [vmem:[%s0 + $0x8c] sm:$0xf]
  %v37 = vld [vmem:[%s1] sm:$0xff]
  %v38 = vld [vmem:[%s1 + $0x8] sm:$0xff]
  %v39 = vld [vmem:[%s1 + $0x10] sm:$0xff]
  %v40 = vld [vmem:[%s1 + $0x18] sm:$0xff]
  %v41 = vld [vmem:[%s1 + $0x20] sm:$0xff]
  %v42 = vld [vmem:[%s1 + $0x28] sm:$0xff]
  %v43 = vld [vmem:[%s1 + $0x30] sm:$0xff]
  %v44 = vld [vmem:[%s1 + $0x38] sm:$0xff]
  %v45 = vld [vmem:[%s1 + $0x40] sm:$0xff]
  %v46 = vld [vmem:[%s1 + $0x48] sm:$0xff]
  %v47 = vld [vmem:[%s1 + $0x50] sm:$0xff]
  %v48 = vld [vmem:[%s1 + $0x58] sm:$0xff]
  %v49 = vld [vmem:[%s1 + $0x60] sm:$0xff]
  %v50 = vld [vmem:[%s1 + $0x68] sm:$0xff]
  %v51 = vld [vmem:[%s1 + $0x70] sm:$0xff]
  %v52 = vld [vmem:[%s1 + $0x78] sm:$0xff]
  %v53 = vld [vmem:[%s1 + $0x80] sm:$0xff]
  %v54 = vld [vmem:[%s1 + $0x88] sm:$0xff]
  %v55 = vld [vmem:[%s1 + $0x90] sm:$0xff]
  %v56 = vld [vmem:[%s1 + $0x98] sm:$0xff]
  %v57 = vld [vmem:[%s1 + $0xa0] sm:$0xff]
  %v58 = vld [vmem:[%s1 + $0xa8] sm:$0xff]
  %v59 = vld [vmem:[%s1 + $0xb0] sm:$0xff]
  %v60 = vld [vmem:[%s1 + $0xb8] sm:$0xff]
  %v61 = vld [vmem:[%s1 + $0xc0] sm:$0xff]
  %v62 = vld [vmem:[%s1 + $0xc8] sm:$0xff]
  %v63 = vld [vmem:[%s1 + $0xd0] sm:$0xff]
  %v64 = vld [vmem:[%s1 + $0xd8] sm:$0xff]
  %v65 = vld [vmem:[%s1 + $0xe0] sm:$0xff]
  %v66 = vld [vmem:[%s1 + $0xe8] sm:$0xff]
  %v67 = vld [vmem:[%s1 + $0xf0] sm:$0xff]
  %v68 = vld [vmem:[%s1 + $0xf8] sm:$0xff]
  %v69 = vld [vmem:[%s1 + $0x100] sm:$0xff]
  %v70 = vld [vmem:[%s1 + $0x108] sm:$0xff]
  %v71 = vld [vmem:[%s1 + $0x110] sm:$0xff]
  %v72 = vld [vmem:[%s1 + $0x118] sm:$0xff]
  %v73 = vld [vmem:[%s1 + $0x120] sm:$0xff]
  %v74 = vld [vmem:[%s1 + $0x128] sm:$0xff]
  %v75 = vld [vmem:[%s1 + $0x130] sm:$0xff]
  %v76 = vld [vmem:[%s1 + $0x138] sm:$0xff]
  %v77 = vld [vmem:[%s1 + $0x140] sm:$0xff]
  %v78 = vld [vmem:[%s1 + $0x148] sm:$0xff]
  %v79 = vld [vmem:[%s1 + $0x150] sm:$0xff]
  %v80 = vld [vmem:[%s1 + $0x158] sm:$0xff]
  %v81 = vld [vmem:[%s1 + $0x160] sm:$0xff]
  %v82 = vld [vmem:[%s1 + $0x168] sm:$0xff]
  %v83 = vld [vmem:[%s1 + $0x170] sm:$0xff]
  %v84 = vld [vmem:[%s1 + $0x178] sm:$0xff]
  %v85 = vld [vmem:[%s1 + $0x180] sm:$0xff]
  %v86 = vld [vmem:[%s1 + $0x188] sm:$0xff]
  %v87 = vld [vmem:[%s1 + $0x190] sm:$0xff]
  %v88 = vld [vmem:[%s1 + $0x198] sm:$0xff]
  %v89 = vld [vmem:[%s1 + $0x1a0] sm:$0xff]
  %v90 = vld [vmem:[%s1 + $0x1a8] sm:$0xff]
  %v91 = vld [vmem:[%s1 + $0x1b0] sm:$0xff]
  %v92 = vld [vmem:[%s1 + $0x1b8] sm:$0xff]
  %v93 = vld [vmem:[%s1 + $0x1c0] sm:$0xff]
  %v94 = vld [vmem:[%s1 + $0x1c8] sm:$0xff]
  %v95 = vld [vmem:[%s1 + $0x1d0] sm:$0xff]
  %v96 = vld [vmem:[%s1 + $0x1d8] sm:$0xff]
  %v97 = vld [vmem:[%s1 + $0x1e0] sm:$0xff]
  %v98 = vld [vmem:[%s1 + $0x1e8] sm:$0xff]
  %v99 = vld [vmem:[%s1 + $0x1f0] sm:$0xff]
  %v100 = vld [vmem:[%s1 + $0x1f8] sm:$0xff]
  %v101 = vld [vmem:[%s1 + $0x200] sm:$0xff]
  %v102 = vld [vmem:[%s1 + $0x208] sm:$0xff]
  %v103 = vld [vmem:[%s1 + $0x210] sm:$0xff]
  %v104 = vld [vmem:[%s1 + $0x218] sm:$0xff]
  %v105 = vld [vmem:[%s1 + $0x220] sm:$0xff]
  %v106 = vld [vmem:[%s1 + $0x228] sm:$0xff]
  %v107 = vld [vmem:[%s1 + $0x230] sm:$0xff]
  %v108 = vld [vmem:[%s1 + $0x238] sm:$0xff]
  %v109 = vld [vmem:[%s1 + $0x240] sm:$0xff]
  %v110 = vld [vmem:[%s1 + $0x248] sm:$0xff]
  %v111 = vld [vmem:[%s1 + $0x250] sm:$0xff]
  %v112 = vld [vmem:[%s1 + $0x258] sm:$0xff]
  %v113 = vld [vmem:[%s1 + $0x260] sm:$0xff]
  %v114 = vld [vmem:[%s1 + $0x268] sm:$0xff]
  %v115 = vld [vmem:[%s1 + $0x270] sm:$0xff]
  %v116 = vld [vmem:[%s1 + $0x278] sm:$0xff]
  %v117 = vld [vmem:[%s1 + $0x280] sm:$0xff]
  %v118 = vld [vmem:[%s1 + $0x288] sm:$0xff]
  %v119 = vld [vmem:[%s1 + $0x290] sm:$0xff]
  %v120 = vld [vmem:[%s1 + $0x298] sm:$0xff]
  %v121 = vld [vmem:[%s1 + $0x2a0] sm:$0xff]
  %v122 = vld [vmem:[%s1 + $0x2a8] sm:$0xff]
  %v123 = vld [vmem:[%s1 + $0x2b0] sm:$0xff]
  %v124 = vld [vmem:[%s1 + $0x2b8] sm:$0xff]
  %v125 = vld [vmem:[%s1 + $0x2c0] sm:$0xff]
  %v126 = vld [vmem:[%s1 + $0x2c8] sm:$0xff]
  %v127 = vld [vmem:[%s1 + $0x2d0] sm:$0xff]
  %v128 = vld [vmem:[%s1 + $0x2d8] sm:$0xff]
  %v129 = vld [vmem:[%s1 + $0x2e0] sm:$0xff]
  %v130 = vld [vmem:[%s1 + $0x2e8] sm:$0xff]
  %v131 = vld [vmem:[%s1 + $0x2f0] sm:$0xff]
  %v132 = vld [vmem:[%s1 + $0x2f8] sm:$0xff]
  %v133 = vld [vmem:[%s1 + $0x300] sm:$0xff]
  %v134 = vld [vmem:[%s1 + $0x308] sm:$0xff]
  %v135 = vld [vmem:[%s1 + $0x310] sm:$0xff]
  %v136 = vld [vmem:[%s1 + $0x318] sm:$0xff]
  %v137 = vld [vmem:[%s1 + $0x320] sm:$0xff]
  %v138 = vld [vmem:[%s1 + $0x328] sm:$0xff]
  %v139 = vld [vmem:[%s1 + $0x330] sm:$0xff]
  %v140 = vld [vmem:[%s1 + $0x338] sm:$0xff]
  %v141 = vld [vmem:[%s1 + $0x340] sm:$0xff]
  %v142 = vld [vmem:[%s1 + $0x348] sm:$0xff]
  %v143 = vld [vmem:[%s1 + $0x350] sm:$0xff]
  %v144 = vld [vmem:[%s1 + $0x358] sm:$0xff]
  %v145 = vld [vmem:[%s1 + $0x360] sm:$0xff]
  %v146 = vld [vmem:[%s1 + $0x368] sm:$0xff]
  %v147 = vld [vmem:[%s1 + $0x370] sm:$0xff]
  %v148 = vld [vmem:[%s1 + $0x378] sm:$0xff]
  %v149 = vld [vmem:[%s1 + $0x380] sm:$0xff]
  %v150 = vld [vmem:[%s1 + $0x388] sm:$0xff]
  %v151 = vld [vmem:[%s1 + $0x390] sm:$0xff]
  %v152 = vld [vmem:[%s1 + $0x398] sm:$0xff]
  %v153 = vld [vmem:[%s1 + $0x3a0] sm:$0xff]
  %v154 = vld [vmem:[%s1 + $0x3a8] sm:$0xff]
  %v155 = vld [vmem:[%s1 + $0x3b0] sm:$0xff]
  %v156 = vld [vmem:[%s1 + $0x3b8] sm:$0xff]
  %v157 = vld [vmem:[%s1 + $0x3c0] sm:$0xff]
  %v158 = vld [vmem:[%s1 + $0x3c8] sm:$0xff]
  %v159 = vld [vmem:[%s1 + $0x3d0] sm:$0xff]
  %v160 = vld [vmem:[%s1 + $0x3d8] sm:$0xff]
  %v161 = vld [vmem:[%s1 + $0x3e0] sm:$0xff]
  %v162 = vld [vmem:[%s1 + $0x3e8] sm:$0xff]
  %v163 = vld [vmem:[%s1 + $0x3f0] sm:$0xff]
  %v164 = vld [vmem:[%s1 + $0x3f8] sm:$0xff]
  %v165 = vld [vmem:[%s1 + $0x400] sm:$0xff]
  %v166 = vld [vmem:[%s1 + $0x408] sm:$0xff]
  %v167 = vld [vmem:[%s1 + $0x410] sm:$0xff]
  %v168 = vld [vmem:[%s1 + $0x418] sm:$0xff]
  %v169 = vld [vmem:[%s1 + $0x420] sm:$0xff]
  %v170 = vld [vmem:[%s1 + $0x428] sm:$0xff]
  %v171 = vld [vmem:[%s1 + $0x430] sm:$0xff]
  %v172 = vld [vmem:[%s1 + $0x438] sm:$0xff]
  %v173 = vld [vmem:[%s1 + $0x440] sm:$0xff]
  %v174 = vld [vmem:[%s1 + $0x448] sm:$0xff]
  %v175 = vld [vmem:[%s1 + $0x450] sm:$0xff]
  %v176 = vld [vmem:[%s1 + $0x458] sm:$0xff]
  %v177 = vld [vmem:[%s1 + $0x460] sm:$0xff]
  %v178 = vld [vmem:[%s1 + $0x468] sm:$0xff]
  %v179 = vld [vmem:[%s1 + $0x470] sm:$0xff]
  %v180 = vld [vmem:[%s1 + $0x478] sm:$0xff]
  %v181 = vld [vmem:[%s2] sm:$0x3]
  %v183 = vperm.slane %v181, 0
  %v184 = vperm.slane %v181, 1
  %v207 = vunpack.c.l.b16 %v17
  %v208 = vunpack.c.h.b16 %v17
  %v209 = vunpack.c.l.b16 %v18
  %v210 = vunpack.c.h.b16 %v18
  %v211 = vunpack.c.l.b16 %v19
  %v212 = vunpack.c.h.b16 %v19
  %v213 = vunpack.c.l.b16 %v20
  %v214 = vunpack.c.h.b16 %v20
  %v215 = vunpack.c.l.b16 %v21
  %v216 = vunpack.c.l.b16 %v22
  %v217 = vunpack.c.h.b16 %v22
  %v218 = vunpack.c.l.b16 %v23
  %v219 = vunpack.c.h.b16 %v23
  %v220 = vunpack.c.l.b16 %v24
  %v221 = vunpack.c.h.b16 %v24
  %v222 = vunpack.c.l.b16 %v25
  %v223 = vunpack.c.h.b16 %v25
  %v224 = vunpack.c.l.b16 %v26
  %v225 = vunpack.c.l.b16 %v27
  %v226 = vunpack.c.h.b16 %v27
  %v227 = vunpack.c.l.b16 %v28
  %v228 = vunpack.c.h.b16 %v28
  %v229 = vunpack.c.l.b16 %v29
  %v230 = vunpack.c.h.b16 %v29
  %v231 = vunpack.c.l.b16 %v30
  %v232 = vunpack.c.h.b16 %v30
  %v233 = vunpack.c.l.b16 %v31
  %v234 = vunpack.c.l.b16 %v32
  %v235 = vunpack.c.h.b16 %v32
  %v236 = vunpack.c.l.b16 %v33
  %v237 = vunpack.c.h.b16 %v33
  %v238 = vunpack.c.l.b16 %v34
  %v239 = vunpack.c.h.b16 %v34
  %v240 = vunpack.c.l.b16 %v35
  %v241 = vunpack.c.h.b16 %v35
  %v242 = vunpack.c.l.b16 %v36
  %v243 = vpack.c.b16 %v216, %v207
  %v244 = vpack.c.b16 %v217, %v208
  %v245 = vpack.c.b16 %v218, %v209
  %v246 = vpack.c.b16 %v219, %v210
  %v247 = vpack.c.b16 %v220, %v211
  %v248 = vpack.c.b16 %v221, %v212
  %v249 = vpack.c.b16 %v222, %v213
  %v250 = vpack.c.b16 %v223, %v214
  %v251 = vpack.c.b16 %v224, %v215
  %v252 = vpack.c.b16 %v234, %v225
  %v253 = vpack.c.b16 %v235, %v226
  %v254 = vpack.c.b16 %v236, %v227
  %v255 = vpack.c.b16 %v237, %v228
  %v256 = vpack.c.b16 %v238, %v229
  %v257 = vpack.c.b16 %v239, %v230
  %v258 = vpack.c.b16 %v240, %v231
  %v259 = vpack.c.b16 %v241, %v232
  %v260 = vpack.c.b16 %v242, %v233
  %v423 = vunpack.c.l.b16 %v37
  %v424 = vunpack.c.h.b16 %v37
  %v425 = vunpack.c.l.b16 %v38
  %v426 = vunpack.c.h.b16 %v38
  %v427 = vunpack.c.l.b16 %v39
  %v428 = vunpack.c.h.b16 %v39
  %v429 = vunpack.c.l.b16 %v40
  %v430 = vunpack.c.h.b16 %v40
  %v431 = vunpack.c.l.b16 %v41
  %v432 = vunpack.c.h.b16 %v41
  %v433 = vunpack.c.l.b16 %v42
  %v434 = vunpack.c.h.b16 %v42
  %v435 = vunpack.c.l.b16 %v43
  %v436 = vunpack.c.h.b16 %v43
  %v437 = vunpack.c.l.b16 %v44
  %v438 = vunpack.c.h.b16 %v44
  %v439 = vunpack.c.l.b16 %v45
  %v440 = vunpack.c.h.b16 %v45
  %v441 = vunpack.c.l.b16 %v46
  %v442 = vunpack.c.h.b16 %v46
  %v443 = vunpack.c.l.b16 %v47
  %v444 = vunpack.c.h.b16 %v47
  %v445 = vunpack.c.l.b16 %v48
  %v446 = vunpack.c.h.b16 %v48
  %v447 = vunpack.c.l.b16 %v49
  %v448 = vunpack.c.h.b16 %v49
  %v449 = vunpack.c.l.b16 %v50
  %v450 = vunpack.c.h.b16 %v50
  %v451 = vunpack.c.l.b16 %v51
  %v452 = vunpack.c.h.b16 %v51
  %v453 = vunpack.c.l.b16 %v52
  %v454 = vunpack.c.h.b16 %v52
  %v455 = vunpack.c.l.b16 %v53
  %v456 = vunpack.c.h.b16 %v53
  %v457 = vunpack.c.l.b16 %v54
  %v458 = vunpack.c.h.b16 %v54
  %v459 = vunpack.c.l.b16 %v55
  %v460 = vunpack.c.h.b16 %v55
  %v461 = vunpack.c.l.b16 %v56
  %v462 = vunpack.c.h.b16 %v56
  %v463 = vunpack.c.l.b16 %v57
  %v464 = vunpack.c.h.b16 %v57
  %v465 = vunpack.c.l.b16 %v58
  %v466 = vunpack.c.h.b16 %v58
  %v467 = vunpack.c.l.b16 %v59
  %v468 = vunpack.c.h.b16 %v59
  %v469 = vunpack.c.l.b16 %v60
  %v470 = vunpack.c.h.b16 %v60
  %v471 = vunpack.c.l.b16 %v61
  %v472 = vunpack.c.h.b16 %v61
  %v473 = vunpack.c.l.b16 %v62
  %v474 = vunpack.c.h.b16 %v62
  %v475 = vunpack.c.l.b16 %v63
  %v476 = vunpack.c.h.b16 %v63
  %v477 = vunpack.c.l.b16 %v64
  %v478 = vunpack.c.h.b16 %v64
  %v479 = vunpack.c.l.b16 %v65
  %v480 = vunpack.c.h.b16 %v65
  %v481 = vunpack.c.l.b16 %v66
  %v482 = vunpack.c.h.b16 %v66
  %v483 = vunpack.c.l.b16 %v67
  %v484 = vunpack.c.h.b16 %v67
  %v485 = vunpack.c.l.b16 %v68
  %v486 = vunpack.c.h.b16 %v68
  %v487 = vunpack.c.l.b16 %v69
  %v488 = vunpack.c.h.b16 %v69
  %v489 = vunpack.c.l.b16 %v70
  %v490 = vunpack.c.h.b16 %v70
  %v491 = vunpack.c.l.b16 %v71
  %v492 = vunpack.c.h.b16 %v71
  %v493 = vunpack.c.l.b16 %v72
  %v494 = vunpack.c.h.b16 %v72
  %v495 = vunpack.c.l.b16 %v73
  %v496 = vunpack.c.h.b16 %v73
  %v497 = vunpack.c.l.b16 %v74
  %v498 = vunpack.c.h.b16 %v74
  %v499 = vunpack.c.l.b16 %v75
  %v500 = vunpack.c.h.b16 %v75
  %v501 = vunpack.c.l.b16 %v76
  %v502 = vunpack.c.h.b16 %v76
  %v503 = vunpack.c.l.b16 %v77
  %v504 = vunpack.c.h.b16 %v77
  %v505 = vunpack.c.l.b16 %v78
  %v506 = vunpack.c.h.b16 %v78
  %v507 = vunpack.c.l.b16 %v79
  %v508 = vunpack.c.h.b16 %v79
  %v509 = vunpack.c.l.b16 %v80
  %v510 = vunpack.c.h.b16 %v80
  %v511 = vunpack.c.l.b16 %v81
  %v512 = vunpack.c.h.b16 %v81
  %v513 = vunpack.c.l.b16 %v82
  %v514 = vunpack.c.h.b16 %v82
  %v515 = vunpack.c.l.b16 %v83
  %v516 = vunpack.c.h.b16 %v83
  %v517 = vunpack.c.l.b16 %v84
  %v518 = vunpack.c.h.b16 %v84
  %v519 = vunpack.c.l.b16 %v85
  %v520 = vunpack.c.h.b16 %v85
  %v521 = vunpack.c.l.b16 %v86
  %v522 = vunpack.c.h.b16 %v86
  %v523 = vunpack.c.l.b16 %v87
  %v524 = vunpack.c.h.b16 %v87
  %v525 = vunpack.c.l.b16 %v88
  %v526 = vunpack.c.h.b16 %v88
  %v527 = vunpack.c.l.b16 %v89
  %v528 = vunpack.c.h.b16 %v89
  %v529 = vunpack.c.l.b16 %v90
  %v530 = vunpack.c.h.b16 %v90
  %v531 = vunpack.c.l.b16 %v91
  %v532 = vunpack.c.h.b16 %v91
  %v533 = vunpack.c.l.b16 %v92
  %v534 = vunpack.c.h.b16 %v92
  %v535 = vunpack.c.l.b16 %v93
  %v536 = vunpack.c.h.b16 %v93
  %v537 = vunpack.c.l.b16 %v94
  %v538 = vunpack.c.h.b16 %v94
  %v539 = vunpack.c.l.b16 %v95
  %v540 = vunpack.c.h.b16 %v95
  %v541 = vunpack.c.l.b16 %v96
  %v542 = vunpack.c.h.b16 %v96
  %v543 = vunpack.c.l.b16 %v97
  %v544 = vunpack.c.h.b16 %v97
  %v545 = vunpack.c.l.b16 %v98
  %v546 = vunpack.c.h.b16 %v98
  %v547 = vunpack.c.l.b16 %v99
  %v548 = vunpack.c.h.b16 %v99
  %v549 = vunpack.c.l.b16 %v100
  %v550 = vunpack.c.h.b16 %v100
  %v551 = vunpack.c.l.b16 %v101
  %v552 = vunpack.c.h.b16 %v101
  %v553 = vunpack.c.l.b16 %v102
  %v554 = vunpack.c.h.b16 %v102
  %v555 = vunpack.c.l.b16 %v103
  %v556 = vunpack.c.h.b16 %v103
  %v557 = vunpack.c.l.b16 %v104
  %v558 = vunpack.c.h.b16 %v104
  %v559 = vunpack.c.l.b16 %v105
  %v560 = vunpack.c.h.b16 %v105
  %v561 = vunpack.c.l.b16 %v106
  %v562 = vunpack.c.h.b16 %v106
  %v563 = vunpack.c.l.b16 %v107
  %v564 = vunpack.c.h.b16 %v107
  %v565 = vunpack.c.l.b16 %v108
  %v566 = vunpack.c.h.b16 %v108
  %v567 = vunpack.c.l.b16 %v109
  %v568 = vunpack.c.h.b16 %v109
  %v569 = vunpack.c.l.b16 %v110
  %v570 = vunpack.c.h.b16 %v110
  %v571 = vunpack.c.l.b16 %v111
  %v572 = vunpack.c.h.b16 %v111
  %v573 = vunpack.c.l.b16 %v112
  %v574 = vunpack.c.h.b16 %v112
  %v575 = vunpack.c.l.b16 %v113
  %v576 = vunpack.c.h.b16 %v113
  %v577 = vunpack.c.l.b16 %v114
  %v578 = vunpack.c.h.b16 %v114
  %v579 = vunpack.c.l.b16 %v115
  %v580 = vunpack.c.h.b16 %v115
  %v581 = vunpack.c.l.b16 %v116
  %v582 = vunpack.c.h.b16 %v116
  %v583 = vunpack.c.l.b16 %v117
  %v584 = vunpack.c.h.b16 %v117
  %v585 = vunpack.c.l.b16 %v118
  %v586 = vunpack.c.h.b16 %v118
  %v587 = vunpack.c.l.b16 %v119
  %v588 = vunpack.c.h.b16 %v119
  %v589 = vunpack.c.l.b16 %v120
  %v590 = vunpack.c.h.b16 %v120
  %v591 = vunpack.c.l.b16 %v121
  %v592 = vunpack.c.h.b16 %v121
  %v593 = vunpack.c.l.b16 %v122
  %v594 = vunpack.c.h.b16 %v122
  %v595 = vunpack.c.l.b16 %v123
  %v596 = vunpack.c.h.b16 %v123
  %v597 = vunpack.c.l.b16 %v124
  %v598 = vunpack.c.h.b16 %v124
  %v599 = vunpack.c.l.b16 %v125
  %v600 = vunpack.c.h.b16 %v125
  %v601 = vunpack.c.l.b16 %v126
  %v602 = vunpack.c.h.b16 %v126
  %v603 = vunpack.c.l.b16 %v127
  %v604 = vunpack.c.h.b16 %v127
  %v605 = vunpack.c.l.b16 %v128
  %v606 = vunpack.c.h.b16 %v128
  %v607 = vunpack.c.l.b16 %v129
  %v608 = vunpack.c.h.b16 %v129
  %v609 = vunpack.c.l.b16 %v130
  %v610 = vunpack.c.h.b16 %v130
  %v611 = vunpack.c.l.b16 %v131
  %v612 = vunpack.c.h.b16 %v131
  %v613 = vunpack.c.l.b16 %v132
  %v614 = vunpack.c.h.b16 %v132
  %v615 = vunpack.c.l.b16 %v133
  %v616 = vunpack.c.h.b16 %v133
  %v617 = vunpack.c.l.b16 %v134
  %v618 = vunpack.c.h.b16 %v134
  %v619 = vunpack.c.l.b16 %v135
  %v620 = vunpack.c.h.b16 %v135
  %v621 = vunpack.c.l.b16 %v136
  %v622 = vunpack.c.h.b16 %v136
  %v623 = vunpack.c.l.b16 %v137
  %v624 = vunpack.c.h.b16 %v137
  %v625 = vunpack.c.l.b16 %v138
  %v626 = vunpack.c.h.b16 %v138
  %v627 = vunpack.c.l.b16 %v139
  %v628 = vunpack.c.h.b16 %v139
  %v629 = vunpack.c.l.b16 %v140
  %v630 = vunpack.c.h.b16 %v140
  %v631 = vunpack.c.l.b16 %v141
  %v632 = vunpack.c.h.b16 %v141
  %v633 = vunpack.c.l.b16 %v142
  %v634 = vunpack.c.h.b16 %v142
  %v635 = vunpack.c.l.b16 %v143
  %v636 = vunpack.c.h.b16 %v143
  %v637 = vunpack.c.l.b16 %v144
  %v638 = vunpack.c.h.b16 %v144
  %v639 = vunpack.c.l.b16 %v145
  %v640 = vunpack.c.h.b16 %v145
  %v641 = vunpack.c.l.b16 %v146
  %v642 = vunpack.c.h.b16 %v146
  %v643 = vunpack.c.l.b16 %v147
  %v644 = vunpack.c.h.b16 %v147
  %v645 = vunpack.c.l.b16 %v148
  %v646 = vunpack.c.h.b16 %v148
  %v647 = vunpack.c.l.b16 %v149
  %v648 = vunpack.c.h.b16 %v149
  %v649 = vunpack.c.l.b16 %v150
  %v650 = vunpack.c.h.b16 %v150
  %v651 = vunpack.c.l.b16 %v151
  %v652 = vunpack.c.h.b16 %v151
  %v653 = vunpack.c.l.b16 %v152
  %v654 = vunpack.c.h.b16 %v152
  %v655 = vunpack.c.l.b16 %v153
  %v656 = vunpack.c.h.b16 %v153
  %v657 = vunpack.c.l.b16 %v154
  %v658 = vunpack.c.h.b16 %v154
  %v659 = vunpack.c.l.b16 %v155
  %v660 = vunpack.c.h.b16 %v155
  %v661 = vunpack.c.l.b16 %v156
  %v662 = vunpack.c.h.b16 %v156
  %v663 = vunpack.c.l.b16 %v157
  %v664 = vunpack.c.h.b16 %v157
  %v665 = vunpack.c.l.b16 %v158
  %v666 = vunpack.c.h.b16 %v158
  %v667 = vunpack.c.l.b16 %v159
  %v668 = vunpack.c.h.b16 %v159
  %v669 = vunpack.c.l.b16 %v160
  %v670 = vunpack.c.h.b16 %v160
  %v671 = vunpack.c.l.b16 %v161
  %v672 = vunpack.c.h.b16 %v161
  %v673 = vunpack.c.l.b16 %v162
  %v674 = vunpack.c.h.b16 %v162
  %v675 = vunpack.c.l.b16 %v163
  %v676 = vunpack.c.h.b16 %v163
  %v677 = vunpack.c.l.b16 %v164
  %v678 = vunpack.c.h.b16 %v164
  %v679 = vunpack.c.l.b16 %v165
  %v680 = vunpack.c.h.b16 %v165
  %v681 = vunpack.c.l.b16 %v166
  %v682 = vunpack.c.h.b16 %v166
  %v683 = vunpack.c.l.b16 %v167
  %v684 = vunpack.c.h.b16 %v167
  %v685 = vunpack.c.l.b16 %v168
  %v686 = vunpack.c.h.b16 %v168
  %v687 = vunpack.c.l.b16 %v169
  %v688 = vunpack.c.h.b16 %v169
  %v689 = vunpack.c.l.b16 %v170
  %v690 = vunpack.c.h.b16 %v170
  %v691 = vunpack.c.l.b16 %v171
  %v692 = vunpack.c.h.b16 %v171
  %v693 = vunpack.c.l.b16 %v172
  %v694 = vunpack.c.h.b16 %v172
  %v695 = vunpack.c.l.b16 %v173
  %v696 = vunpack.c.h.b16 %v173
  %v697 = vunpack.c.l.b16 %v174
  %v698 = vunpack.c.h.b16 %v174
  %v699 = vunpack.c.l.b16 %v175
  %v700 = vunpack.c.h.b16 %v175
  %v701 = vunpack.c.l.b16 %v176
  %v702 = vunpack.c.h.b16 %v176
  %v703 = vunpack.c.l.b16 %v177
  %v704 = vunpack.c.h.b16 %v177
  %v705 = vunpack.c.l.b16 %v178
  %v706 = vunpack.c.h.b16 %v178
  %v707 = vunpack.c.l.b16 %v179
  %v708 = vunpack.c.h.b16 %v179
  %v709 = vunpack.c.l.b16 %v180
  %v710 = vunpack.c.h.b16 %v180
  %v711 = vpack.c.b16 %v425, %v423
  %v712 = vpack.c.b16 %v426, %v424
  %v713 = vpack.c.b16 %v429, %v427
  %v714 = vpack.c.b16 %v430, %v428
  %v715 = vpack.c.b16 %v433, %v431
  %v716 = vpack.c.b16 %v434, %v432
  %v717 = vpack.c.b16 %v437, %v435
  %v718 = vpack.c.b16 %v438, %v436
  %v719 = vpack.c.b16 %v441, %v439
  %v720 = vpack.c.b16 %v442, %v440
  %v721 = vpack.c.b16 %v445, %v443
  %v722 = vpack.c.b16 %v446, %v444
  %v723 = vpack.c.b16 %v449, %v447
  %v724 = vpack.c.b16 %v450, %v448
  %v725 = vpack.c.b16 %v453, %v451
  %v726 = vpack.c.b16 %v454, %v452
  %v727 = vpack.c.b16 %v457, %v455
  %v728 = vpack.c.b16 %v458, %v456
  %v729 = vpack.c.b16 %v461, %v459
  %v730 = vpack.c.b16 %v462, %v460
  %v731 = vpack.c.b16 %v465, %v463
  %v732 = vpack.c.b16 %v466, %v464
  %v733 = vpack.c.b16 %v469, %v467
  %v734 = vpack.c.b16 %v470, %v468
  %v735 = vpack.c.b16 %v473, %v471
  %v736 = vpack.c.b16 %v474, %v472
  %v737 = vpack.c.b16 %v477, %v475
  %v738 = vpack.c.b16 %v478, %v476
  %v739 = vpack.c.b16 %v481, %v479
  %v740 = vpack.c.b16 %v482, %v480
  %v741 = vpack.c.b16 %v485, %v483
  %v742 = vpack.c.b16 %v486, %v484
  %v743 = vpack.c.b16 %v489, %v487
  %v744 = vpack.c.b16 %v490, %v488
  %v745 = vpack.c.b16 %v493, %v491
  %v746 = vpack.c.b16 %v494, %v492
  %v747 = vpack.c.b16 %v497, %v495
  %v748 = vpack.c.b16 %v498, %v496
  %v749 = vpack.c.b16 %v501, %v499
  %v750 = vpack.c.b16 %v502, %v500
  %v751 = vpack.c.b16 %v505, %v503
  %v752 = vpack.c.b16 %v506, %v504
  %v753 = vpack.c.b16 %v509, %v507
  %v754 = vpack.c.b16 %v510, %v508
  %v755 = vpack.c.b16 %v513, %v511
  %v756 = vpack.c.b16 %v514, %v512
  %v757 = vpack.c.b16 %v517, %v515
  %v758 = vpack.c.b16 %v518, %v516
  %v759 = vpack.c.b16 %v521, %v519
  %v760 = vpack.c.b16 %v522, %v520
  %v761 = vpack.c.b16 %v525, %v523
  %v762 = vpack.c.b16 %v526, %v524
  %v763 = vpack.c.b16 %v529, %v527
  %v764 = vpack.c.b16 %v530, %v528
  %v765 = vpack.c.b16 %v533, %v531
  %v766 = vpack.c.b16 %v534, %v532
  %v767 = vpack.c.b16 %v537, %v535
  %v768 = vpack.c.b16 %v538, %v536
  %v769 = vpack.c.b16 %v541, %v539
  %v770 = vpack.c.b16 %v542, %v540
  %v771 = vpack.c.b16 %v545, %v543
  %v772 = vpack.c.b16 %v546, %v544
  %v773 = vpack.c.b16 %v549, %v547
  %v774 = vpack.c.b16 %v550, %v548
  %v775 = vpack.c.b16 %v553, %v551
  %v776 = vpack.c.b16 %v554, %v552
  %v777 = vpack.c.b16 %v557, %v555
  %v778 = vpack.c.b16 %v558, %v556
  %v779 = vpack.c.b16 %v561, %v559
  %v780 = vpack.c.b16 %v562, %v560
  %v781 = vpack.c.b16 %v565, %v563
  %v782 = vpack.c.b16 %v566, %v564
  %v783 = vpack.c.b16 %v569, %v567
  %v784 = vpack.c.b16 %v570, %v568
  %v785 = vpack.c.b16 %v573, %v571
  %v786 = vpack.c.b16 %v574, %v572
  %v787 = vpack.c.b16 %v577, %v575
  %v788 = vpack.c.b16 %v578, %v576
  %v789 = vpack.c.b16 %v581, %v579
  %v790 = vpack.c.b16 %v582, %v580
  %v791 = vpack.c.b16 %v585, %v583
  %v792 = vpack.c.b16 %v586, %v584
  %v793 = vpack.c.b16 %v589, %v587
  %v794 = vpack.c.b16 %v590, %v588
  %v795 = vpack.c.b16 %v593, %v591
  %v796 = vpack.c.b16 %v594, %v592
  %v797 = vpack.c.b16 %v597, %v595
  %v798 = vpack.c.b16 %v598, %v596
  %v799 = vpack.c.b16 %v601, %v599
  %v800 = vpack.c.b16 %v602, %v600
  %v801 = vpack.c.b16 %v605, %v603
  %v802 = vpack.c.b16 %v606, %v604
  %v803 = vpack.c.b16 %v609, %v607
  %v804 = vpack.c.b16 %v610, %v608
  %v805 = vpack.c.b16 %v613, %v611
  %v806 = vpack.c.b16 %v614, %v612
  %v807 = vpack.c.b16 %v617, %v615
  %v808 = vpack.c.b16 %v618, %v616
  %v809 = vpack.c.b16 %v621, %v619
  %v810 = vpack.c.b16 %v622, %v620
  %v811 = vpack.c.b16 %v625, %v623
  %v812 = vpack.c.b16 %v626, %v624
  %v813 = vpack.c.b16 %v629, %v627
  %v814 = vpack.c.b16 %v630, %v628
  %v815 = vpack.c.b16 %v633, %v631
  %v816 = vpack.c.b16 %v634, %v632
  %v817 = vpack.c.b16 %v637, %v635
  %v818 = vpack.c.b16 %v638, %v636
  %v819 = vpack.c.b16 %v641, %v639
  %v820 = vpack.c.b16 %v642, %v640
  %v821 = vpack.c.b16 %v645, %v643
  %v822 = vpack.c.b16 %v646, %v644
  %v823 = vpack.c.b16 %v649, %v647
  %v824 = vpack.c.b16 %v650, %v648
  %v825 = vpack.c.b16 %v653, %v651
  %v826 = vpack.c.b16 %v654, %v652
  %v827 = vpack.c.b16 %v657, %v655
  %v828 = vpack.c.b16 %v658, %v656
  %v829 = vpack.c.b16 %v661, %v659
  %v830 = vpack.c.b16 %v662, %v660
  %v831 = vpack.c.b16 %v665, %v663
  %v832 = vpack.c.b16 %v666, %v664
  %v833 = vpack.c.b16 %v669, %v667
  %v834 = vpack.c.b16 %v670, %v668
  %v835 = vpack.c.b16 %v673, %v671
  %v836 = vpack.c.b16 %v674, %v672
  %v837 = vpack.c.b16 %v677, %v675
  %v838 = vpack.c.b16 %v678, %v676
  %v839 = vpack.c.b16 %v681, %v679
  %v840 = vpack.c.b16 %v682, %v680
  %v841 = vpack.c.b16 %v685, %v683
  %v842 = vpack.c.b16 %v686, %v684
  %v843 = vpack.c.b16 %v689, %v687
  %v844 = vpack.c.b16 %v690, %v688
  %v845 = vpack.c.b16 %v693, %v691
  %v846 = vpack.c.b16 %v694, %v692
  %v847 = vpack.c.b16 %v697, %v695
  %v848 = vpack.c.b16 %v698, %v696
  %v849 = vpack.c.b16 %v701, %v699
  %v850 = vpack.c.b16 %v702, %v700
  %v851 = vpack.c.b16 %v705, %v703
  %v852 = vpack.c.b16 %v706, %v704
  %v853 = vpack.c.b16 %v709, %v707
  %v854 = vpack.c.b16 %v710, %v708
  %999 = vmatpush.bf16.msra.mxu0 %v725
  %1000 = vmatpush.bf16.msra.mxu0 %v723
  %1001 = vmatpush.bf16.msra.mxu0 %v721
  %1002 = vmatpush.bf16.msra.mxu0 %v719
  %1003 = vmatpush.bf16.msra.mxu0 %v717
  %1004 = vmatpush.bf16.msra.mxu0 %v715
  %1005 = vmatpush.bf16.msra.mxu0 %v713
  %1006 = vmatpush.bf16.msra.mxu0 %v711
  %1007 = vmatmul.bf16.gmra.mxu0 %v243
  %v1008 = vpop.f32.mrf.mxu0
  %v1009 = vadd.f32 %v183, %v1008
  %v1010 = vpop.f32.mrf.mxu0
  %v1011 = vadd.f32 %v183, %v1010
  %1012 = vmatmul.bf16.gmra.mxu0 %v252
  %v1013 = vpop.f32.mrf.mxu0
  %v1014 = vadd.f32 %v183, %v1013
  %v1015 = vpop.f32.mrf.mxu0
  %v1016 = vadd.f32 %v183, %v1015
  %1017 = vdwg.mxu0
  %1018 = vmatpush.bf16.msra.mxu0 %v741
  %1019 = vmatpush.bf16.msra.mxu0 %v739
  %1020 = vmatpush.bf16.msra.mxu0 %v737
  %1021 = vmatpush.bf16.msra.mxu0 %v735
  %1022 = vmatpush.bf16.msra.mxu0 %v733
  %1023 = vmatpush.bf16.msra.mxu0 %v731
  %1024 = vmatpush.bf16.msra.mxu0 %v729
  %1025 = vmatpush.bf16.msra.mxu0 %v727
  %1026 = vmatmul.bf16.gmra.mxu0 %v244
  %v1027 = vpop.f32.mrf.mxu0
  %v1028 = vadd.f32 %v1009, %v1027
  %v1029 = vpop.f32.mrf.mxu0
  %v1030 = vadd.f32 %v1011, %v1029
  %1031 = vmatmul.bf16.gmra.mxu0 %v253
  %v1032 = vpop.f32.mrf.mxu0
  %v1033 = vadd.f32 %v1014, %v1032
  %v1034 = vpop.f32.mrf.mxu0
  %v1035 = vadd.f32 %v1016, %v1034
  %1036 = vdwg.mxu0
  %1037 = vmatpush.bf16.msra.mxu0 %v757
  %1038 = vmatpush.bf16.msra.mxu0 %v755
  %1039 = vmatpush.bf16.msra.mxu0 %v753
  %1040 = vmatpush.bf16.msra.mxu0 %v751
  %1041 = vmatpush.bf16.msra.mxu0 %v749
  %1042 = vmatpush.bf16.msra.mxu0 %v747
  %1043 = vmatpush.bf16.msra.mxu0 %v745
  %1044 = vmatpush.bf16.msra.mxu0 %v743
  %1045 = vmatmul.bf16.gmra.mxu0 %v245
  %v1046 = vpop.f32.mrf.mxu0
  %v1047 = vadd.f32 %v1028, %v1046
  %v1048 = vpop.f32.mrf.mxu0
  %v1049 = vadd.f32 %v1030, %v1048
  %1050 = vmatmul.bf16.gmra.mxu0 %v254
  %v1051 = vpop.f32.mrf.mxu0
  %v1052 = vadd.f32 %v1033, %v1051
  %v1053 = vpop.f32.mrf.mxu0
  %v1054 = vadd.f32 %v1035, %v1053
  %1055 = vdwg.mxu0
  %1056 = vmatpush.bf16.msra.mxu0 %v773
  %1057 = vmatpush.bf16.msra.mxu0 %v771
  %1058 = vmatpush.bf16.msra.mxu0 %v769
  %1059 = vmatpush.bf16.msra.mxu0 %v767
  %1060 = vmatpush.bf16.msra.mxu0 %v765
  %1061 = vmatpush.bf16.msra.mxu0 %v763
  %1062 = vmatpush.bf16.msra.mxu0 %v761
  %1063 = vmatpush.bf16.msra.mxu0 %v759
  %1064 = vmatmul.bf16.gmra.mxu0 %v246
  %v1065 = vpop.f32.mrf.mxu0
  %v1066 = vadd.f32 %v1047, %v1065
  %v1067 = vpop.f32.mrf.mxu0
  %v1068 = vadd.f32 %v1049, %v1067
  %1069 = vmatmul.bf16.gmra.mxu0 %v255
  %v1070 = vpop.f32.mrf.mxu0
  %v1071 = vadd.f32 %v1052, %v1070
  %v1072 = vpop.f32.mrf.mxu0
  %v1073 = vadd.f32 %v1054, %v1072
  %1074 = vdwg.mxu0
  %1075 = vmatpush.bf16.msra.mxu0 %v789
  %1076 = vmatpush.bf16.msra.mxu0 %v787
  %1077 = vmatpush.bf16.msra.mxu0 %v785
  %1078 = vmatpush.bf16.msra.mxu0 %v783
  %1079 = vmatpush.bf16.msra.mxu0 %v781
  %1080 = vmatpush.bf16.msra.mxu0 %v779
  %1081 = vmatpush.bf16.msra.mxu0 %v777
  %1082 = vmatpush.bf16.msra.mxu0 %v775
  %1083 = vmatmul.bf16.gmra.mxu0 %v247
  %v1084 = vpop.f32.mrf.mxu0
  %v1085 = vadd.f32 %v1066, %v1084
  %v1086 = vpop.f32.mrf.mxu0
  %v1087 = vadd.f32 %v1068, %v1086
  %1088 = vmatmul.bf16.gmra.mxu0 %v256
  %v1089 = vpop.f32.mrf.mxu0
  %v1090 = vadd.f32 %v1071, %v1089
  %v1091 = vpop.f32.mrf.mxu0
  %v1092 = vadd.f32 %v1073, %v1091
  %1093 = vdwg.mxu0
  %1094 = vmatpush.bf16.msra.mxu0 %v805
  %1095 = vmatpush.bf16.msra.mxu0 %v803
  %1096 = vmatpush.bf16.msra.mxu0 %v801
  %1097 = vmatpush.bf16.msra.mxu0 %v799
  %1098 = vmatpush.bf16.msra.mxu0 %v797
  %1099 = vmatpush.bf16.msra.mxu0 %v795
  %1100 = vmatpush.bf16.msra.mxu0 %v793
  %1101 = vmatpush.bf16.msra.mxu0 %v791
  %1102 = vmatmul.bf16.gmra.mxu0 %v248
  %v1103 = vpop.f32.mrf.mxu0
  %v1104 = vadd.f32 %v1085, %v1103
  %v1105 = vpop.f32.mrf.mxu0
  %v1106 = vadd.f32 %v1087, %v1105
  %1107 = vmatmul.bf16.gmra.mxu0 %v257
  %v1108 = vpop.f32.mrf.mxu0
  %v1109 = vadd.f32 %v1090, %v1108
  %v1110 = vpop.f32.mrf.mxu0
  %v1111 = vadd.f32 %v1092, %v1110
  %1112 = vdwg.mxu0
  %1113 = vmatpush.bf16.msra.mxu0 %v821
  %1114 = vmatpush.bf16.msra.mxu0 %v819
  %1115 = vmatpush.bf16.msra.mxu0 %v817
  %1116 = vmatpush.bf16.msra.mxu0 %v815
  %1117 = vmatpush.bf16.msra.mxu0 %v813
  %1118 = vmatpush.bf16.msra.mxu0 %v811
  %1119 = vmatpush.bf16.msra.mxu0 %v809
  %1120 = vmatpush.bf16.msra.mxu0 %v807
  %1121 = vmatmul.bf16.gmra.mxu0 %v249
  %v1122 = vpop.f32.mrf.mxu0
  %v1123 = vadd.f32 %v1104, %v1122
  %v1124 = vpop.f32.mrf.mxu0
  %v1125 = vadd.f32 %v1106, %v1124
  %1126 = vmatmul.bf16.gmra.mxu0 %v258
  %v1127 = vpop.f32.mrf.mxu0
  %v1128 = vadd.f32 %v1109, %v1127
  %v1129 = vpop.f32.mrf.mxu0
  %v1130 = vadd.f32 %v1111, %v1129
  %1131 = vdwg.mxu0
  %1132 = vmatpush.bf16.msra.mxu0 %v837
  %1133 = vmatpush.bf16.msra.mxu0 %v835
  %1134 = vmatpush.bf16.msra.mxu0 %v833
  %1135 = vmatpush.bf16.msra.mxu0 %v831
  %1136 = vmatpush.bf16.msra.mxu0 %v829
  %1137 = vmatpush.bf16.msra.mxu0 %v827
  %1138 = vmatpush.bf16.msra.mxu0 %v825
  %1139 = vmatpush.bf16.msra.mxu0 %v823
  %1140 = vmatmul.bf16.gmra.mxu0 %v250
  %v1141 = vpop.f32.mrf.mxu0
  %v1142 = vadd.f32 %v1123, %v1141
  %v1143 = vpop.f32.mrf.mxu0
  %v1144 = vadd.f32 %v1125, %v1143
  %1145 = vmatmul.bf16.gmra.mxu0 %v259
  %v1146 = vpop.f32.mrf.mxu0
  %v1147 = vadd.f32 %v1128, %v1146
  %v1148 = vpop.f32.mrf.mxu0
  %v1149 = vadd.f32 %v1130, %v1148
  %1150 = vdwg.mxu0
  %1151 = vmatpush.bf16.msra.mxu0 %v853
  %1152 = vmatpush.bf16.msra.mxu0 %v851
  %1153 = vmatpush.bf16.msra.mxu0 %v849
  %1154 = vmatpush.bf16.msra.mxu0 %v847
  %1155 = vmatpush.bf16.msra.mxu0 %v845
  %1156 = vmatpush.bf16.msra.mxu0 %v843
  %1157 = vmatpush.bf16.msra.mxu0 %v841
  %1158 = vmatpush.bf16.msra.mxu0 %v839
  %1159 = vmatmul.bf16.gmra.mxu0 %v251
  %v1160 = vpop.f32.mrf.mxu0
  %v1161 = vadd.f32 %v1142, %v1160
  %v1162 = vpop.f32.mrf.mxu0
  %v1163 = vadd.f32 %v1144, %v1162
  %1164 = vmatmul.bf16.gmra.mxu0 %v260
  %v1165 = vpop.f32.mrf.mxu0
  %v1166 = vadd.f32 %v1147, %v1165
  %v1167 = vpop.f32.mrf.mxu0
  %v1168 = vadd.f32 %v1149, %v1167
  %1169 = vdwg.mxu0
  %1170 = vmatpush.bf16.msra.mxu0 %v726
  %1171 = vmatpush.bf16.msra.mxu0 %v724
  %1172 = vmatpush.bf16.msra.mxu0 %v722
  %1173 = vmatpush.bf16.msra.mxu0 %v720
  %1174 = vmatpush.bf16.msra.mxu0 %v718
  %1175 = vmatpush.bf16.msra.mxu0 %v716
  %1176 = vmatpush.bf16.msra.mxu0 %v714
  %1177 = vmatpush.bf16.msra.mxu0 %v712
  %1178 = vmatmul.bf16.gmra.mxu0 %v243
  %v1179 = vpop.f32.mrf.mxu0
  %v1180 = vadd.f32 %v184, %v1179
  %v1181 = vpop.f32.mrf.mxu0
  %v1182 = vadd.f32 %v184, %v1181
  %1183 = vmatmul.bf16.gmra.mxu0 %v252
  %v1184 = vpop.f32.mrf.mxu0
  %v1185 = vadd.f32 %v184, %v1184
  %v1186 = vpop.f32.mrf.mxu0
  %v1187 = vadd.f32 %v184, %v1186
  %1188 = vdwg.mxu0
  %1189 = vmatpush.bf16.msra.mxu0 %v742
  %1190 = vmatpush.bf16.msra.mxu0 %v740
  %1191 = vmatpush.bf16.msra.mxu0 %v738
  %1192 = vmatpush.bf16.msra.mxu0 %v736
  %1193 = vmatpush.bf16.msra.mxu0 %v734
  %1194 = vmatpush.bf16.msra.mxu0 %v732
  %1195 = vmatpush.bf16.msra.mxu0 %v730
  %1196 = vmatpush.bf16.msra.mxu0 %v728
  %1197 = vmatmul.bf16.gmra.mxu0 %v244
  %v1198 = vpop.f32.mrf.mxu0
  %v1199 = vadd.f32 %v1180, %v1198
  %v1200 = vpop.f32.mrf.mxu0
  %v1201 = vadd.f32 %v1182, %v1200
  %1202 = vmatmul.bf16.gmra.mxu0 %v253
  %v1203 = vpop.f32.mrf.mxu0
  %v1204 = vadd.f32 %v1185, %v1203
  %v1205 = vpop.f32.mrf.mxu0
  %v1206 = vadd.f32 %v1187, %v1205
  %1207 = vdwg.mxu0
  %1208 = vmatpush.bf16.msra.mxu0 %v758
  %1209 = vmatpush.bf16.msra.mxu0 %v756
  %1210 = vmatpush.bf16.msra.mxu0 %v754
  %1211 = vmatpush.bf16.msra.mxu0 %v752
  %1212 = vmatpush.bf16.msra.mxu0 %v750
  %1213 = vmatpush.bf16.msra.mxu0 %v748
  %1214 = vmatpush.bf16.msra.mxu0 %v746
  %1215 = vmatpush.bf16.msra.mxu0 %v744
  %1216 = vmatmul.bf16.gmra.mxu0 %v245
  %v1217 = vpop.f32.mrf.mxu0
  %v1218 = vadd.f32 %v1199, %v1217
  %v1219 = vpop.f32.mrf.mxu0
  %v1220 = vadd.f32 %v1201, %v1219
  %1221 = vmatmul.bf16.gmra.mxu0 %v254
  %v1222 = vpop.f32.mrf.mxu0
  %v1223 = vadd.f32 %v1204, %v1222
  %v1224 = vpop.f32.mrf.mxu0
  %v1225 = vadd.f32 %v1206, %v1224
  %1226 = vdwg.mxu0
  %1227 = vmatpush.bf16.msra.mxu0 %v774
  %1228 = vmatpush.bf16.msra.mxu0 %v772
  %1229 = vmatpush.bf16.msra.mxu0 %v770
  %1230 = vmatpush.bf16.msra.mxu0 %v768
  %1231 = vmatpush.bf16.msra.mxu0 %v766
  %1232 = vmatpush.bf16.msra.mxu0 %v764
  %1233 = vmatpush.bf16.msra.mxu0 %v762
  %1234 = vmatpush.bf16.msra.mxu0 %v760
  %1235 = vmatmul.bf16.gmra.mxu0 %v246
  %v1236 = vpop.f32.mrf.mxu0
  %v1237 = vadd.f32 %v1218, %v1236
  %v1238 = vpop.f32.mrf.mxu0
  %v1239 = vadd.f32 %v1220, %v1238
  %1240 = vmatmul.bf16.gmra.mxu0 %v255
  %v1241 = vpop.f32.mrf.mxu0
  %v1242 = vadd.f32 %v1223, %v1241
  %v1243 = vpop.f32.mrf.mxu0
  %v1244 = vadd.f32 %v1225, %v1243
  %1245 = vdwg.mxu0
  %1246 = vmatpush.bf16.msra.mxu0 %v790
  %1247 = vmatpush.bf16.msra.mxu0 %v788
  %1248 = vmatpush.bf16.msra.mxu0 %v786
  %1249 = vmatpush.bf16.msra.mxu0 %v784
  %1250 = vmatpush.bf16.msra.mxu0 %v782
  %1251 = vmatpush.bf16.msra.mxu0 %v780
  %1252 = vmatpush.bf16.msra.mxu0 %v778
  %1253 = vmatpush.bf16.msra.mxu0 %v776
  %1254 = vmatmul.bf16.gmra.mxu0 %v247
  %v1255 = vpop.f32.mrf.mxu0
  %v1256 = vadd.f32 %v1237, %v1255
  %v1257 = vpop.f32.mrf.mxu0
  %v1258 = vadd.f32 %v1239, %v1257
  %1259 = vmatmul.bf16.gmra.mxu0 %v256
  %v1260 = vpop.f32.mrf.mxu0
  %v1261 = vadd.f32 %v1242, %v1260
  %v1262 = vpop.f32.mrf.mxu0
  %v1263 = vadd.f32 %v1244, %v1262
  %1264 = vdwg.mxu0
  %1265 = vmatpush.bf16.msra.mxu0 %v806
  %1266 = vmatpush.bf16.msra.mxu0 %v804
  %1267 = vmatpush.bf16.msra.mxu0 %v802
  %1268 = vmatpush.bf16.msra.mxu0 %v800
  %1269 = vmatpush.bf16.msra.mxu0 %v798
  %1270 = vmatpush.bf16.msra.mxu0 %v796
  %1271 = vmatpush.bf16.msra.mxu0 %v794
  %1272 = vmatpush.bf16.msra.mxu0 %v792
  %1273 = vmatmul.bf16.gmra.mxu0 %v248
  %v1274 = vpop.f32.mrf.mxu0
  %v1275 = vadd.f32 %v1256, %v1274
  %v1276 = vpop.f32.mrf.mxu0
  %v1277 = vadd.f32 %v1258, %v1276
  %1278 = vmatmul.bf16.gmra.mxu0 %v257
  %v1279 = vpop.f32.mrf.mxu0
  %v1280 = vadd.f32 %v1261, %v1279
  %v1281 = vpop.f32.mrf.mxu0
  %v1282 = vadd.f32 %v1263, %v1281
  %1283 = vdwg.mxu0
  %1284 = vmatpush.bf16.msra.mxu0 %v822
  %1285 = vmatpush.bf16.msra.mxu0 %v820
  %1286 = vmatpush.bf16.msra.mxu0 %v818
  %1287 = vmatpush.bf16.msra.mxu0 %v816
  %1288 = vmatpush.bf16.msra.mxu0 %v814
  %1289 = vmatpush.bf16.msra.mxu0 %v812
  %1290 = vmatpush.bf16.msra.mxu0 %v810
  %1291 = vmatpush.bf16.msra.mxu0 %v808
  %1292 = vmatmul.bf16.gmra.mxu0 %v249
  %v1293 = vpop.f32.mrf.mxu0
  %v1294 = vadd.f32 %v1275, %v1293
  %v1295 = vpop.f32.mrf.mxu0
  %v1296 = vadd.f32 %v1277, %v1295
  %1297 = vmatmul.bf16.gmra.mxu0 %v258
  %v1298 = vpop.f32.mrf.mxu0
  %v1299 = vadd.f32 %v1280, %v1298
  %v1300 = vpop.f32.mrf.mxu0
  %v1301 = vadd.f32 %v1282, %v1300
  %1302 = vdwg.mxu0
  %1303 = vmatpush.bf16.msra.mxu0 %v838
  %1304 = vmatpush.bf16.msra.mxu0 %v836
  %1305 = vmatpush.bf16.msra.mxu0 %v834
  %1306 = vmatpush.bf16.msra.mxu0 %v832
  %1307 = vmatpush.bf16.msra.mxu0 %v830
  %1308 = vmatpush.bf16.msra.mxu0 %v828
  %1309 = vmatpush.bf16.msra.mxu0 %v826
  %1310 = vmatpush.bf16.msra.mxu0 %v824
  %1311 = vmatmul.bf16.gmra.mxu0 %v250
  %v1312 = vpop.f32.mrf.mxu0
  %v1313 = vadd.f32 %v1294, %v1312
  %v1314 = vpop.f32.mrf.mxu0
  %v1315 = vadd.f32 %v1296, %v1314
  %1316 = vmatmul.bf16.gmra.mxu0 %v259
  %v1317 = vpop.f32.mrf.mxu0
  %v1318 = vadd.f32 %v1299, %v1317
  %v1319 = vpop.f32.mrf.mxu0
  %v1320 = vadd.f32 %v1301, %v1319
  %1321 = vdwg.mxu0
  %1322 = vmatpush.bf16.msra.mxu0 %v854
  %1323 = vmatpush.bf16.msra.mxu0 %v852
  %1324 = vmatpush.bf16.msra.mxu0 %v850
  %1325 = vmatpush.bf16.msra.mxu0 %v848
  %1326 = vmatpush.bf16.msra.mxu0 %v846
  %1327 = vmatpush.bf16.msra.mxu0 %v844
  %1328 = vmatpush.bf16.msra.mxu0 %v842
  %1329 = vmatpush.bf16.msra.mxu0 %v840
  %1330 = vmatmul.bf16.gmra.mxu0 %v251
  %v1331 = vpop.f32.mrf.mxu0
  %v1332 = vadd.f32 %v1313, %v1331
  %v1333 = vpop.f32.mrf.mxu0
  %v1334 = vadd.f32 %v1315, %v1333
  %1335 = vmatmul.bf16.gmra.mxu0 %v260
  %v1336 = vpop.f32.mrf.mxu0
  %v1337 = vadd.f32 %v1318, %v1336
  %v1338 = vpop.f32.mrf.mxu0
  %v1339 = vadd.f32 %v1320, %v1338
  %1340 = vdwg.mxu0
  %v1341 = vmul.f32 %v1161, 0.2
  %v1342 = vmul.f32 %v1332, 0.2
  %v1343 = vmul.f32 %v1163, 0.2
  %v1344 = vmul.f32 %v1334, 0.2
  %v1345 = vmul.f32 %v1166, 0.2
  %v1346 = vmul.f32 %v1337, 0.2
  %v1347 = vmul.f32 %v1168, 0.2
  %v1348 = vmul.f32 %v1339, 0.2
  %v1349 = vmax.f32 %v1161, %v1341
  %v1350 = vmax.f32 %v1332, %v1342
  %v1351 = vmax.f32 %v1163, %v1343
  %v1352 = vmax.f32 %v1334, %v1344
  %v1353 = vmax.f32 %v1166, %v1345
  %v1354 = vmax.f32 %v1337, %v1346
  %v1355 = vmax.f32 %v1168, %v1347
  %v1356 = vmax.f32 %v1339, %v1348
  %v1357 = vpack.c.bf16 %v1350, %v1349
  %v1358 = vpack.c.bf16 %v1352, %v1351
  %v1359 = vpack.c.bf16 %v1354, %v1353
  %v1360 = vpack.c.bf16 %v1356, %v1355
  %1361 = vst [vmem:[%s3] sm:$0xff] %v1357
  %1362 = vst [vmem:[%s3 + $0x8] sm:$0xff] %v1358
  %1363 = vst [vmem:[%s3 + $0x10] sm:$0xff] %v1359
  %1364 = vst [vmem:[%s3 + $0x18] sm:$0xff] %v1360
  %v1365 = vadd.f32 %v1349, %v1351
  %v1366 = vadd.f32 %v1365, %v1353
  %v1367 = vadd.f32 %v1366, %v1355
  %v1368 = vrot.slane %v1367, 4
  %v1369 = vadd.f32 %v1367, %v1368
  %v1370 = vrot.slane %v1369, 2
  %v1371 = vadd.f32 %v1369, %v1370
  %v1372 = vrot.slane %v1371, 1
  %v1373 = vadd.f32 %v1371, %v1372
  %v1374 = vadd.f32 %v1350, %v1352
  %v1375 = vadd.f32 %v1374, %v1354
  %v1376 = vadd.f32 %v1375, %v1356
  %v1377 = vrot.slane %v1376, 4
  %v1378 = vadd.f32 %v1376, %v1377
  %v1379 = vrot.slane %v1378, 2
  %v1380 = vadd.f32 %v1378, %v1379
  %v1381 = vrot.slane %v1380, 1
  %v1382 = vadd.f32 %v1380, %v1381
  %v1383 = vmul.f32 %v1349, %v1349
  %v1384 = vmul.f32 %v1350, %v1350
  %v1385 = vmul.f32 %v1351, %v1351
  %v1386 = vmul.f32 %v1352, %v1352
  %v1387 = vmul.f32 %v1353, %v1353
  %v1388 = vmul.f32 %v1354, %v1354
  %v1389 = vmul.f32 %v1355, %v1355
  %v1390 = vmul.f32 %v1356, %v1356
  %v1391 = vadd.f32 %v1383, %v1385
  %v1392 = vadd.f32 %v1391, %v1387
  %v1393 = vadd.f32 %v1392, %v1389
  %v1394 = vrot.slane %v1393, 4
  %v1395 = vadd.f32 %v1393, %v1394
  %v1396 = vrot.slane %v1395, 2
  %v1397 = vadd.f32 %v1395, %v1396
  %v1398 = vrot.slane %v1397, 1
  %v1399 = vadd.f32 %v1397, %v1398
  %v1400 = vadd.f32 %v1384, %v1386
  %v1401 = vadd.f32 %v1400, %v1388
  %v1402 = vadd.f32 %v1401, %v1390
  %v1403 = vrot.slane %v1402, 4
  %v1404 = vadd.f32 %v1402, %v1403
  %v1405 = vrot.slane %v1404, 2
  %v1406 = vadd.f32 %v1404, %v1405
  %v1407 = vrot.slane %v1406, 1
  %v1408 = vadd.f32 %v1406, %v1407
  %1409 = vst [vmem:[%s4] sm:$0xff] %v1373
  %1410 = vst [vmem:[%s4 + $0x8] sm:$0xff] %v1382
  %1411 = vst [vmem:[%s5] sm:$0xff] %v1399
  %1412 = vst [vmem:[%s5 + $0x8] sm:$0xff] %v1408
  // Predicated region
  $region14: #{discriminator_forward.6} parent=0 // pred_check
    _
  $region15: #{discriminator_forward.6} parent=0 // pred_check_branch
    %1414 = sbr.rel (0) target = $region17
  $region16: #{discriminator_forward.6} parent=0 // pred_region
    _
  $region17: #{discriminator_forward.6} parent=0 // pred_fallthru
    _
  // Predicated region
  $region18: #{discriminator_forward.6} parent=0 // pred_check
    _
  $region19: #{discriminator_forward.6} parent=0 // pred_check_branch
    %1416 = sbr.rel (0) target = $region21
  $region20: #{discriminator_forward.6} parent=0 // pred_region
    _
  $region21: #{discriminator_forward.6} parent=0 // pred_fallthru
    _
  // Predicated region
  $region22: #{discriminator_forward.6} parent=0 // pred_check
    _
  $region23: #{discriminator_forward.6} parent=0 // pred_check_branch
    %1418 = sbr.rel (0) target = $region25
  $region24: #{discriminator_forward.6} parent=0 // pred_region
    _
  $region25: #{discriminator_forward.6} parent=0 // pred_fallthru
    _
  // Predicated region
  $region26: #{discriminator_forward.6} parent=0 // pred_check
    _
  $region27: #{discriminator_forward.6} parent=0 // pred_check_branch
    %1420 = sbr.rel (0) target = $region29
  $region28: #{discriminator_forward.6} parent=0 // pred_region
    _
  $region29: #{discriminator_forward.6} parent=0 // pred_fallthru
    _
  // Predicated region
  $region30: #{discriminator_forward.6} parent=0 // pred_check
    _
  $region31: #{discriminator_forward.6} parent=0 // pred_check_branch
    %1422 = sbr.rel (0) target = $region33
  $region32: #{discriminator_forward.6} parent=0 // pred_region
    _
  $region33: #{discriminator_forward.6} parent=0 // pred_fallthru
    _
  // Predicated region
  $region34: #{discriminator_forward.6} parent=0 // pred_check
    _
  $region35: #{discriminator_forward.6} parent=0 // pred_check_branch
    %1424 = sbr.rel (0) target = $region37
  $region36: #{discriminator_forward.6} parent=0 // pred_region
    _
  $region37: #{discriminator_forward.6} parent=0 // pred_fallthru
    _

// kernel: discriminator_forward.7
$region0: #{discriminator_forward.7}
  #allocation0 [shape = 'u32[]', space=smem, size = 0x4, offset = 0x4, fixed_abs, tag = 'smem constant byte address 0x4 - core index']
  #allocation1 [shape = 'u32[72,128]{1,0:T(1,128)}', space=vmem, size = 0x9000, scoped, tag = 'internal scratch']
  %s0 = inlined_call_operand.vmem [shape: bf16[16,4096], index: 0, kind: input, shape index: {}]
  %s1 = inlined_call_operand.vmem [shape: bf16[4096,128], index: 1, kind: input, shape index: {}]
  %s2 = inlined_call_operand.vmem [shape: f32[1,128], index: 2, kind: input, shape index: {}]
  %s3 = inlined_call_operand.vmem [shape: f32[16,128], index: 3, kind: output, shape index: {}]
  %s4 = sld [smem:[#allocation0]]
  $region22: #{discriminator_forward.7} parent=0
    _
  %s6 = ssub.s32 1, %s4
  %s7 = scalar_select 0, %s6, %s4
  // Predicated region
  $region2: #{discriminator_forward.7} parent=0 // pred_check
    _
  $region3: #{discriminator_forward.7} parent=0 // pred_check_branch
    %9 = sbr.rel (0) target = $region5
  $region4: #{discriminator_forward.7} parent=0 // pred_region
    _
  $region5: #{discriminator_forward.7} parent=0 // pred_fallthru
    _
  // Predicated region
  $region6: #{discriminator_forward.7} parent=0 // pred_check
    _
  $region7: #{discriminator_forward.7} parent=0 // pred_check_branch
    %11 = sbr.rel (0) target = $region9
  $region8: #{discriminator_forward.7} parent=0 // pred_region
    _
  $region9: #{discriminator_forward.7} parent=0 // pred_fallthru
    _
  // Predicated region
  $region10: #{discriminator_forward.7} parent=0 // pred_check
    _
  $region11: #{discriminator_forward.7} parent=0 // pred_check_branch
    %13 = sbr.rel (0) target = $region13
  $region12: #{discriminator_forward.7} parent=0 // pred_region
    _
  $region13: #{discriminator_forward.7} parent=0 // pred_fallthru
    _
  %v14 = vld [vmem:[%s0] sm:$0xff]
  %v15 = vld [vmem:[%s0 + $0x8] sm:$0xff]
  %v16 = vld [vmem:[%s0 + $0x10] sm:$0xff]
  %v17 = vld [vmem:[%s0 + $0x18] sm:$0xff]
  %v18 = vld [vmem:[%s0 + $0x20] sm:$0xff]
  %v19 = vld [vmem:[%s0 + $0x28] sm:$0xff]
  %v20 = vld [vmem:[%s0 + $0x30] sm:$0xff]
  %v21 = vld [vmem:[%s0 + $0x38] sm:$0xff]
  %v22 = vld [vmem:[%s0 + $0x40] sm:$0xff]
  %v23 = vld [vmem:[%s0 + $0x48] sm:$0xff]
  %v24 = vld [vmem:[%s0 + $0x50] sm:$0xff]
  %v25 = vld [vmem:[%s0 + $0x58] sm:$0xff]
  %v26 = vld [vmem:[%s0 + $0x60] sm:$0xff]
  %v27 = vld [vmem:[%s0 + $0x68] sm:$0xff]
  %v28 = vld [vmem:[%s0 + $0x70] sm:$0xff]
  %v29 = vld [vmem:[%s0 + $0x78] sm:$0xff]
  %v30 = vld [vmem:[%s0 + $0x80] sm:$0xff]
  %v31 = vld [vmem:[%s0 + $0x88] sm:$0xff]
  %v32 = vld [vmem:[%s0 + $0x90] sm:$0xff]
  %v33 = vld [vmem:[%s0 + $0x98] sm:$0xff]
  %v34 = vld [vmem:[%s0 + $0xa0] sm:$0xff]
  %v35 = vld [vmem:[%s0 + $0xa8] sm:$0xff]
  %v36 = vld [vmem:[%s0 + $0xb0] sm:$0xff]
  %v37 = vld [vmem:[%s0 + $0xb8] sm:$0xff]
  %v38 = vld [vmem:[%s0 + $0xc0] sm:$0xff]
  %v39 = vld [vmem:[%s0 + $0xc8] sm:$0xff]
  %v40 = vld [vmem:[%s0 + $0xd0] sm:$0xff]
  %v41 = vld [vmem:[%s0 + $0xd8] sm:$0xff]
  %v42 = vld [vmem:[%s0 + $0xe0] sm:$0xff]
  %v43 = vld [vmem:[%s0 + $0xe8] sm:$0xff]
  %v44 = vld [vmem:[%s0 + $0xf0] sm:$0xff]
  %v45 = vld [vmem:[%s0 + $0xf8] sm:$0xff]
  %v46 = vld [vmem:[%s1] sm:$0xf]
  %v47 = vld [vmem:[%s1 + $0x4] sm:$0xf]
  %v48 = vld [vmem:[%s1 + $0x8] sm:$0xf]
  %v49 = vld [vmem:[%s1 + $0xc] sm:$0xf]
  %v50 = vld [vmem:[%s1 + $0x10] sm:$0xf]
  %v51 = vld [vmem:[%s1 + $0x14] sm:$0xf]
  %v52 = vld [vmem:[%s1 + $0x18] sm:$0xf]
  %v53 = vld [vmem:[%s1 + $0x1c] sm:$0xf]
  %v54 = vld [vmem:[%s1 + $0x20] sm:$0xf]
  %v55 = vld [vmem:[%s1 + $0x24] sm:$0xf]
  %v56 = vld [vmem:[%s1 + $0x28] sm:$0xf]
  %v57 = vld [vmem:[%s1 + $0x2c] sm:$0xf]
  %v58 = vld [vmem:[%s1 + $0x30] sm:$0xf]
  %v59 = vld [vmem:[%s1 + $0x34] sm:$0xf]
  %v60 = vld [vmem:[%s1 + $0x38] sm:$0xf]
  %v61 = vld [vmem:[%s1 + $0x3c] sm:$0xf]
  %v62 = vld [vmem:[%s1 + $0x40] sm:$0xf]
  %v63 = vld [vmem:[%s1 + $0x44] sm:$0xf]
  %v64 = vld [vmem:[%s1 + $0x48] sm:$0xf]
  %v65 = vld [vmem:[%s1 + $0x4c] sm:$0xf]
  %v66 = vld [vmem:[%s1 + $0x50] sm:$0xf]
  %v67 = vld [vmem:[%s1 + $0x54] sm:$0xf]
  %v68 = vld [vmem:[%s1 + $0x58] sm:$0xf]
  %v69 = vld [vmem:[%s1 + $0x5c] sm:$0xf]
  %v70 = vld [vmem:[%s1 + $0x60] sm:$0xf]
  %v71 = vld [vmem:[%s1 + $0x64] sm:$0xf]
  %v72 = vld [vmem:[%s1 + $0x68] sm:$0xf]
  %v73 = vld [vmem:[%s1 + $0x6c] sm:$0xf]
  %v74 = vld [vmem:[%s1 + $0x70] sm:$0xf]
  %v75 = vld [vmem:[%s1 + $0x74] sm:$0xf]
  %v76 = vld [vmem:[%s1 + $0x78] sm:$0xf]
  %v77 = vld [vmem:[%s1 + $0x7c] sm:$0xf]
  %v78 = vld [vmem:[%s1 + $0x80] sm:$0xf]
  %v79 = vld [vmem:[%s1 + $0x84] sm:$0xf]
  %v80 = vld [vmem:[%s1 + $0x88] sm:$0xf]
  %v81 = vld [vmem:[%s1 + $0x8c] sm:$0xf]
  %v82 = vld [vmem:[%s1 + $0x90] sm:$0xf]
  %v83 = vld [vmem:[%s1 + $0x94] sm:$0xf]
  %v84 = vld [vmem:[%s1 + $0x98] sm:$0xf]
  %v85 = vld [vmem:[%s1 + $0x9c] sm:$0xf]
  %v86 = vld [vmem:[%s1 + $0xa0] sm:$0xf]
  %v87 = vld [vmem:[%s1 + $0xa4] sm:$0xf]
  %v88 = vld [vmem:[%s1 + $0xa8] sm:$0xf]
  %v89 = vld [vmem:[%s1 + $0xac] sm:$0xf]
  %v90 = vld [vmem:[%s1 + $0xb0] sm:$0xf]
  %v91 = vld [vmem:[%s1 + $0xb4] sm:$0xf]
  %v92 = vld [vmem:[%s1 + $0xb8] sm:$0xf]
  %v93 = vld [vmem:[%s1 + $0xbc] sm:$0xf]
  %v94 = vld [vmem:[%s1 + $0xc0] sm:$0xf]
  %v95 = vld [vmem:[%s1 + $0xc4] sm:$0xf]
  %v96 = vld [vmem:[%s1 + $0xc8] sm:$0xf]
  %v97 = vld [vmem:[%s1 + $0xcc] sm:$0xf]
  %v98 = vld [vmem:[%s1 + $0xd0] sm:$0xf]
  %v99 = vld [vmem:[%s1 + $0xd4] sm:$0xf]
  %v100 = vld [vmem:[%s1 + $0xd8] sm:$0xf]
  %v101 = vld [vmem:[%s1 + $0xdc] sm:$0xf]
  %v102 = vld [vmem:[%s1 + $0xe0] sm:$0xf]
  %v103 = vld [vmem:[%s1 + $0xe4] sm:$0xf]
  %v104 = vld [vmem:[%s1 + $0xe8] sm:$0xf]
  %v105 = vld [vmem:[%s1 + $0xec] sm:$0xf]
  %v106 = vld [vmem:[%s1 + $0xf0] sm:$0xf]
  %v107 = vld [vmem:[%s1 + $0xf4] sm:$0xf]
  %v108 = vld [vmem:[%s1 + $0xf8] sm:$0xf]
  %v109 = vld [vmem:[%s1 + $0xfc] sm:$0xf]
  %v110 = vld [vmem:[%s1 + $0x100] sm:$0xf]
  %v111 = vld [vmem:[%s1 + $0x104] sm:$0xf]
  %v112 = vld [vmem:[%s1 + $0x108] sm:$0xf]
  %v113 = vld [vmem:[%s1 + $0x10c] sm:$0xf]
  %v114 = vld [vmem:[%s1 + $0x110] sm:$0xf]
  %v115 = vld [vmem:[%s1 + $0x114] sm:$0xf]
  %v116 = vld [vmem:[%s1 + $0x118] sm:$0xf]
  %v117 = vld [vmem:[%s1 + $0x11c] sm:$0xf]
  %v118 = vld [vmem:[%s1 + $0x120] sm:$0xf]
  %v119 = vld [vmem:[%s1 + $0x124] sm:$0xf]
  %v120 = vld [vmem:[%s1 + $0x128] sm:$0xf]
  %v121 = vld [vmem:[%s1 + $0x12c] sm:$0xf]
  %v122 = vld [vmem:[%s1 + $0x130] sm:$0xf]
  %v123 = vld [vmem:[%s1 + $0x134] sm:$0xf]
  %v124 = vld [vmem:[%s1 + $0x138] sm:$0xf]
  %v125 = vld [vmem:[%s1 + $0x13c] sm:$0xf]
  %v126 = vld [vmem:[%s1 + $0x140] sm:$0xf]
  %v127 = vld [vmem:[%s1 + $0x144] sm:$0xf]
  %v128 = vld [vmem:[%s1 + $0x148] sm:$0xf]
  %v129 = vld [vmem:[%s1 + $0x14c] sm:$0xf]
  %v130 = vld [vmem:[%s1 + $0x150] sm:$0xf]
  %v131 = vld [vmem:[%s1 + $0x154] sm:$0xf]
  %v132 = vld [vmem:[%s1 + $0x158] sm:$0xf]
  %v133 = vld [vmem:[%s1 + $0x15c] sm:$0xf]
  %v134 = vld [vmem:[%s1 + $0x160] sm:$0xf]
  %v135 = vld [vmem:[%s1 + $0x164] sm:$0xf]
  %v136 = vld [vmem:[%s1 + $0x168] sm:$0xf]
  %v137 = vld [vmem:[%s1 + $0x16c] sm:$0xf]
  %v138 = vld [vmem:[%s1 + $0x170] sm:$0xf]
  %v139 = vld [vmem:[%s1 + $0x174] sm:$0xf]
  %v140 = vld [vmem:[%s1 + $0x178] sm:$0xf]
  %v141 = vld [vmem:[%s1 + $0x17c] sm:$0xf]
  %v142 = vld [vmem:[%s1 + $0x180] sm:$0xf]
  %v143 = vld [vmem:[%s1 + $0x184] sm:$0xf]
  %v144 = vld [vmem:[%s1 + $0x188] sm:$0xf]
  %v145 = vld [vmem:[%s1 + $0x18c] sm:$0xf]
  %v146 = vld [vmem:[%s1 + $0x190] sm:$0xf]
  %v147 = vld [vmem:[%s1 + $0x194] sm:$0xf]
  %v148 = vld [vmem:[%s1 + $0x198] sm:$0xf]
  %v149 = vld [vmem:[%s1 + $0x19c] sm:$0xf]
  %v150 = vld [vmem:[%s1 + $0x1a0] sm:$0xf]
  %v151 = vld [vmem:[%s1 + $0x1a4] sm:$0xf]
  %v152 = vld [vmem:[%s1 + $0x1a8] sm:$0xf]
  %v153 = vld [vmem:[%s1 + $0x1ac] sm:$0xf]
  %v154 = vld [vmem:[%s1 + $0x1b0] sm:$0xf]
  %v155 = vld [vmem:[%s1 + $0x1b4] sm:$0xf]
  %v156 = vld [vmem:[%s1 + $0x1b8] sm:$0xf]
  %v157 = vld [vmem:[%s1 + $0x1bc] sm:$0xf]
  %v158 = vld [vmem:[%s1 + $0x1c0] sm:$0xf]
  %v159 = vld [vmem:[%s1 + $0x1c4] sm:$0xf]
  %v160 = vld [vmem:[%s1 + $0x1c8] sm:$0xf]
  %v161 = vld [vmem:[%s1 + $0x1cc] sm:$0xf]
  %v162 = vld [vmem:[%s1 + $0x1d0] sm:$0xf]
  %v163 = vld [vmem:[%s1 + $0x1d4] sm:$0xf]
  %v164 = vld [vmem:[%s1 + $0x1d8] sm:$0xf]
  %v165 = vld [vmem:[%s1 + $0x1dc] sm:$0xf]
  %v166 = vld [vmem:[%s1 + $0x1e0] sm:$0xf]
  %v167 = vld [vmem:[%s1 + $0x1e4] sm:$0xf]
  %v168 = vld [vmem:[%s1 + $0x1e8] sm:$0xf]
  %v169 = vld [vmem:[%s1 + $0x1ec] sm:$0xf]
  %v170 = vld [vmem:[%s1 + $0x1f0] sm:$0xf]
  %v171 = vld [vmem:[%s1 + $0x1f4] sm:$0xf]
  %v172 = vld [vmem:[%s1 + $0x1f8] sm:$0xf]
  %v173 = vld [vmem:[%s1 + $0x1fc] sm:$0xf]
  %v174 = vld [vmem:[%s1 + $0x200] sm:$0xf]
  %v175 = vld [vmem:[%s1 + $0x204] sm:$0xf]
  %v176 = vld [vmem:[%s1 + $0x208] sm:$0xf]
  %v177 = vld [vmem:[%s1 + $0x20c] sm:$0xf]
  %v178 = vld [vmem:[%s1 + $0x210] sm:$0xf]
  %v179 = vld [vmem:[%s1 + $0x214] sm:$0xf]
  %v180 = vld [vmem:[%s1 + $0x218] sm:$0xf]
  %v181 = vld [vmem:[%s1 + $0x21c] sm:$0xf]
  %v182 = vld [vmem:[%s1 + $0x220] sm:$0xf]
  %v183 = vld [vmem:[%s1 + $0x224] sm:$0xf]
  %v184 = vld [vmem:[%s1 + $0x228] sm:$0xf]
  %v185 = vld [vmem:[%s1 + $0x22c] sm:$0xf]
  %v186 = vld [vmem:[%s1 + $0x230] sm:$0xf]
  %v187 = vld [vmem:[%s1 + $0x234] sm:$0xf]
  %v188 = vld [vmem:[%s1 + $0x238] sm:$0xf]
  %v189 = vld [vmem:[%s1 + $0x23c] sm:$0xf]
  %v190 = vld [vmem:[%s1 + $0x240] sm:$0xf]
  %v191 = vld [vmem:[%s1 + $0x244] sm:$0xf]
  %v192 = vld [vmem:[%s1 + $0x248] sm:$0xf]
  %v193 = vld [vmem:[%s1 + $0x24c] sm:$0xf]
  %v194 = vld [vmem:[%s1 + $0x250] sm:$0xf]
  %v195 = vld [vmem:[%s1 + $0x254] sm:$0xf]
  %v196 = vld [vmem:[%s1 + $0x258] sm:$0xf]
  %v197 = vld [vmem:[%s1 + $0x25c] sm:$0xf]
  %v198 = vld [vmem:[%s1 + $0x260] sm:$0xf]
  %v199 = vld [vmem:[%s1 + $0x264] sm:$0xf]
  %v200 = vld [vmem:[%s1 + $0x268] sm:$0xf]
  %v201 = vld [vmem:[%s1 + $0x26c] sm:$0xf]
  %v202 = vld [vmem:[%s1 + $0x270] sm:$0xf]
  %v203 = vld [vmem:[%s1 + $0x274] sm:$0xf]
  %v204 = vld [vmem:[%s1 + $0x278] sm:$0xf]
  %v205 = vld [vmem:[%s1 + $0x27c] sm:$0xf]
  %v206 = vld [vmem:[%s1 + $0x280] sm:$0xf]
  %v207 = vld [vmem:[%s1 + $0x284] sm:$0xf]
  %v208 = vld [vmem:[%s1 + $0x288] sm:$0xf]
  %v209 = vld [vmem:[%s1 + $0x28c] sm:$0xf]
  %v210 = vld [vmem:[%s1 + $0x290] sm:$0xf]
  %v211 = vld [vmem:[%s1 + $0x294] sm:$0xf]
  %v212 = vld [vmem:[%s1 + $0x298] sm:$0xf]
  %v213 = vld [vmem:[%s1 + $0x29c] sm:$0xf]
  %v214 = vld [vmem:[%s1 + $0x2a0] sm:$0xf]
  %v215 = vld [vmem:[%s1 + $0x2a4] sm:$0xf]
  %v216 = vld [vmem:[%s1 + $0x2a8] sm:$0xf]
  %v217 = vld [vmem:[%s1 + $0x2ac] sm:$0xf]
  %v218 = vld [vmem:[%s1 + $0x2b0] sm:$0xf]
  %v219 = vld [vmem:[%s1 + $0x2b4] sm:$0xf]
  %v220 = vld [vmem:[%s1 + $0x2b8] sm:$0xf]
  %v221 = vld [vmem:[%s1 + $0x2bc] sm:$0xf]
  %v222 = vld [vmem:[%s1 + $0x2c0] sm:$0xf]
  %v223 = vld [vmem:[%s1 + $0x2c4] sm:$0xf]
  %v224 = vld [vmem:[%s1 + $0x2c8] sm:$0xf]
  %v225 = vld [vmem:[%s1 + $0x2cc] sm:$0xf]
  %v226 = vld [vmem:[%s1 + $0x2d0] sm:$0xf]
  %v227 = vld [vmem:[%s1 + $0x2d4] sm:$0xf]
  %v228 = vld [vmem:[%s1 + $0x2d8] sm:$0xf]
  %v229 = vld [vmem:[%s1 + $0x2dc] sm:$0xf]
  %v230 = vld [vmem:[%s1 + $0x2e0] sm:$0xf]
  %v231 = vld [vmem:[%s1 + $0x2e4] sm:$0xf]
  %v232 = vld [vmem:[%s1 + $0x2e8] sm:$0xf]
  %v233 = vld [vmem:[%s1 + $0x2ec] sm:$0xf]
  %v234 = vld [vmem:[%s1 + $0x2f0] sm:$0xf]
  %v235 = vld [vmem:[%s1 + $0x2f4] sm:$0xf]
  %v236 = vld [vmem:[%s1 + $0x2f8] sm:$0xf]
  %v237 = vld [vmem:[%s1 + $0x2fc] sm:$0xf]
  %v238 = vld [vmem:[%s1 + $0x300] sm:$0xf]
  %v239 = vld [vmem:[%s1 + $0x304] sm:$0xf]
  %v240 = vld [vmem:[%s1 + $0x308] sm:$0xf]
  %v241 = vld [vmem:[%s1 + $0x30c] sm:$0xf]
  %v242 = vld [vmem:[%s1 + $0x310] sm:$0xf]
  %v243 = vld [vmem:[%s1 + $0x314] sm:$0xf]
  %v244 = vld [vmem:[%s1 + $0x318] sm:$0xf]
  %v245 = vld [vmem:[%s1 + $0x31c] sm:$0xf]
  %v246 = vld [vmem:[%s1 + $0x320] sm:$0xf]
  %v247 = vld [vmem:[%s1 + $0x324] sm:$0xf]
  %v248 = vld [vmem:[%s1 + $0x328] sm:$0xf]
  %v249 = vld [vmem:[%s1 + $0x32c] sm:$0xf]
  %v250 = vld [vmem:[%s1 + $0x330] sm:$0xf]
  %v251 = vld [vmem:[%s1 + $0x334] sm:$0xf]
  %v252 = vld [vmem:[%s1 + $0x338] sm:$0xf]
  %v253 = vld [vmem:[%s1 + $0x33c] sm:$0xf]
  %v254 = vld [vmem:[%s1 + $0x340] sm:$0xf]
  %v255 = vld [vmem:[%s1 + $0x344] sm:$0xf]
  %v256 = vld [vmem:[%s1 + $0x348] sm:$0xf]
  %v257 = vld [vmem:[%s1 + $0x34c] sm:$0xf]
  %v258 = vld [vmem:[%s1 + $0x350] sm:$0xf]
  %v259 = vld [vmem:[%s1 + $0x354] sm:$0xf]
  %v260 = vld [vmem:[%s1 + $0x358] sm:$0xf]
  %v261 = vld [vmem:[%s1 + $0x35c] sm:$0xf]
  %v262 = vld [vmem:[%s1 + $0x360] sm:$0xf]
  %v263 = vld [vmem:[%s1 + $0x364] sm:$0xf]
  %v264 = vld [vmem:[%s1 + $0x368] sm:$0xf]
  %v265 = vld [vmem:[%s1 + $0x36c] sm:$0xf]
  %v266 = vld [vmem:[%s1 + $0x370] sm:$0xf]
  %v267 = vld [vmem:[%s1 + $0x374] sm:$0xf]
  %v268 = vld [vmem:[%s1 + $0x378] sm:$0xf]
  %v269 = vld [vmem:[%s1 + $0x37c] sm:$0xf]
  %v270 = vld [vmem:[%s1 + $0x380] sm:$0xf]
  %v271 = vld [vmem:[%s1 + $0x384] sm:$0xf]
  %v272 = vld [vmem:[%s1 + $0x388] sm:$0xf]
  %v273 = vld [vmem:[%s1 + $0x38c] sm:$0xf]
  %v274 = vld [vmem:[%s1 + $0x390] sm:$0xf]
  %v275 = vld [vmem:[%s1 + $0x394] sm:$0xf]
  %v276 = vld [vmem:[%s1 + $0x398] sm:$0xf]
  %v277 = vld [vmem:[%s1 + $0x39c] sm:$0xf]
  %v278 = vld [vmem:[%s1 + $0x3a0] sm:$0xf]
  %v279 = vld [vmem:[%s1 + $0x3a4] sm:$0xf]
  %v280 = vld [vmem:[%s1 + $0x3a8] sm:$0xf]
  %v281 = vld [vmem:[%s1 + $0x3ac] sm:$0xf]
  %v282 = vld [vmem:[%s1 + $0x3b0] sm:$0xf]
  %v283 = vld [vmem:[%s1 + $0x3b4] sm:$0xf]
  %v284 = vld [vmem:[%s1 + $0x3b8] sm:$0xf]
  %v285 = vld [vmem:[%s1 + $0x3bc] sm:$0xf]
  %v286 = vld [vmem:[%s1 + $0x3c0] sm:$0xf]
  %v287 = vld [vmem:[%s1 + $0x3c4] sm:$0xf]
  %v288 = vld [vmem:[%s1 + $0x3c8] sm:$0xf]
  %v289 = vld [vmem:[%s1 + $0x3cc] sm:$0xf]
  %v290 = vld [vmem:[%s1 + $0x3d0] sm:$0xf]
  %v291 = vld [vmem:[%s1 + $0x3d4] sm:$0xf]
  %v292 = vld [vmem:[%s1 + $0x3d8] sm:$0xf]
  %v293 = vld [vmem:[%s1 + $0x3dc] sm:$0xf]
  %v294 = vld [vmem:[%s1 + $0x3e0] sm:$0xf]
  %v295 = vld [vmem:[%s1 + $0x3e4] sm:$0xf]
  %v296 = vld [vmem:[%s1 + $0x3e8] sm:$0xf]
  %v297 = vld [vmem:[%s1 + $0x3ec] sm:$0xf]
  %v298 = vld [vmem:[%s1 + $0x3f0] sm:$0xf]
  %v299 = vld [vmem:[%s1 + $0x3f4] sm:$0xf]
  %v300 = vld [vmem:[%s1 + $0x3f8] sm:$0xf]
  %v301 = vld [vmem:[%s1 + $0x3fc] sm:$0xf]
  %v302 = vld [vmem:[%s1 + $0x400] sm:$0xf]
  %v303 = vld [vmem:[%s1 + $0x404] sm:$0xf]
  %v304 = vld [vmem:[%s1 + $0x408] sm:$0xf]
  %v305 = vld [vmem:[%s1 + $0x40c] sm:$0xf]
  %v306 = vld [vmem:[%s1 + $0x410] sm:$0xf]
  %v307 = vld [vmem:[%s1 + $0x414] sm:$0xf]
  %v308 = vld [vmem:[%s1 + $0x418] sm:$0xf]
  %v309 = vld [vmem:[%s1 + $0x41c] sm:$0xf]
  %v310 = vld [vmem:[%s1 + $0x420] sm:$0xf]
  %v311 = vld [vmem:[%s1 + $0x424] sm:$0xf]
  %v312 = vld [vmem:[%s1 + $0x428] sm:$0xf]
  %v313 = vld [vmem:[%s1 + $0x42c] sm:$0xf]
  %v314 = vld [vmem:[%s1 + $0x430] sm:$0xf]
  %v315 = vld [vmem:[%s1 + $0x434] sm:$0xf]
  %v316 = vld [vmem:[%s1 + $0x438] sm:$0xf]
  %v317 = vld [vmem:[%s1 + $0x43c] sm:$0xf]
  %v318 = vld [vmem:[%s1 + $0x440] sm:$0xf]
  %v319 = vld [vmem:[%s1 + $0x444] sm:$0xf]
  %v320 = vld [vmem:[%s1 + $0x448] sm:$0xf]
  %v321 = vld [vmem:[%s1 + $0x44c] sm:$0xf]
  %v322 = vld [vmem:[%s1 + $0x450] sm:$0xf]
  %v323 = vld [vmem:[%s1 + $0x454] sm:$0xf]
  %v324 = vld [vmem:[%s1 + $0x458] sm:$0xf]
  %v325 = vld [vmem:[%s1 + $0x45c] sm:$0xf]
  %v326 = vld [vmem:[%s1 + $0x460] sm:$0xf]
  %v327 = vld [vmem:[%s1 + $0x464] sm:$0xf]
  %v328 = vld [vmem:[%s1 + $0x468] sm:$0xf]
  %v329 = vld [vmem:[%s1 + $0x46c] sm:$0xf]
  %v330 = vld [vmem:[%s1 + $0x470] sm:$0xf]
  %v331 = vld [vmem:[%s1 + $0x474] sm:$0xf]
  %v332 = vld [vmem:[%s1 + $0x478] sm:$0xf]
  %v333 = vld [vmem:[%s1 + $0x47c] sm:$0xf]
  %v334 = vld [vmem:[%s1 + $0x480] sm:$0xf]
  %v335 = vld [vmem:[%s1 + $0x484] sm:$0xf]
  %v336 = vld [vmem:[%s1 + $0x488] sm:$0xf]
  %v337 = vld [vmem:[%s1 + $0x48c] sm:$0xf]
  %v338 = vld [vmem:[%s1 + $0x490] sm:$0xf]
  %v339 = vld [vmem:[%s1 + $0x494] sm:$0xf]
  %v340 = vld [vmem:[%s1 + $0x498] sm:$0xf]
  %v341 = vld [vmem:[%s1 + $0x49c] sm:$0xf]
  %v342 = vld [vmem:[%s1 + $0x4a0] sm:$0xf]
  %v343 = vld [vmem:[%s1 + $0x4a4] sm:$0xf]
  %v344 = vld [vmem:[%s1 + $0x4a8] sm:$0xf]
  %v345 = vld [vmem:[%s1 + $0x4ac] sm:$0xf]
  %v346 = vld [vmem:[%s1 + $0x4b0] sm:$0xf]
  %v347 = vld [vmem:[%s1 + $0x4b4] sm:$0xf]
  %v348 = vld [vmem:[%s1 + $0x4b8] sm:$0xf]
  %v349 = vld [vmem:[%s1 + $0x4bc] sm:$0xf]
  %v350 = vld [vmem:[%s1 + $0x4c0] sm:$0xf]
  %v351 = vld [vmem:[%s1 + $0x4c4] sm:$0xf]
  %v352 = vld [vmem:[%s1 + $0x4c8] sm:$0xf]
  %v353 = vld [vmem:[%s1 + $0x4cc] sm:$0xf]
  %v354 = vld [vmem:[%s1 + $0x4d0] sm:$0xf]
  %v355 = vld [vmem:[%s1 + $0x4d4] sm:$0xf]
  %v356 = vld [vmem:[%s1 + $0x4d8] sm:$0xf]
  %v357 = vld [vmem:[%s1 + $0x4dc] sm:$0xf]
  %v358 = vld [vmem:[%s1 + $0x4e0] sm:$0xf]
  %v359 = vld [vmem:[%s1 + $0x4e4] sm:$0xf]
  %v360 = vld [vmem:[%s1 + $0x4e8] sm:$0xf]
  %v361 = vld [vmem:[%s1 + $0x4ec] sm:$0xf]
  %v362 = vld [vmem:[%s1 + $0x4f0] sm:$0xf]
  %v363 = vld [vmem:[%s1 + $0x4f4] sm:$0xf]
  %v364 = vld [vmem:[%s1 + $0x4f8] sm:$0xf]
  %v365 = vld [vmem:[%s1 + $0x4fc] sm:$0xf]
  %v366 = vld [vmem:[%s1 + $0x500] sm:$0xf]
  %v367 = vld [vmem:[%s1 + $0x504] sm:$0xf]
  %v368 = vld [vmem:[%s1 + $0x508] sm:$0xf]
  %v369 = vld [vmem:[%s1 + $0x50c] sm:$0xf]
  %v370 = vld [vmem:[%s1 + $0x510] sm:$0xf]
  %v371 = vld [vmem:[%s1 + $0x514] sm:$0xf]
  %v372 = vld [vmem:[%s1 + $0x518] sm:$0xf]
  %v373 = vld [vmem:[%s1 + $0x51c] sm:$0xf]
  %v374 = vld [vmem:[%s1 + $0x520] sm:$0xf]
  %v375 = vld [vmem:[%s1 + $0x524] sm:$0xf]
  %v376 = vld [vmem:[%s1 + $0x528] sm:$0xf]
  %v377 = vld [vmem:[%s1 + $0x52c] sm:$0xf]
  %v378 = vld [vmem:[%s1 + $0x530] sm:$0xf]
  %v379 = vld [vmem:[%s1 + $0x534] sm:$0xf]
  %v380 = vld [vmem:[%s1 + $0x538] sm:$0xf]
  %v381 = vld [vmem:[%s1 + $0x53c] sm:$0xf]
  %v382 = vld [vmem:[%s1 + $0x540] sm:$0xf]
  %v383 = vld [vmem:[%s1 + $0x544] sm:$0xf]
  %v384 = vld [vmem:[%s1 + $0x548] sm:$0xf]
  %v385 = vld [vmem:[%s1 + $0x54c] sm:$0xf]
  %v386 = vld [vmem:[%s1 + $0x550] sm:$0xf]
  %v387 = vld [vmem:[%s1 + $0x554] sm:$0xf]
  %v388 = vld [vmem:[%s1 + $0x558] sm:$0xf]
  %v389 = vld [vmem:[%s1 + $0x55c] sm:$0xf]
  %v390 = vld [vmem:[%s1 + $0x560] sm:$0xf]
  %v391 = vld [vmem:[%s1 + $0x564] sm:$0xf]
  %v392 = vld [vmem:[%s1 + $0x568] sm:$0xf]
  %v393 = vld [vmem:[%s1 + $0x56c] sm:$0xf]
  %v394 = vld [vmem:[%s1 + $0x570] sm:$0xf]
  %v395 = vld [vmem:[%s1 + $0x574] sm:$0xf]
  %v396 = vld [vmem:[%s1 + $0x578] sm:$0xf]
  %v397 = vld [vmem:[%s1 + $0x57c] sm:$0xf]
  %v398 = vld [vmem:[%s1 + $0x580] sm:$0xf]
  %v399 = vld [vmem:[%s1 + $0x584] sm:$0xf]
  %v400 = vld [vmem:[%s1 + $0x588] sm:$0xf]
  %v401 = vld [vmem:[%s1 + $0x58c] sm:$0xf]
  %v402 = vld [vmem:[%s1 + $0x590] sm:$0xf]
  %v403 = vld [vmem:[%s1 + $0x594] sm:$0xf]
  %v404 = vld [vmem:[%s1 + $0x598] sm:$0xf]
  %v405 = vld [vmem:[%s1 + $0x59c] sm:$0xf]
  %v406 = vld [vmem:[%s1 + $0x5a0] sm:$0xf]
  %v407 = vld [vmem:[%s1 + $0x5a4] sm:$0xf]
  %v408 = vld [vmem:[%s1 + $0x5a8] sm:$0xf]
  %v409 = vld [vmem:[%s1 + $0x5ac] sm:$0xf]
  %v410 = vld [vmem:[%s1 + $0x5b0] sm:$0xf]
  %v411 = vld [vmem:[%s1 + $0x5b4] sm:$0xf]
  %v412 = vld [vmem:[%s1 + $0x5b8] sm:$0xf]
  %v413 = vld [vmem:[%s1 + $0x5bc] sm:$0xf]
  %v414 = vld [vmem:[%s1 + $0x5c0] sm:$0xf]
  %v415 = vld [vmem:[%s1 + $0x5c4] sm:$0xf]
  %v416 = vld [vmem:[%s1 + $0x5c8] sm:$0xf]
  %v417 = vld [vmem:[%s1 + $0x5cc] sm:$0xf]
  %v418 = vld [vmem:[%s1 + $0x5d0] sm:$0xf]
  %v419 = vld [vmem:[%s1 + $0x5d4] sm:$0xf]
  %v420 = vld [vmem:[%s1 + $0x5d8] sm:$0xf]
  %v421 = vld [vmem:[%s1 + $0x5dc] sm:$0xf]
  %v422 = vld [vmem:[%s1 + $0x5e0] sm:$0xf]
  %v423 = vld [vmem:[%s1 + $0x5e4] sm:$0xf]
  %v424 = vld [vmem:[%s1 + $0x5e8] sm:$0xf]
  %v425 = vld [vmem:[%s1 + $0x5ec] sm:$0xf]
  %v426 = vld [vmem:[%s1 + $0x5f0] sm:$0xf]
  %v427 = vld [vmem:[%s1 + $0x5f4] sm:$0xf]
  %v428 = vld [vmem:[%s1 + $0x5f8] sm:$0xf]
  %v429 = vld [vmem:[%s1 + $0x5fc] sm:$0xf]
  %v430 = vld [vmem:[%s1 + $0x600] sm:$0xf]
  %v431 = vld [vmem:[%s1 + $0x604] sm:$0xf]
  %v432 = vld [vmem:[%s1 + $0x608] sm:$0xf]
  %v433 = vld [vmem:[%s1 + $0x60c] sm:$0xf]
  %v434 = vld [vmem:[%s1 + $0x610] sm:$0xf]
  %v435 = vld [vmem:[%s1 + $0x614] sm:$0xf]
  %v436 = vld [vmem:[%s1 + $0x618] sm:$0xf]
  %v437 = vld [vmem:[%s1 + $0x61c] sm:$0xf]
  %v438 = vld [vmem:[%s1 + $0x620] sm:$0xf]
  %v439 = vld [vmem:[%s1 + $0x624] sm:$0xf]
  %v440 = vld [vmem:[%s1 + $0x628] sm:$0xf]
  %v441 = vld [vmem:[%s1 + $0x62c] sm:$0xf]
  %v442 = vld [vmem:[%s1 + $0x630] sm:$0xf]
  %v443 = vld [vmem:[%s1 + $0x634] sm:$0xf]
  %v444 = vld [vmem:[%s1 + $0x638] sm:$0xf]
  %v445 = vld [vmem:[%s1 + $0x63c] sm:$0xf]
  %v446 = vld [vmem:[%s1 + $0x640] sm:$0xf]
  %v447 = vld [vmem:[%s1 + $0x644] sm:$0xf]
  %v448 = vld [vmem:[%s1 + $0x648] sm:$0xf]
  %v449 = vld [vmem:[%s1 + $0x64c] sm:$0xf]
  %v450 = vld [vmem:[%s1 + $0x650] sm:$0xf]
  %v451 = vld [vmem:[%s1 + $0x654] sm:$0xf]
  %v452 = vld [vmem:[%s1 + $0x658] sm:$0xf]
  %v453 = vld [vmem:[%s1 + $0x65c] sm:$0xf]
  %v454 = vld [vmem:[%s1 + $0x660] sm:$0xf]
  %v455 = vld [vmem:[%s1 + $0x664] sm:$0xf]
  %v456 = vld [vmem:[%s1 + $0x668] sm:$0xf]
  %v457 = vld [vmem:[%s1 + $0x66c] sm:$0xf]
  %v458 = vld [vmem:[%s1 + $0x670] sm:$0xf]
  %v459 = vld [vmem:[%s1 + $0x674] sm:$0xf]
  %v460 = vld [vmem:[%s1 + $0x678] sm:$0xf]
  %v461 = vld [vmem:[%s1 + $0x67c] sm:$0xf]
  %v462 = vld [vmem:[%s1 + $0x680] sm:$0xf]
  %v463 = vld [vmem:[%s1 + $0x684] sm:$0xf]
  %v464 = vld [vmem:[%s1 + $0x688] sm:$0xf]
  %v465 = vld [vmem:[%s1 + $0x68c] sm:$0xf]
  %v466 = vld [vmem:[%s1 + $0x690] sm:$0xf]
  %v467 = vld [vmem:[%s1 + $0x694] sm:$0xf]
  %v468 = vld [vmem:[%s1 + $0x698] sm:$0xf]
  %v469 = vld [vmem:[%s1 + $0x69c] sm:$0xf]
  %v470 = vld [vmem:[%s1 + $0x6a0] sm:$0xf]
  %v471 = vld [vmem:[%s1 + $0x6a4] sm:$0xf]
  %v472 = vld [vmem:[%s1 + $0x6a8] sm:$0xf]
  %v473 = vld [vmem:[%s1 + $0x6ac] sm:$0xf]
  %v474 = vld [vmem:[%s1 + $0x6b0] sm:$0xf]
  %v475 = vld [vmem:[%s1 + $0x6b4] sm:$0xf]
  %v476 = vld [vmem:[%s1 + $0x6b8] sm:$0xf]
  %v477 = vld [vmem:[%s1 + $0x6bc] sm:$0xf]
  %v478 = vld [vmem:[%s1 + $0x6c0] sm:$0xf]
  %v479 = vld [vmem:[%s1 + $0x6c4] sm:$0xf]
  %v480 = vld [vmem:[%s1 + $0x6c8] sm:$0xf]
  %v481 = vld [vmem:[%s1 + $0x6cc] sm:$0xf]
  %v482 = vld [vmem:[%s1 + $0x6d0] sm:$0xf]
  %v483 = vld [vmem:[%s1 + $0x6d4] sm:$0xf]
  %v484 = vld [vmem:[%s1 + $0x6d8] sm:$0xf]
  %v485 = vld [vmem:[%s1 + $0x6dc] sm:$0xf]
  %v486 = vld [vmem:[%s1 + $0x6e0] sm:$0xf]
  %v487 = vld [vmem:[%s1 + $0x6e4] sm:$0xf]
  %v488 = vld [vmem:[%s1 + $0x6e8] sm:$0xf]
  %v489 = vld [vmem:[%s1 + $0x6ec] sm:$0xf]
  %v490 = vld [vmem:[%s1 + $0x6f0] sm:$0xf]
  %v491 = vld [vmem:[%s1 + $0x6f4] sm:$0xf]
  %v492 = vld [vmem:[%s1 + $0x6f8] sm:$0xf]
  %v493 = vld [vmem:[%s1 + $0x6fc] sm:$0xf]
  %v494 = vld [vmem:[%s1 + $0x700] sm:$0xf]
  %v495 = vld [vmem:[%s1 + $0x704] sm:$0xf]
  %v496 = vld [vmem:[%s1 + $0x708] sm:$0xf]
  %v497 = vld [vmem:[%s1 + $0x70c] sm:$0xf]
  %v498 = vld [vmem:[%s1 + $0x710] sm:$0xf]
  %v499 = vld [vmem:[%s1 + $0x714] sm:$0xf]
  %v500 = vld [vmem:[%s1 + $0x718] sm:$0xf]
  %v501 = vld [vmem:[%s1 + $0x71c] sm:$0xf]
  %v502 = vld [vmem:[%s1 + $0x720] sm:$0xf]
  %v503 = vld [vmem:[%s1 + $0x724] sm:$0xf]
  %v504 = vld [vmem:[%s1 + $0x728] sm:$0xf]
  %v505 = vld [vmem:[%s1 + $0x72c] sm:$0xf]
  %v506 = vld [vmem:[%s1 + $0x730] sm:$0xf]
  %v507 = vld [vmem:[%s1 + $0x734] sm:$0xf]
  %v508 = vld [vmem:[%s1 + $0x738] sm:$0xf]
  %v509 = vld [vmem:[%s1 + $0x73c] sm:$0xf]
  %v510 = vld [vmem:[%s1 + $0x740] sm:$0xf]
  %v511 = vld [vmem:[%s1 + $0x744] sm:$0xf]
  %v512 = vld [vmem:[%s1 + $0x748] sm:$0xf]
  %v513 = vld [vmem:[%s1 + $0x74c] sm:$0xf]
  %v514 = vld [vmem:[%s1 + $0x750] sm:$0xf]
  %v515 = vld [vmem:[%s1 + $0x754] sm:$0xf]
  %v516 = vld [vmem:[%s1 + $0x758] sm:$0xf]
  %v517 = vld [vmem:[%s1 + $0x75c] sm:$0xf]
  %v518 = vld [vmem:[%s1 + $0x760] sm:$0xf]
  %v519 = vld [vmem:[%s1 + $0x764] sm:$0xf]
  %v520 = vld [vmem:[%s1 + $0x768] sm:$0xf]
  %v521 = vld [vmem:[%s1 + $0x76c] sm:$0xf]
  %v522 = vld [vmem:[%s1 + $0x770] sm:$0xf]
  %v523 = vld [vmem:[%s1 + $0x774] sm:$0xf]
  %v524 = vld [vmem:[%s1 + $0x778] sm:$0xf]
  %v525 = vld [vmem:[%s1 + $0x77c] sm:$0xf]
  %v526 = vld [vmem:[%s1 + $0x780] sm:$0xf]
  %v527 = vld [vmem:[%s1 + $0x784] sm:$0xf]
  %v528 = vld [vmem:[%s1 + $0x788] sm:$0xf]
  %v529 = vld [vmem:[%s1 + $0x78c] sm:$0xf]
  %v530 = vld [vmem:[%s1 + $0x790] sm:$0xf]
  %v531 = vld [vmem:[%s1 + $0x794] sm:$0xf]
  %v532 = vld [vmem:[%s1 + $0x798] sm:$0xf]
  %v533 = vld [vmem:[%s1 + $0x79c] sm:$0xf]
  %v534 = vld [vmem:[%s1 + $0x7a0] sm:$0xf]
  %v535 = vld [vmem:[%s1 + $0x7a4] sm:$0xf]
  %v536 = vld [vmem:[%s1 + $0x7a8] sm:$0xf]
  %v537 = vld [vmem:[%s1 + $0x7ac] sm:$0xf]
  %v538 = vld [vmem:[%s1 + $0x7b0] sm:$0xf]
  %v539 = vld [vmem:[%s1 + $0x7b4] sm:$0xf]
  %v540 = vld [vmem:[%s1 + $0x7b8] sm:$0xf]
  %v541 = vld [vmem:[%s1 + $0x7bc] sm:$0xf]
  %v542 = vld [vmem:[%s1 + $0x7c0] sm:$0xf]
  %v543 = vld [vmem:[%s1 + $0x7c4] sm:$0xf]
  %v544 = vld [vmem:[%s1 + $0x7c8] sm:$0xf]
  %v545 = vld [vmem:[%s1 + $0x7cc] sm:$0xf]
  %v546 = vld [vmem:[%s1 + $0x7d0] sm:$0xf]
  %v547 = vld [vmem:[%s1 + $0x7d4] sm:$0xf]
  %v548 = vld [vmem:[%s1 + $0x7d8] sm:$0xf]
  %v549 = vld [vmem:[%s1 + $0x7dc] sm:$0xf]
  %v550 = vld [vmem:[%s1 + $0x7e0] sm:$0xf]
  %v551 = vld [vmem:[%s1 + $0x7e4] sm:$0xf]
  %v552 = vld [vmem:[%s1 + $0x7e8] sm:$0xf]
  %v553 = vld [vmem:[%s1 + $0x7ec] sm:$0xf]
  %v554 = vld [vmem:[%s1 + $0x7f0] sm:$0xf]
  %v555 = vld [vmem:[%s1 + $0x7f4] sm:$0xf]
  %v556 = vld [vmem:[%s1 + $0x7f8] sm:$0xf]
  %v557 = vld [vmem:[%s1 + $0x7fc] sm:$0xf]
  %v558 = vld [vmem:[%s2] sm:$0x1]
  %v560 = vperm.slane %v558, 0
  %v594 = vunpack.c.l.b16 %v14
  %v595 = vunpack.c.h.b16 %v14
  %v596 = vunpack.c.l.b16 %v15
  %v597 = vunpack.c.h.b16 %v15
  %v598 = vunpack.c.l.b16 %v16
  %v599 = vunpack.c.h.b16 %v16
  %v600 = vunpack.c.l.b16 %v17
  %v601 = vunpack.c.h.b16 %v17
  %v602 = vunpack.c.l.b16 %v18
  %v603 = vunpack.c.h.b16 %v18
  %v604 = vunpack.c.l.b16 %v19
  %v605 = vunpack.c.h.b16 %v19
  %v606 = vunpack.c.l.b16 %v20
  %v607 = vunpack.c.h.b16 %v20
  %v608 = vunpack.c.l.b16 %v21
  %v609 = vunpack.c.h.b16 %v21
  %v610 = vunpack.c.l.b16 %v22
  %v611 = vunpack.c.h.b16 %v22
  %v612 = vunpack.c.l.b16 %v23
  %v613 = vunpack.c.h.b16 %v23
  %v614 = vunpack.c.l.b16 %v24
  %v615 = vunpack.c.h.b16 %v24
  %v616 = vunpack.c.l.b16 %v25
  %v617 = vunpack.c.h.b16 %v25
  %v618 = vunpack.c.l.b16 %v26
  %v619 = vunpack.c.h.b16 %v26
  %v620 = vunpack.c.l.b16 %v27
  %v621 = vunpack.c.h.b16 %v27
  %v622 = vunpack.c.l.b16 %v28
  %v623 = vunpack.c.h.b16 %v28
  %v624 = vunpack.c.l.b16 %v29
  %v625 = vunpack.c.h.b16 %v29
  %v626 = vunpack.c.l.b16 %v30
  %v627 = vunpack.c.h.b16 %v30
  %v628 = vunpack.c.l.b16 %v31
  %v629 = vunpack.c.h.b16 %v31
  %v630 = vunpack.c.l.b16 %v32
  %v631 = vunpack.c.h.b16 %v32
  %v632 = vunpack.c.l.b16 %v33
  %v633 = vunpack.c.h.b16 %v33
  %v634 = vunpack.c.l.b16 %v34
  %v635 = vunpack.c.h.b16 %v34
  %v636 = vunpack.c.l.b16 %v35
  %v637 = vunpack.c.h.b16 %v35
  %v638 = vunpack.c.l.b16 %v36
  %v639 = vunpack.c.h.b16 %v36
  %v640 = vunpack.c.l.b16 %v37
  %v641 = vunpack.c.h.b16 %v37
  %v642 = vunpack.c.l.b16 %v38
  %v643 = vunpack.c.h.b16 %v38
  %v644 = vunpack.c.l.b16 %v39
  %v645 = vunpack.c.h.b16 %v39
  %v646 = vunpack.c.l.b16 %v40
  %v647 = vunpack.c.h.b16 %v40
  %v648 = vunpack.c.l.b16 %v41
  %v649 = vunpack.c.h.b16 %v41
  %v650 = vunpack.c.l.b16 %v42
  %v651 = vunpack.c.h.b16 %v42
  %v652 = vunpack.c.l.b16 %v43
  %v653 = vunpack.c.h.b16 %v43
  %v654 = vunpack.c.l.b16 %v44
  %v655 = vunpack.c.h.b16 %v44
  %v656 = vunpack.c.l.b16 %v45
  %v657 = vunpack.c.h.b16 %v45
  %v658 = vpack.c.b16 %v626, %v594
  %v659 = vpack.c.b16 %v627, %v595
  %v660 = vpack.c.b16 %v628, %v596
  %v661 = vpack.c.b16 %v629, %v597
  %v662 = vpack.c.b16 %v630, %v598
  %v663 = vpack.c.b16 %v631, %v599
  %v664 = vpack.c.b16 %v632, %v600
  %v665 = vpack.c.b16 %v633, %v601
  %v666 = vpack.c.b16 %v634, %v602
  %v667 = vpack.c.b16 %v635, %v603
  %v668 = vpack.c.b16 %v636, %v604
  %v669 = vpack.c.b16 %v637, %v605
  %v670 = vpack.c.b16 %v638, %v606
  %v671 = vpack.c.b16 %v639, %v607
  %v672 = vpack.c.b16 %v640, %v608
  %v673 = vpack.c.b16 %v641, %v609
  %v674 = vpack.c.b16 %v642, %v610
  %v675 = vpack.c.b16 %v643, %v611
  %v676 = vpack.c.b16 %v644, %v612
  %v677 = vpack.c.b16 %v645, %v613
  %v678 = vpack.c.b16 %v646, %v614
  %v679 = vpack.c.b16 %v647, %v615
  %v680 = vpack.c.b16 %v648, %v616
  %v681 = vpack.c.b16 %v649, %v617
  %v682 = vpack.c.b16 %v650, %v618
  %v683 = vpack.c.b16 %v651, %v619
  %v684 = vpack.c.b16 %v652, %v620
  %v685 = vpack.c.b16 %v653, %v621
  %v686 = vpack.c.b16 %v654, %v622
  %v687 = vpack.c.b16 %v655, %v623
  %v688 = vpack.c.b16 %v656, %v624
  %v689 = vpack.c.b16 %v657, %v625
  %v1234 = vunpack.c.l.b16 %v46
  %v1235 = vunpack.c.l.b16 %v47
  %v1236 = vunpack.c.l.b16 %v48
  %v1237 = vunpack.c.l.b16 %v49
  %v1238 = vunpack.c.l.b16 %v50
  %v1239 = vunpack.c.l.b16 %v51
  %v1240 = vunpack.c.l.b16 %v52
  %v1241 = vunpack.c.l.b16 %v53
  %v1242 = vunpack.c.l.b16 %v54
  %v1243 = vunpack.c.l.b16 %v55
  %v1244 = vunpack.c.l.b16 %v56
  %v1245 = vunpack.c.l.b16 %v57
  %v1246 = vunpack.c.l.b16 %v58
  %v1247 = vunpack.c.l.b16 %v59
  %v1248 = vunpack.c.l.b16 %v60
  %v1249 = vunpack.c.l.b16 %v61
  %v1250 = vunpack.c.l.b16 %v62
  %v1251 = vunpack.c.l.b16 %v63
  %v1252 = vunpack.c.l.b16 %v64
  %v1253 = vunpack.c.l.b16 %v65
  %v1254 = vunpack.c.l.b16 %v66
  %v1255 = vunpack.c.l.b16 %v67
  %v1256 = vunpack.c.l.b16 %v68
  %v1257 = vunpack.c.l.b16 %v69
  %v1258 = vunpack.c.l.b16 %v70
  %v1259 = vunpack.c.l.b16 %v71
  %v1260 = vunpack.c.l.b16 %v72
  %v1261 = vunpack.c.l.b16 %v73
  %v1262 = vunpack.c.l.b16 %v74
  %v1263 = vunpack.c.l.b16 %v75
  %v1264 = vunpack.c.l.b16 %v76
  %v1265 = vunpack.c.l.b16 %v77
  %v1266 = vunpack.c.l.b16 %v78
  %v1267 = vunpack.c.l.b16 %v79
  %v1268 = vunpack.c.l.b16 %v80
  %v1269 = vunpack.c.l.b16 %v81
  %v1270 = vunpack.c.l.b16 %v82
  %v1271 = vunpack.c.l.b16 %v83
  %v1272 = vunpack.c.l.b16 %v84
  %v1273 = vunpack.c.l.b16 %v85
  %v1274 = vunpack.c.l.b16 %v86
  %v1275 = vunpack.c.l.b16 %v87
  %v1276 = vunpack.c.l.b16 %v88
  %v1277 = vunpack.c.l.b16 %v89
  %v1278 = vunpack.c.l.b16 %v90
  %v1279 = vunpack.c.l.b16 %v91
  %v1280 = vunpack.c.l.b16 %v92
  %v1281 = vunpack.c.l.b16 %v93
  %v1282 = vunpack.c.l.b16 %v94
  %v1283 = vunpack.c.l.b16 %v95
  %v1284 = vunpack.c.l.b16 %v96
  %v1285 = vunpack.c.l.b16 %v97
  %v1286 = vunpack.c.l.b16 %v98
  %v1287 = vunpack.c.l.b16 %v99
  %v1288 = vunpack.c.l.b16 %v100
  %v1289 = vunpack.c.l.b16 %v101
  %v1290 = vunpack.c.l.b16 %v102
  %v1291 = vunpack.c.l.b16 %v103
  %v1292 = vunpack.c.l.b16 %v104
  %v1293 = vunpack.c.l.b16 %v105
  %v1294 = vunpack.c.l.b16 %v106
  %v1295 = vunpack.c.l.b16 %v107
  %v1296 = vunpack.c.l.b16 %v108
  %v1297 = vunpack.c.l.b16 %v109
  %v1298 = vunpack.c.l.b16 %v110
  %v1299 = vunpack.c.l.b16 %v111
  %v1300 = vunpack.c.l.b16 %v112
  %v1301 = vunpack.c.l.b16 %v113
  %v1302 = vunpack.c.l.b16 %v114
  %v1303 = vunpack.c.l.b16 %v115
  %v1304 = vunpack.c.l.b16 %v116
  %v1305 = vunpack.c.l.b16 %v117
  %v1306 = vunpack.c.l.b16 %v118
  %v1307 = vunpack.c.l.b16 %v119
  %v1308 = vunpack.c.l.b16 %v120
  %v1309 = vunpack.c.l.b16 %v121
  %v1310 = vunpack.c.l.b16 %v122
  %v1311 = vunpack.c.l.b16 %v123
  %v1312 = vunpack.c.l.b16 %v124
  %v1313 = vunpack.c.l.b16 %v125
  %v1314 = vunpack.c.l.b16 %v126
  %v1315 = vunpack.c.l.b16 %v127
  %v1316 = vunpack.c.l.b16 %v128
  %v1317 = vunpack.c.l.b16 %v129
  %v1318 = vunpack.c.l.b16 %v130
  %v1319 = vunpack.c.l.b16 %v131
  %v1320 = vunpack.c.l.b16 %v132
  %v1321 = vunpack.c.l.b16 %v133
  %v1322 = vunpack.c.l.b16 %v134
  %v1323 = vunpack.c.l.b16 %v135
  %v1324 = vunpack.c.l.b16 %v136
  %v1325 = vunpack.c.l.b16 %v137
  %v1326 = vunpack.c.l.b16 %v138
  %v1327 = vunpack.c.l.b16 %v139
  %v1328 = vunpack.c.l.b16 %v140
  %v1329 = vunpack.c.l.b16 %v141
  %v1330 = vunpack.c.l.b16 %v142
  %v1331 = vunpack.c.l.b16 %v143
  %v1332 = vunpack.c.l.b16 %v144
  %v1333 = vunpack.c.l.b16 %v145
  %v1334 = vunpack.c.l.b16 %v146
  %v1335 = vunpack.c.l.b16 %v147
  %v1336 = vunpack.c.l.b16 %v148
  %v1337 = vunpack.c.l.b16 %v149
  %v1338 = vunpack.c.l.b16 %v150
  %v1339 = vunpack.c.l.b16 %v151
  %v1340 = vunpack.c.l.b16 %v152
  %v1341 = vunpack.c.l.b16 %v153
  %v1342 = vunpack.c.l.b16 %v154
  %v1343 = vunpack.c.l.b16 %v155
  %v1344 = vunpack.c.l.b16 %v156
  %v1345 = vunpack.c.l.b16 %v157
  %v1346 = vunpack.c.l.b16 %v158
  %v1347 = vunpack.c.l.b16 %v159
  %v1348 = vunpack.c.l.b16 %v160
  %v1349 = vunpack.c.l.b16 %v161
  %v1350 = vunpack.c.l.b16 %v162
  %v1351 = vunpack.c.l.b16 %v163
  %v1352 = vunpack.c.l.b16 %v164
  %v1353 = vunpack.c.l.b16 %v165
  %v1354 = vunpack.c.l.b16 %v166
  %v1355 = vunpack.c.l.b16 %v167
  %v1356 = vunpack.c.l.b16 %v168
  %v1357 = vunpack.c.l.b16 %v169
  %v1358 = vunpack.c.l.b16 %v170
  %v1359 = vunpack.c.l.b16 %v171
  %v1360 = vunpack.c.l.b16 %v172
  %v1361 = vunpack.c.l.b16 %v173
  %v1362 = vunpack.c.l.b16 %v174
  %v1363 = vunpack.c.l.b16 %v175
  %v1364 = vunpack.c.l.b16 %v176
  %v1365 = vunpack.c.l.b16 %v177
  %v1366 = vunpack.c.l.b16 %v178
  %v1367 = vunpack.c.l.b16 %v179
  %v1368 = vunpack.c.l.b16 %v180
  %v1369 = vunpack.c.l.b16 %v181
  %v1370 = vunpack.c.l.b16 %v182
  %v1371 = vunpack.c.l.b16 %v183
  %v1372 = vunpack.c.l.b16 %v184
  %v1373 = vunpack.c.l.b16 %v185
  %v1374 = vunpack.c.l.b16 %v186
  %v1375 = vunpack.c.l.b16 %v187
  %v1376 = vunpack.c.l.b16 %v188
  %v1377 = vunpack.c.l.b16 %v189
  %v1378 = vunpack.c.l.b16 %v190
  %v1379 = vunpack.c.l.b16 %v191
  %v1380 = vunpack.c.l.b16 %v192
  %v1381 = vunpack.c.l.b16 %v193
  %v1382 = vunpack.c.l.b16 %v194
  %v1383 = vunpack.c.l.b16 %v195
  %v1384 = vunpack.c.l.b16 %v196
  %v1385 = vunpack.c.l.b16 %v197
  %v1386 = vunpack.c.l.b16 %v198
  %v1387 = vunpack.c.l.b16 %v199
  %v1388 = vunpack.c.l.b16 %v200
  %v1389 = vunpack.c.l.b16 %v201
  %v1390 = vunpack.c.l.b16 %v202
  %v1391 = vunpack.c.l.b16 %v203
  %v1392 = vunpack.c.l.b16 %v204
  %v1393 = vunpack.c.l.b16 %v205
  %v1394 = vunpack.c.l.b16 %v206
  %v1395 = vunpack.c.l.b16 %v207
  %v1396 = vunpack.c.l.b16 %v208
  %v1397 = vunpack.c.l.b16 %v209
  %v1398 = vunpack.c.l.b16 %v210
  %v1399 = vunpack.c.l.b16 %v211
  %v1400 = vunpack.c.l.b16 %v212
  %v1401 = vunpack.c.l.b16 %v213
  %v1402 = vunpack.c.l.b16 %v214
  %v1403 = vunpack.c.l.b16 %v215
  %v1404 = vunpack.c.l.b16 %v216
  %v1405 = vunpack.c.l.b16 %v217
  %v1406 = vunpack.c.l.b16 %v218
  %v1407 = vunpack.c.l.b16 %v219
  %v1408 = vunpack.c.l.b16 %v220
  %v1409 = vunpack.c.l.b16 %v221
  %v1410 = vunpack.c.l.b16 %v222
  %v1411 = vunpack.c.l.b16 %v223
  %v1412 = vunpack.c.l.b16 %v224
  %v1413 = vunpack.c.l.b16 %v225
  %v1414 = vunpack.c.l.b16 %v226
  %v1415 = vunpack.c.l.b16 %v227
  %v1416 = vunpack.c.l.b16 %v228
  %v1417 = vunpack.c.l.b16 %v229
  %v1418 = vunpack.c.l.b16 %v230
  %v1419 = vunpack.c.l.b16 %v231
  %v1420 = vunpack.c.l.b16 %v232
  %v1421 = vunpack.c.l.b16 %v233
  %v1422 = vunpack.c.l.b16 %v234
  %v1423 = vunpack.c.l.b16 %v235
  %v1424 = vunpack.c.l.b16 %v236
  %v1425 = vunpack.c.l.b16 %v237
  %v1426 = vunpack.c.l.b16 %v238
  %v1427 = vunpack.c.l.b16 %v239
  %v1428 = vunpack.c.l.b16 %v240
  %v1429 = vunpack.c.l.b16 %v241
  %v1430 = vunpack.c.l.b16 %v242
  %v1431 = vunpack.c.l.b16 %v243
  %v1432 = vunpack.c.l.b16 %v244
  %v1433 = vunpack.c.l.b16 %v245
  %v1434 = vunpack.c.l.b16 %v246
  %v1435 = vunpack.c.l.b16 %v247
  %v1436 = vunpack.c.l.b16 %v248
  %v1437 = vunpack.c.l.b16 %v249
  %v1438 = vunpack.c.l.b16 %v250
  %v1439 = vunpack.c.l.b16 %v251
  %v1440 = vunpack.c.l.b16 %v252
  %v1441 = vunpack.c.l.b16 %v253
  %v1442 = vunpack.c.l.b16 %v254
  %v1443 = vunpack.c.l.b16 %v255
  %v1444 = vunpack.c.l.b16 %v256
  %v1445 = vunpack.c.l.b16 %v257
  %v1446 = vunpack.c.l.b16 %v258
  %v1447 = vunpack.c.l.b16 %v259
  %v1448 = vunpack.c.l.b16 %v260
  %v1449 = vunpack.c.l.b16 %v261
  %v1450 = vunpack.c.l.b16 %v262
  %v1451 = vunpack.c.l.b16 %v263
  %v1452 = vunpack.c.l.b16 %v264
  %v1453 = vunpack.c.l.b16 %v265
  %v1454 = vunpack.c.l.b16 %v266
  %v1455 = vunpack.c.l.b16 %v267
  %v1456 = vunpack.c.l.b16 %v268
  %v1457 = vunpack.c.l.b16 %v269
  %v1458 = vunpack.c.l.b16 %v270
  %v1459 = vunpack.c.l.b16 %v271
  %v1460 = vunpack.c.l.b16 %v272
  %v1461 = vunpack.c.l.b16 %v273
  %v1462 = vunpack.c.l.b16 %v274
  %v1463 = vunpack.c.l.b16 %v275
  %v1464 = vunpack.c.l.b16 %v276
  %v1465 = vunpack.c.l.b16 %v277
  %v1466 = vunpack.c.l.b16 %v278
  %v1467 = vunpack.c.l.b16 %v279
  %v1468 = vunpack.c.l.b16 %v280
  %v1469 = vunpack.c.l.b16 %v281
  %v1470 = vunpack.c.l.b16 %v282
  %v1471 = vunpack.c.l.b16 %v283
  %v1472 = vunpack.c.l.b16 %v284
  %v1473 = vunpack.c.l.b16 %v285
  %v1474 = vunpack.c.l.b16 %v286
  %v1475 = vunpack.c.l.b16 %v287
  %v1476 = vunpack.c.l.b16 %v288
  %v1477 = vunpack.c.l.b16 %v289
  %v1478 = vunpack.c.l.b16 %v290
  %v1479 = vunpack.c.l.b16 %v291
  %v1480 = vunpack.c.l.b16 %v292
  %v1481 = vunpack.c.l.b16 %v293
  %v1482 = vunpack.c.l.b16 %v294
  %v1483 = vunpack.c.l.b16 %v295
  %v1484 = vunpack.c.l.b16 %v296
  %v1485 = vunpack.c.l.b16 %v297
  %v1486 = vunpack.c.l.b16 %v298
  %v1487 = vunpack.c.l.b16 %v299
  %v1488 = vunpack.c.l.b16 %v300
  %v1489 = vunpack.c.l.b16 %v301
  %v1490 = vunpack.c.l.b16 %v302
  %v1491 = vunpack.c.l.b16 %v303
  %v1492 = vunpack.c.l.b16 %v304
  %v1493 = vunpack.c.l.b16 %v305
  %v1494 = vunpack.c.l.b16 %v306
  %v1495 = vunpack.c.l.b16 %v307
  %v1496 = vunpack.c.l.b16 %v308
  %v1497 = vunpack.c.l.b16 %v309
  %v1498 = vunpack.c.l.b16 %v310
  %v1499 = vunpack.c.l.b16 %v311
  %v1500 = vunpack.c.l.b16 %v312
  %v1501 = vunpack.c.l.b16 %v313
  %v1502 = vunpack.c.l.b16 %v314
  %v1503 = vunpack.c.l.b16 %v315
  %v1504 = vunpack.c.l.b16 %v316
  %v1505 = vunpack.c.l.b16 %v317
  %v1506 = vunpack.c.l.b16 %v318
  %v1507 = vunpack.c.l.b16 %v319
  %v1508 = vunpack.c.l.b16 %v320
  %v1509 = vunpack.c.l.b16 %v321
  %v1510 = vunpack.c.l.b16 %v322
  %v1511 = vunpack.c.l.b16 %v323
  %v1512 = vunpack.c.l.b16 %v324
  %v1513 = vunpack.c.l.b16 %v325
  %v1514 = vunpack.c.l.b16 %v326
  %v1515 = vunpack.c.l.b16 %v327
  %v1516 = vunpack.c.l.b16 %v328
  %v1517 = vunpack.c.l.b16 %v329
  %v1518 = vunpack.c.l.b16 %v330
  %v1519 = vunpack.c.l.b16 %v331
  %v1520 = vunpack.c.l.b16 %v332
  %v1521 = vunpack.c.l.b16 %v333
  %v1522 = vunpack.c.l.b16 %v334
  %v1523 = vunpack.c.l.b16 %v335
  %v1524 = vunpack.c.l.b16 %v336
  %v1525 = vunpack.c.l.b16 %v337
  %v1526 = vunpack.c.l.b16 %v338
  %v1527 = vunpack.c.l.b16 %v339
  %v1528 = vunpack.c.l.b16 %v340
  %v1529 = vunpack.c.l.b16 %v341
  %v1530 = vunpack.c.l.b16 %v342
  %v1531 = vunpack.c.l.b16 %v343
  %v1532 = vunpack.c.l.b16 %v344
  %v1533 = vunpack.c.l.b16 %v345
  %v1534 = vunpack.c.l.b16 %v346
  %v1535 = vunpack.c.l.b16 %v347
  %v1536 = vunpack.c.l.b16 %v348
  %v1537 = vunpack.c.l.b16 %v349
  %v1538 = vunpack.c.l.b16 %v350
  %v1539 = vunpack.c.l.b16 %v351
  %v1540 = vunpack.c.l.b16 %v352
  %v1541 = vunpack.c.l.b16 %v353
  %v1542 = vunpack.c.l.b16 %v354
  %v1543 = vunpack.c.l.b16 %v355
  %v1544 = vunpack.c.l.b16 %v356
  %v1545 = vunpack.c.l.b16 %v357
  %v1546 = vunpack.c.l.b16 %v358
  %v1547 = vunpack.c.l.b16 %v359
  %v1548 = vunpack.c.l.b16 %v360
  %v1549 = vunpack.c.l.b16 %v361
  %v1550 = vunpack.c.l.b16 %v362
  %v1551 = vunpack.c.l.b16 %v363
  %v1552 = vunpack.c.l.b16 %v364
  %v1553 = vunpack.c.l.b16 %v365
  %v1554 = vunpack.c.l.b16 %v366
  %v1555 = vunpack.c.l.b16 %v367
  %v1556 = vunpack.c.l.b16 %v368
  %v1557 = vunpack.c.l.b16 %v369
  %v1558 = vunpack.c.l.b16 %v370
  %v1559 = vunpack.c.l.b16 %v371
  %v1560 = vunpack.c.l.b16 %v372
  %v1561 = vunpack.c.l.b16 %v373
  %v1562 = vunpack.c.l.b16 %v374
  %v1563 = vunpack.c.l.b16 %v375
  %v1564 = vunpack.c.l.b16 %v376
  %v1565 = vunpack.c.l.b16 %v377
  %v1566 = vunpack.c.l.b16 %v378
  %v1567 = vunpack.c.l.b16 %v379
  %v1568 = vunpack.c.l.b16 %v380
  %v1569 = vunpack.c.l.b16 %v381
  %v1570 = vunpack.c.l.b16 %v382
  %v1571 = vunpack.c.l.b16 %v383
  %v1572 = vunpack.c.l.b16 %v384
  %v1573 = vunpack.c.l.b16 %v385
  %v1574 = vunpack.c.l.b16 %v386
  %v1575 = vunpack.c.l.b16 %v387
  %v1576 = vunpack.c.l.b16 %v388
  %v1577 = vunpack.c.l.b16 %v389
  %v1578 = vunpack.c.l.b16 %v390
  %v1579 = vunpack.c.l.b16 %v391
  %v1580 = vunpack.c.l.b16 %v392
  %v1581 = vunpack.c.l.b16 %v393
  %v1582 = vunpack.c.l.b16 %v394
  %v1583 = vunpack.c.l.b16 %v395
  %v1584 = vunpack.c.l.b16 %v396
  %v1585 = vunpack.c.l.b16 %v397
  %v1586 = vunpack.c.l.b16 %v398
  %v1587 = vunpack.c.l.b16 %v399
  %v1588 = vunpack.c.l.b16 %v400
  %v1589 = vunpack.c.l.b16 %v401
  %v1590 = vunpack.c.l.b16 %v402
  %v1591 = vunpack.c.l.b16 %v403
  %v1592 = vunpack.c.l.b16 %v404
  %v1593 = vunpack.c.l.b16 %v405
  %v1594 = vunpack.c.l.b16 %v406
  %v1595 = vunpack.c.l.b16 %v407
  %v1596 = vunpack.c.l.b16 %v408
  %v1597 = vunpack.c.l.b16 %v409
  %v1598 = vunpack.c.l.b16 %v410
  %v1599 = vunpack.c.l.b16 %v411
  %v1600 = vunpack.c.l.b16 %v412
  %v1601 = vunpack.c.l.b16 %v413
  %v1602 = vunpack.c.l.b16 %v414
  %v1603 = vunpack.c.l.b16 %v415
  %v1604 = vunpack.c.l.b16 %v416
  %v1605 = vunpack.c.l.b16 %v417
  %v1606 = vunpack.c.l.b16 %v418
  %v1607 = vunpack.c.l.b16 %v419
  %v1608 = vunpack.c.l.b16 %v420
  %v1609 = vunpack.c.l.b16 %v421
  %v1610 = vunpack.c.l.b16 %v422
  %v1611 = vunpack.c.l.b16 %v423
  %v1612 = vunpack.c.l.b16 %v424
  %v1613 = vunpack.c.l.b16 %v425
  %v1614 = vunpack.c.l.b16 %v426
  %v1615 = vunpack.c.l.b16 %v427
  %v1616 = vunpack.c.l.b16 %v428
  %v1617 = vunpack.c.l.b16 %v429
  %v1618 = vunpack.c.l.b16 %v430
  %v1619 = vunpack.c.l.b16 %v431
  %v1620 = vunpack.c.l.b16 %v432
  %v1621 = vunpack.c.l.b16 %v433
  %v1622 = vunpack.c.l.b16 %v434
  %v1623 = vunpack.c.l.b16 %v435
  %v1624 = vunpack.c.l.b16 %v436
  %v1625 = vunpack.c.l.b16 %v437
  %v1626 = vunpack.c.l.b16 %v438
  %v1627 = vunpack.c.l.b16 %v439
  %v1628 = vunpack.c.l.b16 %v440
  %v1629 = vunpack.c.l.b16 %v441
  %v1630 = vunpack.c.l.b16 %v442
  %v1631 = vunpack.c.l.b16 %v443
  %v1632 = vunpack.c.l.b16 %v444
  %v1633 = vunpack.c.l.b16 %v445
  %v1634 = vunpack.c.l.b16 %v446
  %v1635 = vunpack.c.l.b16 %v447
  %v1636 = vunpack.c.l.b16 %v448
  %v1637 = vunpack.c.l.b16 %v449
  %v1638 = vunpack.c.l.b16 %v450
  %v1639 = vunpack.c.l.b16 %v451
  %v1640 = vunpack.c.l.b16 %v452
  %v1641 = vunpack.c.l.b16 %v453
  %v1642 = vunpack.c.l.b16 %v454
  %v1643 = vunpack.c.l.b16 %v455
  %v1644 = vunpack.c.l.b16 %v456
  %v1645 = vunpack.c.l.b16 %v457
  %v1646 = vunpack.c.l.b16 %v458
  %v1647 = vunpack.c.l.b16 %v459
  %v1648 = vunpack.c.l.b16 %v460
  %v1649 = vunpack.c.l.b16 %v461
  %v1650 = vunpack.c.l.b16 %v462
  %v1651 = vunpack.c.l.b16 %v463
  %v1652 = vunpack.c.l.b16 %v464
  %v1653 = vunpack.c.l.b16 %v465
  %v1654 = vunpack.c.l.b16 %v466
  %v1655 = vunpack.c.l.b16 %v467
  %v1656 = vunpack.c.l.b16 %v468
  %v1657 = vunpack.c.l.b16 %v469
  %v1658 = vunpack.c.l.b16 %v470
  %v1659 = vunpack.c.l.b16 %v471
  %v1660 = vunpack.c.l.b16 %v472
  %v1661 = vunpack.c.l.b16 %v473
  %v1662 = vunpack.c.l.b16 %v474
  %v1663 = vunpack.c.l.b16 %v475
  %v1664 = vunpack.c.l.b16 %v476
  %v1665 = vunpack.c.l.b16 %v477
  %v1666 = vunpack.c.l.b16 %v478
  %v1667 = vunpack.c.l.b16 %v479
  %v1668 = vunpack.c.l.b16 %v480
  %v1669 = vunpack.c.l.b16 %v481
  %v1670 = vunpack.c.l.b16 %v482
  %v1671 = vunpack.c.l.b16 %v483
  %v1672 = vunpack.c.l.b16 %v484
  %v1673 = vunpack.c.l.b16 %v485
  %v1674 = vunpack.c.l.b16 %v486
  %v1675 = vunpack.c.l.b16 %v487
  %v1676 = vunpack.c.l.b16 %v488
  %v1677 = vunpack.c.l.b16 %v489
  %v1678 = vunpack.c.l.b16 %v490
  %v1679 = vunpack.c.l.b16 %v491
  %v1680 = vunpack.c.l.b16 %v492
  %v1681 = vunpack.c.l.b16 %v493
  %v1682 = vunpack.c.l.b16 %v494
  %v1683 = vunpack.c.l.b16 %v495
  %v1684 = vunpack.c.l.b16 %v496
  %v1685 = vunpack.c.l.b16 %v497
  %v1686 = vunpack.c.l.b16 %v498
  %v1687 = vunpack.c.l.b16 %v499
  %v1688 = vunpack.c.l.b16 %v500
  %v1689 = vunpack.c.l.b16 %v501
  %v1690 = vunpack.c.l.b16 %v502
  %v1691 = vunpack.c.l.b16 %v503
  %v1692 = vunpack.c.l.b16 %v504
  %v1693 = vunpack.c.l.b16 %v505
  %v1694 = vunpack.c.l.b16 %v506
  %v1695 = vunpack.c.l.b16 %v507
  %v1696 = vunpack.c.l.b16 %v508
  %v1697 = vunpack.c.l.b16 %v509
  %v1698 = vunpack.c.l.b16 %v510
  %v1699 = vunpack.c.l.b16 %v511
  %v1700 = vunpack.c.l.b16 %v512
  %v1701 = vunpack.c.l.b16 %v513
  %v1702 = vunpack.c.l.b16 %v514
  %v1703 = vunpack.c.l.b16 %v515
  %v1704 = vunpack.c.l.b16 %v516
  %v1705 = vunpack.c.l.b16 %v517
  %v1706 = vunpack.c.l.b16 %v518
  %v1707 = vunpack.c.l.b16 %v519
  %v1708 = vunpack.c.l.b16 %v520
  %v1709 = vunpack.c.l.b16 %v521
  %v1710 = vunpack.c.l.b16 %v522
  %v1711 = vunpack.c.l.b16 %v523
  %v1712 = vunpack.c.l.b16 %v524
  %v1713 = vunpack.c.l.b16 %v525
  %v1714 = vunpack.c.l.b16 %v526
  %v1715 = vunpack.c.l.b16 %v527
  %v1716 = vunpack.c.l.b16 %v528
  %v1717 = vunpack.c.l.b16 %v529
  %v1718 = vunpack.c.l.b16 %v530
  %v1719 = vunpack.c.l.b16 %v531
  %v1720 = vunpack.c.l.b16 %v532
  %v1721 = vunpack.c.l.b16 %v533
  %v1722 = vunpack.c.l.b16 %v534
  %v1723 = vunpack.c.l.b16 %v535
  %v1724 = vunpack.c.l.b16 %v536
  %v1725 = vunpack.c.l.b16 %v537
  %v1726 = vunpack.c.l.b16 %v538
  %v1727 = vunpack.c.l.b16 %v539
  %v1728 = vunpack.c.l.b16 %v540
  %v1729 = vunpack.c.l.b16 %v541
  %v1730 = vunpack.c.l.b16 %v542
  %v1731 = vunpack.c.l.b16 %v543
  %v1732 = vunpack.c.l.b16 %v544
  %v1733 = vunpack.c.l.b16 %v545
  %v1734 = vunpack.c.l.b16 %v546
  %v1735 = vunpack.c.l.b16 %v547
  %v1736 = vunpack.c.l.b16 %v548
  %v1737 = vunpack.c.l.b16 %v549
  %v1738 = vunpack.c.l.b16 %v550
  %v1739 = vunpack.c.l.b16 %v551
  %v1740 = vunpack.c.l.b16 %v552
  %v1741 = vunpack.c.l.b16 %v553
  %v1742 = vunpack.c.l.b16 %v554
  %v1743 = vunpack.c.l.b16 %v555
  %v1744 = vunpack.c.l.b16 %v556
  %v1745 = vunpack.c.l.b16 %v557
  %v1746 = vpack.c.b16 %v1235, %v1234
  %v1747 = vpack.c.b16 %v1237, %v1236
  %v1748 = vpack.c.b16 %v1239, %v1238
  %v1749 = vpack.c.b16 %v1241, %v1240
  %v1750 = vpack.c.b16 %v1243, %v1242
  %v1751 = vpack.c.b16 %v1245, %v1244
  %v1752 = vpack.c.b16 %v1247, %v1246
  %v1753 = vpack.c.b16 %v1249, %v1248
  %v1754 = vpack.c.b16 %v1251, %v1250
  %v1755 = vpack.c.b16 %v1253, %v1252
  %v1756 = vpack.c.b16 %v1255, %v1254
  %v1757 = vpack.c.b16 %v1257, %v1256
  %v1758 = vpack.c.b16 %v1259, %v1258
  %v1759 = vpack.c.b16 %v1261, %v1260
  %v1760 = vpack.c.b16 %v1263, %v1262
  %v1761 = vpack.c.b16 %v1265, %v1264
  %v1762 = vpack.c.b16 %v1267, %v1266
  %v1763 = vpack.c.b16 %v1269, %v1268
  %v1764 = vpack.c.b16 %v1271, %v1270
  %v1765 = vpack.c.b16 %v1273, %v1272
  %v1766 = vpack.c.b16 %v1275, %v1274
  %v1767 = vpack.c.b16 %v1277, %v1276
  %v1768 = vpack.c.b16 %v1279, %v1278
  %v1769 = vpack.c.b16 %v1281, %v1280
  %v1770 = vpack.c.b16 %v1283, %v1282
  %v1771 = vpack.c.b16 %v1285, %v1284
  %v1772 = vpack.c.b16 %v1287, %v1286
  %v1773 = vpack.c.b16 %v1289, %v1288
  %v1774 = vpack.c.b16 %v1291, %v1290
  %v1775 = vpack.c.b16 %v1293, %v1292
  %v1776 = vpack.c.b16 %v1295, %v1294
  %v1777 = vpack.c.b16 %v1297, %v1296
  %v1778 = vpack.c.b16 %v1299, %v1298
  %v1779 = vpack.c.b16 %v1301, %v1300
  %v1780 = vpack.c.b16 %v1303, %v1302
  %v1781 = vpack.c.b16 %v1305, %v1304
  %v1782 = vpack.c.b16 %v1307, %v1306
  %v1783 = vpack.c.b16 %v1309, %v1308
  %v1784 = vpack.c.b16 %v1311, %v1310
  %v1785 = vpack.c.b16 %v1313, %v1312
  %v1786 = vpack.c.b16 %v1315, %v1314
  %v1787 = vpack.c.b16 %v1317, %v1316
  %v1788 = vpack.c.b16 %v1319, %v1318
  %v1789 = vpack.c.b16 %v1321, %v1320
  %v1790 = vpack.c.b16 %v1323, %v1322
  %v1791 = vpack.c.b16 %v1325, %v1324
  %v1792 = vpack.c.b16 %v1327, %v1326
  %v1793 = vpack.c.b16 %v1329, %v1328
  %v1794 = vpack.c.b16 %v1331, %v1330
  %v1795 = vpack.c.b16 %v1333, %v1332
  %v1796 = vpack.c.b16 %v1335, %v1334
  %v1797 = vpack.c.b16 %v1337, %v1336
  %v1798 = vpack.c.b16 %v1339, %v1338
  %v1799 = vpack.c.b16 %v1341, %v1340
  %v1800 = vpack.c.b16 %v1343, %v1342
  %v1801 = vpack.c.b16 %v1345, %v1344
  %v1802 = vpack.c.b16 %v1347, %v1346
  %v1803 = vpack.c.b16 %v1349, %v1348
  %v1804 = vpack.c.b16 %v1351, %v1350
  %v1805 = vpack.c.b16 %v1353, %v1352
  %v1806 = vpack.c.b16 %v1355, %v1354
  %v1807 = vpack.c.b16 %v1357, %v1356
  %v1808 = vpack.c.b16 %v1359, %v1358
  %v1809 = vpack.c.b16 %v1361, %v1360
  %v1810 = vpack.c.b16 %v1363, %v1362
  %v1811 = vpack.c.b16 %v1365, %v1364
  %v1812 = vpack.c.b16 %v1367, %v1366
  %v1813 = vpack.c.b16 %v1369, %v1368
  %v1814 = vpack.c.b16 %v1371, %v1370
  %v1815 = vpack.c.b16 %v1373, %v1372
  %v1816 = vpack.c.b16 %v1375, %v1374
  %v1817 = vpack.c.b16 %v1377, %v1376
  %v1818 = vpack.c.b16 %v1379, %v1378
  %v1819 = vpack.c.b16 %v1381, %v1380
  %v1820 = vpack.c.b16 %v1383, %v1382
  %v1821 = vpack.c.b16 %v1385, %v1384
  %v1822 = vpack.c.b16 %v1387, %v1386
  %v1823 = vpack.c.b16 %v1389, %v1388
  %v1824 = vpack.c.b16 %v1391, %v1390
  %v1825 = vpack.c.b16 %v1393, %v1392
  %v1826 = vpack.c.b16 %v1395, %v1394
  %v1827 = vpack.c.b16 %v1397, %v1396
  %v1828 = vpack.c.b16 %v1399, %v1398
  %v1829 = vpack.c.b16 %v1401, %v1400
  %v1830 = vpack.c.b16 %v1403, %v1402
  %v1831 = vpack.c.b16 %v1405, %v1404
  %v1832 = vpack.c.b16 %v1407, %v1406
  %v1833 = vpack.c.b16 %v1409, %v1408
  %v1834 = vpack.c.b16 %v1411, %v1410
  %v1835 = vpack.c.b16 %v1413, %v1412
  %v1836 = vpack.c.b16 %v1415, %v1414
  %v1837 = vpack.c.b16 %v1417, %v1416
  %v1838 = vpack.c.b16 %v1419, %v1418
  %v1839 = vpack.c.b16 %v1421, %v1420
  %v1840 = vpack.c.b16 %v1423, %v1422
  %v1841 = vpack.c.b16 %v1425, %v1424
  %v1842 = vpack.c.b16 %v1427, %v1426
  %v1843 = vpack.c.b16 %v1429, %v1428
  %v1844 = vpack.c.b16 %v1431, %v1430
  %v1845 = vpack.c.b16 %v1433, %v1432
  %v1846 = vpack.c.b16 %v1435, %v1434
  %v1847 = vpack.c.b16 %v1437, %v1436
  %v1848 = vpack.c.b16 %v1439, %v1438
  %v1849 = vpack.c.b16 %v1441, %v1440
  %v1850 = vpack.c.b16 %v1443, %v1442
  %v1851 = vpack.c.b16 %v1445, %v1444
  %v1852 = vpack.c.b16 %v1447, %v1446
  %v1853 = vpack.c.b16 %v1449, %v1448
  %v1854 = vpack.c.b16 %v1451, %v1450
  %v1855 = vpack.c.b16 %v1453, %v1452
  %v1856 = vpack.c.b16 %v1455, %v1454
  %v1857 = vpack.c.b16 %v1457, %v1456
  %v1858 = vpack.c.b16 %v1459, %v1458
  %v1859 = vpack.c.b16 %v1461, %v1460
  %v1860 = vpack.c.b16 %v1463, %v1462
  %v1861 = vpack.c.b16 %v1465, %v1464
  %v1862 = vpack.c.b16 %v1467, %v1466
  %v1863 = vpack.c.b16 %v1469, %v1468
  %v1864 = vpack.c.b16 %v1471, %v1470
  %v1865 = vpack.c.b16 %v1473, %v1472
  %v1866 = vpack.c.b16 %v1475, %v1474
  %v1867 = vpack.c.b16 %v1477, %v1476
  %v1868 = vpack.c.b16 %v1479, %v1478
  %v1869 = vpack.c.b16 %v1481, %v1480
  %v1870 = vpack.c.b16 %v1483, %v1482
  %v1871 = vpack.c.b16 %v1485, %v1484
  %v1872 = vpack.c.b16 %v1487, %v1486
  %v1873 = vpack.c.b16 %v1489, %v1488
  %v1874 = vpack.c.b16 %v1491, %v1490
  %v1875 = vpack.c.b16 %v1493, %v1492
  %v1876 = vpack.c.b16 %v1495, %v1494
  %v1877 = vpack.c.b16 %v1497, %v1496
  %v1878 = vpack.c.b16 %v1499, %v1498
  %v1879 = vpack.c.b16 %v1501, %v1500
  %v1880 = vpack.c.b16 %v1503, %v1502
  %v1881 = vpack.c.b16 %v1505, %v1504
  %v1882 = vpack.c.b16 %v1507, %v1506
  %v1883 = vpack.c.b16 %v1509, %v1508
  %v1884 = vpack.c.b16 %v1511, %v1510
  %v1885 = vpack.c.b16 %v1513, %v1512
  %v1886 = vpack.c.b16 %v1515, %v1514
  %v1887 = vpack.c.b16 %v1517, %v1516
  %v1888 = vpack.c.b16 %v1519, %v1518
  %v1889 = vpack.c.b16 %v1521, %v1520
  %v1890 = vpack.c.b16 %v1523, %v1522
  %v1891 = vpack.c.b16 %v1525, %v1524
  %v1892 = vpack.c.b16 %v1527, %v1526
  %v1893 = vpack.c.b16 %v1529, %v1528
  %v1894 = vpack.c.b16 %v1531, %v1530
  %v1895 = vpack.c.b16 %v1533, %v1532
  %v1896 = vpack.c.b16 %v1535, %v1534
  %v1897 = vpack.c.b16 %v1537, %v1536
  %v1898 = vpack.c.b16 %v1539, %v1538
  %v1899 = vpack.c.b16 %v1541, %v1540
  %v1900 = vpack.c.b16 %v1543, %v1542
  %v1901 = vpack.c.b16 %v1545, %v1544
  %v1902 = vpack.c.b16 %v1547, %v1546
  %v1903 = vpack.c.b16 %v1549, %v1548
  %v1904 = vpack.c.b16 %v1551, %v1550
  %v1905 = vpack.c.b16 %v1553, %v1552
  %v1906 = vpack.c.b16 %v1555, %v1554
  %v1907 = vpack.c.b16 %v1557, %v1556
  %v1908 = vpack.c.b16 %v1559, %v1558
  %v1909 = vpack.c.b16 %v1561, %v1560
  %v1910 = vpack.c.b16 %v1563, %v1562
  %v1911 = vpack.c.b16 %v1565, %v1564
  %v1912 = vpack.c.b16 %v1567, %v1566
  %v1913 = vpack.c.b16 %v1569, %v1568
  %v1914 = vpack.c.b16 %v1571, %v1570
  %v1915 = vpack.c.b16 %v1573, %v1572
  %v1916 = vpack.c.b16 %v1575, %v1574
  %v1917 = vpack.c.b16 %v1577, %v1576
  %v1918 = vpack.c.b16 %v1579, %v1578
  %v1919 = vpack.c.b16 %v1581, %v1580
  %v1920 = vpack.c.b16 %v1583, %v1582
  %v1921 = vpack.c.b16 %v1585, %v1584
  %v1922 = vpack.c.b16 %v1587, %v1586
  %v1923 = vpack.c.b16 %v1589, %v1588
  %v1924 = vpack.c.b16 %v1591, %v1590
  %v1925 = vpack.c.b16 %v1593, %v1592
  %v1926 = vpack.c.b16 %v1595, %v1594
  %v1927 = vpack.c.b16 %v1597, %v1596
  %v1928 = vpack.c.b16 %v1599, %v1598
  %v1929 = vpack.c.b16 %v1601, %v1600
  %v1930 = vpack.c.b16 %v1603, %v1602
  %v1931 = vpack.c.b16 %v1605, %v1604
  %v1932 = vpack.c.b16 %v1607, %v1606
  %v1933 = vpack.c.b16 %v1609, %v1608
  %v1934 = vpack.c.b16 %v1611, %v1610
  %v1935 = vpack.c.b16 %v1613, %v1612
  %v1936 = vpack.c.b16 %v1615, %v1614
  %v1937 = vpack.c.b16 %v1617, %v1616
  %v1938 = vpack.c.b16 %v1619, %v1618
  %v1939 = vpack.c.b16 %v1621, %v1620
  %v1940 = vpack.c.b16 %v1623, %v1622
  %v1941 = vpack.c.b16 %v1625, %v1624
  %v1942 = vpack.c.b16 %v1627, %v1626
  %v1943 = vpack.c.b16 %v1629, %v1628
  %v1944 = vpack.c.b16 %v1631, %v1630
  %v1945 = vpack.c.b16 %v1633, %v1632
  %v1946 = vpack.c.b16 %v1635, %v1634
  %v1947 = vpack.c.b16 %v1637, %v1636
  %v1948 = vpack.c.b16 %v1639, %v1638
  %v1949 = vpack.c.b16 %v1641, %v1640
  %v1950 = vpack.c.b16 %v1643, %v1642
  %v1951 = vpack.c.b16 %v1645, %v1644
  %v1952 = vpack.c.b16 %v1647, %v1646
  %v1953 = vpack.c.b16 %v1649, %v1648
  %v1954 = vpack.c.b16 %v1651, %v1650
  %v1955 = vpack.c.b16 %v1653, %v1652
  %v1956 = vpack.c.b16 %v1655, %v1654
  %v1957 = vpack.c.b16 %v1657, %v1656
  %v1958 = vpack.c.b16 %v1659, %v1658
  %v1959 = vpack.c.b16 %v1661, %v1660
  %v1960 = vpack.c.b16 %v1663, %v1662
  %v1961 = vpack.c.b16 %v1665, %v1664
  %v1962 = vpack.c.b16 %v1667, %v1666
  %v1963 = vpack.c.b16 %v1669, %v1668
  %v1964 = vpack.c.b16 %v1671, %v1670
  %v1965 = vpack.c.b16 %v1673, %v1672
  %v1966 = vpack.c.b16 %v1675, %v1674
  %v1967 = vpack.c.b16 %v1677, %v1676
  %v1968 = vpack.c.b16 %v1679, %v1678
  %v1969 = vpack.c.b16 %v1681, %v1680
  %v1970 = vpack.c.b16 %v1683, %v1682
  %v1971 = vpack.c.b16 %v1685, %v1684
  %v1972 = vpack.c.b16 %v1687, %v1686
  %v1973 = vpack.c.b16 %v1689, %v1688
  %v1974 = vpack.c.b16 %v1691, %v1690
  %v1975 = vpack.c.b16 %v1693, %v1692
  %v1976 = vpack.c.b16 %v1695, %v1694
  %v1977 = vpack.c.b16 %v1697, %v1696
  %v1978 = vpack.c.b16 %v1699, %v1698
  %v1979 = vpack.c.b16 %v1701, %v1700
  %v1980 = vpack.c.b16 %v1703, %v1702
  %v1981 = vpack.c.b16 %v1705, %v1704
  %v1982 = vpack.c.b16 %v1707, %v1706
  %v1983 = vpack.c.b16 %v1709, %v1708
  %v1984 = vpack.c.b16 %v1711, %v1710
  %v1985 = vpack.c.b16 %v1713, %v1712
  %v1986 = vpack.c.b16 %v1715, %v1714
  %v1987 = vpack.c.b16 %v1717, %v1716
  %v1988 = vpack.c.b16 %v1719, %v1718
  %v1989 = vpack.c.b16 %v1721, %v1720
  %v1990 = vpack.c.b16 %v1723, %v1722
  %v1991 = vpack.c.b16 %v1725, %v1724
  %v1992 = vpack.c.b16 %v1727, %v1726
  %v1993 = vpack.c.b16 %v1729, %v1728
  %v1994 = vpack.c.b16 %v1731, %v1730
  %v1995 = vpack.c.b16 %v1733, %v1732
  %v1996 = vpack.c.b16 %v1735, %v1734
  %v1997 = vpack.c.b16 %v1737, %v1736
  %v1998 = vpack.c.b16 %v1739, %v1738
  %v1999 = vpack.c.b16 %v1741, %v1740
  %v2000 = vpack.c.b16 %v1743, %v1742
  %v2001 = vpack.c.b16 %v1745, %v1744
  %2258 = vmatpush.bf16.msra.mxu0 %v1753
  %2259 = vmatpush.bf16.msra.mxu0 %v1752
  %2260 = vmatpush.bf16.msra.mxu0 %v1751
  %2261 = vmatpush.bf16.msra.mxu0 %v1750
  %2262 = vmatpush.bf16.msra.mxu0 %v1749
  %2263 = vmatpush.bf16.msra.mxu0 %v1748
  %2264 = vmatpush.bf16.msra.mxu0 %v1747
  %2265 = vmatpush.bf16.msra.mxu0 %v1746
  %2266 = vmatmul.bf16.gmra.mxu0 %v658
  %v2267 = vpop.f32.mrf.mxu0
  %v2268 = vadd.f32 %v560, %v2267
  %v2269 = vpop.f32.mrf.mxu0
  %v2270 = vadd.f32 %v560, %v2269
  %2271 = vdwg.mxu0
  %2272 = vmatpush.bf16.msra.mxu0 %v1761
  %2273 = vmatpush.bf16.msra.mxu0 %v1760
  %2274 = vmatpush.bf16.msra.mxu0 %v1759
  %2275 = vmatpush.bf16.msra.mxu0 %v1758
  %2276 = vmatpush.bf16.msra.mxu0 %v1757
  %2277 = vmatpush.bf16.msra.mxu0 %v1756
  %2278 = vmatpush.bf16.msra.mxu0 %v1755
  %2279 = vmatpush.bf16.msra.mxu0 %v1754
  %2280 = vmatmul.bf16.gmra.mxu0 %v659
  %v2281 = vpop.f32.mrf.mxu0
  %v2282 = vadd.f32 %v2268, %v2281
  %v2283 = vpop.f32.mrf.mxu0
  %v2284 = vadd.f32 %v2270, %v2283
  %2285 = vdwg.mxu0
  %2286 = vmatpush.bf16.msra.mxu0 %v1769
  %2287 = vmatpush.bf16.msra.mxu0 %v1768
  %2288 = vmatpush.bf16.msra.mxu0 %v1767
  %2289 = vmatpush.bf16.msra.mxu0 %v1766
  %2290 = vmatpush.bf16.msra.mxu0 %v1765
  %2291 = vmatpush.bf16.msra.mxu0 %v1764
  %2292 = vmatpush.bf16.msra.mxu0 %v1763
  %2293 = vmatpush.bf16.msra.mxu0 %v1762
  %2294 = vmatmul.bf16.gmra.mxu0 %v660
  %v2295 = vpop.f32.mrf.mxu0
  %v2296 = vadd.f32 %v2282, %v2295
  %v2297 = vpop.f32.mrf.mxu0
  %v2298 = vadd.f32 %v2284, %v2297
  %2299 = vdwg.mxu0
  %2300 = vmatpush.bf16.msra.mxu0 %v1777
  %2301 = vmatpush.bf16.msra.mxu0 %v1776
  %2302 = vmatpush.bf16.msra.mxu0 %v1775
  %2303 = vmatpush.bf16.msra.mxu0 %v1774
  %2304 = vmatpush.bf16.msra.mxu0 %v1773
  %2305 = vmatpush.bf16.msra.mxu0 %v1772
  %2306 = vmatpush.bf16.msra.mxu0 %v1771
  %2307 = vmatpush.bf16.msra.mxu0 %v1770
  %2308 = vmatmul.bf16.gmra.mxu0 %v661
  %v2309 = vpop.f32.mrf.mxu0
  %v2310 = vadd.f32 %v2296, %v2309
  %v2311 = vpop.f32.mrf.mxu0
  %v2312 = vadd.f32 %v2298, %v2311
  %2313 = vdwg.mxu0
  %2314 = vmatpush.bf16.msra.mxu0 %v1785
  %2315 = vmatpush.bf16.msra.mxu0 %v1784
  %2316 = vmatpush.bf16.msra.mxu0 %v1783
  %2317 = vmatpush.bf16.msra.mxu0 %v1782
  %2318 = vmatpush.bf16.msra.mxu0 %v1781
  %2319 = vmatpush.bf16.msra.mxu0 %v1780
  %2320 = vmatpush.bf16.msra.mxu0 %v1779
  %2321 = vmatpush.bf16.msra.mxu0 %v1778
  %2322 = vmatmul.bf16.gmra.mxu0 %v662
  %v2323 = vpop.f32.mrf.mxu0
  %v2324 = vadd.f32 %v2310, %v2323
  %v2325 = vpop.f32.mrf.mxu0
  %v2326 = vadd.f32 %v2312, %v2325
  %2327 = vdwg.mxu0
  %2328 = vmatpush.bf16.msra.mxu0 %v1793
  %2329 = vmatpush.bf16.msra.mxu0 %v1792
  %2330 = vmatpush.bf16.msra.mxu0 %v1791
  %2331 = vmatpush.bf16.msra.mxu0 %v1790
  %2332 = vmatpush.bf16.msra.mxu0 %v1789
  %2333 = vmatpush.bf16.msra.mxu0 %v1788
  %2334 = vmatpush.bf16.msra.mxu0 %v1787
  %2335 = vmatpush.bf16.msra.mxu0 %v1786
  %2336 = vmatmul.bf16.gmra.mxu0 %v663
  %v2337 = vpop.f32.mrf.mxu0
  %v2338 = vadd.f32 %v2324, %v2337
  %v2339 = vpop.f32.mrf.mxu0
  %v2340 = vadd.f32 %v2326, %v2339
  %2341 = vdwg.mxu0
  %2342 = vmatpush.bf16.msra.mxu0 %v1801
  %2343 = vmatpush.bf16.msra.mxu0 %v1800
  %2344 = vmatpush.bf16.msra.mxu0 %v1799
  %2345 = vmatpush.bf16.msra.mxu0 %v1798
  %2346 = vmatpush.bf16.msra.mxu0 %v1797
  %2347 = vmatpush.bf16.msra.mxu0 %v1796
  %2348 = vmatpush.bf16.msra.mxu0 %v1795
  %2349 = vmatpush.bf16.msra.mxu0 %v1794
  %2350 = vmatmul.bf16.gmra.mxu0 %v664
  %v2351 = vpop.f32.mrf.mxu0
  %v2352 = vadd.f32 %v2338, %v2351
  %v2353 = vpop.f32.mrf.mxu0
  %v2354 = vadd.f32 %v2340, %v2353
  %2355 = vdwg.mxu0
  %2356 = vmatpush.bf16.msra.mxu0 %v1809
  %2357 = vmatpush.bf16.msra.mxu0 %v1808
  %2358 = vmatpush.bf16.msra.mxu0 %v1807
  %2359 = vmatpush.bf16.msra.mxu0 %v1806
  %2360 = vmatpush.bf16.msra.mxu0 %v1805
  %2361 = vmatpush.bf16.msra.mxu0 %v1804
  %2362 = vmatpush.bf16.msra.mxu0 %v1803
  %2363 = vmatpush.bf16.msra.mxu0 %v1802
  %2364 = vmatmul.bf16.gmra.mxu0 %v665
  %v2365 = vpop.f32.mrf.mxu0
  %v2366 = vadd.f32 %v2352, %v2365
  %v2367 = vpop.f32.mrf.mxu0
  %v2368 = vadd.f32 %v2354, %v2367
  %2369 = vdwg.mxu0
  %2370 = vmatpush.bf16.msra.mxu0 %v1817
  %2371 = vmatpush.bf16.msra.mxu0 %v1816
  %2372 = vmatpush.bf16.msra.mxu0 %v1815
  %2373 = vmatpush.bf16.msra.mxu0 %v1814
  %2374 = vmatpush.bf16.msra.mxu0 %v1813
  %2375 = vmatpush.bf16.msra.mxu0 %v1812
  %2376 = vmatpush.bf16.msra.mxu0 %v1811
  %2377 = vmatpush.bf16.msra.mxu0 %v1810
  %2378 = vmatmul.bf16.gmra.mxu0 %v666
  %v2379 = vpop.f32.mrf.mxu0
  %v2380 = vadd.f32 %v2366, %v2379
  %v2381 = vpop.f32.mrf.mxu0
  %v2382 = vadd.f32 %v2368, %v2381
  %2383 = vdwg.mxu0
  %2384 = vmatpush.bf16.msra.mxu0 %v1825
  %2385 = vmatpush.bf16.msra.mxu0 %v1824
  %2386 = vmatpush.bf16.msra.mxu0 %v1823
  %2387 = vmatpush.bf16.msra.mxu0 %v1822
  %2388 = vmatpush.bf16.msra.mxu0 %v1821
  %2389 = vmatpush.bf16.msra.mxu0 %v1820
  %2390 = vmatpush.bf16.msra.mxu0 %v1819
  %2391 = vmatpush.bf16.msra.mxu0 %v1818
  %2392 = vmatmul.bf16.gmra.mxu0 %v667
  %v2393 = vpop.f32.mrf.mxu0
  %v2394 = vadd.f32 %v2380, %v2393
  %v2395 = vpop.f32.mrf.mxu0
  %v2396 = vadd.f32 %v2382, %v2395
  %2397 = vdwg.mxu0
  %2398 = vmatpush.bf16.msra.mxu0 %v1833
  %2399 = vmatpush.bf16.msra.mxu0 %v1832
  %2400 = vmatpush.bf16.msra.mxu0 %v1831
  %2401 = vmatpush.bf16.msra.mxu0 %v1830
  %2402 = vmatpush.bf16.msra.mxu0 %v1829
  %2403 = vmatpush.bf16.msra.mxu0 %v1828
  %2404 = vmatpush.bf16.msra.mxu0 %v1827
  %2405 = vmatpush.bf16.msra.mxu0 %v1826
  %2406 = vmatmul.bf16.gmra.mxu0 %v668
  %v2407 = vpop.f32.mrf.mxu0
  %v2408 = vadd.f32 %v2394, %v2407
  %v2409 = vpop.f32.mrf.mxu0
  %v2410 = vadd.f32 %v2396, %v2409
  %2411 = vdwg.mxu0
  %2412 = vmatpush.bf16.msra.mxu0 %v1841
  %2413 = vmatpush.bf16.msra.mxu0 %v1840
  %2414 = vmatpush.bf16.msra.mxu0 %v1839
  %2415 = vmatpush.bf16.msra.mxu0 %v1838
  %2416 = vmatpush.bf16.msra.mxu0 %v1837
  %2417 = vmatpush.bf16.msra.mxu0 %v1836
  %2418 = vmatpush.bf16.msra.mxu0 %v1835
  %2419 = vmatpush.bf16.msra.mxu0 %v1834
  %2420 = vmatmul.bf16.gmra.mxu0 %v669
  %v2421 = vpop.f32.mrf.mxu0
  %v2422 = vadd.f32 %v2408, %v2421
  %v2423 = vpop.f32.mrf.mxu0
  %v2424 = vadd.f32 %v2410, %v2423
  %2425 = vdwg.mxu0
  %2426 = vmatpush.bf16.msra.mxu0 %v1849
  %2427 = vmatpush.bf16.msra.mxu0 %v1848
  %2428 = vmatpush.bf16.msra.mxu0 %v1847
  %2429 = vmatpush.bf16.msra.mxu0 %v1846
  %2430 = vmatpush.bf16.msra.mxu0 %v1845
  %2431 = vmatpush.bf16.msra.mxu0 %v1844
  %2432 = vmatpush.bf16.msra.mxu0 %v1843
  %2433 = vmatpush.bf16.msra.mxu0 %v1842
  %2434 = vmatmul.bf16.gmra.mxu0 %v670
  %v2435 = vpop.f32.mrf.mxu0
  %v2436 = vadd.f32 %v2422, %v2435
  %v2437 = vpop.f32.mrf.mxu0
  %v2438 = vadd.f32 %v2424, %v2437
  %2439 = vdwg.mxu0
  %2440 = vmatpush.bf16.msra.mxu0 %v1857
  %2441 = vmatpush.bf16.msra.mxu0 %v1856
  %2442 = vmatpush.bf16.msra.mxu0 %v1855
  %2443 = vmatpush.bf16.msra.mxu0 %v1854
  %2444 = vmatpush.bf16.msra.mxu0 %v1853
  %2445 = vmatpush.bf16.msra.mxu0 %v1852
  %2446 = vmatpush.bf16.msra.mxu0 %v1851
  %2447 = vmatpush.bf16.msra.mxu0 %v1850
  %2448 = vmatmul.bf16.gmra.mxu0 %v671
  %v2449 = vpop.f32.mrf.mxu0
  %v2450 = vadd.f32 %v2436, %v2449
  %v2451 = vpop.f32.mrf.mxu0
  %v2452 = vadd.f32 %v2438, %v2451
  %2453 = vdwg.mxu0
  %2454 = vmatpush.bf16.msra.mxu0 %v1865
  %2455 = vmatpush.bf16.msra.mxu0 %v1864
  %2456 = vmatpush.bf16.msra.mxu0 %v1863
  %2457 = vmatpush.bf16.msra.mxu0 %v1862
  %2458 = vmatpush.bf16.msra.mxu0 %v1861
  %2459 = vmatpush.bf16.msra.mxu0 %v1860
  %2460 = vmatpush.bf16.msra.mxu0 %v1859
  %2461 = vmatpush.bf16.msra.mxu0 %v1858
  %2462 = vmatmul.bf16.gmra.mxu0 %v672
  %v2463 = vpop.f32.mrf.mxu0
  %v2464 = vadd.f32 %v2450, %v2463
  %v2465 = vpop.f32.mrf.mxu0
  %v2466 = vadd.f32 %v2452, %v2465
  %2467 = vdwg.mxu0
  %2468 = vmatpush.bf16.msra.mxu0 %v1873
  %2469 = vmatpush.bf16.msra.mxu0 %v1872
  %2470 = vmatpush.bf16.msra.mxu0 %v1871
  %2471 = vmatpush.bf16.msra.mxu0 %v1870
  %2472 = vmatpush.bf16.msra.mxu0 %v1869
  %2473 = vmatpush.bf16.msra.mxu0 %v1868
  %2474 = vmatpush.bf16.msra.mxu0 %v1867
  %2475 = vmatpush.bf16.msra.mxu0 %v1866
  %2476 = vmatmul.bf16.gmra.mxu0 %v673
  %v2477 = vpop.f32.mrf.mxu0
  %v2478 = vadd.f32 %v2464, %v2477
  %v2479 = vpop.f32.mrf.mxu0
  %v2480 = vadd.f32 %v2466, %v2479
  %2481 = vdwg.mxu0
  %2482 = vmatpush.bf16.msra.mxu0 %v1881
  %2483 = vmatpush.bf16.msra.mxu0 %v1880
  %2484 = vmatpush.bf16.msra.mxu0 %v1879
  %2485 = vmatpush.bf16.msra.mxu0 %v1878
  %2486 = vmatpush.bf16.msra.mxu0 %v1877
  %2487 = vmatpush.bf16.msra.mxu0 %v1876
  %2488 = vmatpush.bf16.msra.mxu0 %v1875
  %2489 = vmatpush.bf16.msra.mxu0 %v1874
  %2490 = vmatmul.bf16.gmra.mxu0 %v674
  %v2491 = vpop.f32.mrf.mxu0
  %v2492 = vadd.f32 %v2478, %v2491
  %v2493 = vpop.f32.mrf.mxu0
  %v2494 = vadd.f32 %v2480, %v2493
  %2495 = vdwg.mxu0
  %2496 = vmatpush.bf16.msra.mxu0 %v1889
  %2497 = vmatpush.bf16.msra.mxu0 %v1888
  %2498 = vmatpush.bf16.msra.mxu0 %v1887
  %2499 = vmatpush.bf16.msra.mxu0 %v1886
  %2500 = vmatpush.bf16.msra.mxu0 %v1885
  %2501 = vmatpush.bf16.msra.mxu0 %v1884
  %2502 = vmatpush.bf16.msra.mxu0 %v1883
  %2503 = vmatpush.bf16.msra.mxu0 %v1882
  %2504 = vmatmul.bf16.gmra.mxu0 %v675
  %v2505 = vpop.f32.mrf.mxu0
  %v2506 = vadd.f32 %v2492, %v2505
  %v2507 = vpop.f32.mrf.mxu0
  %v2508 = vadd.f32 %v2494, %v2507
  %2509 = vdwg.mxu0
  %2510 = vmatpush.bf16.msra.mxu0 %v1897
  %2511 = vmatpush.bf16.msra.mxu0 %v1896
  %2512 = vmatpush.bf16.msra.mxu0 %v1895
  %2513 = vmatpush.bf16.msra.mxu0 %v1894
  %2514 = vmatpush.bf16.msra.mxu0 %v1893
  %2515 = vmatpush.bf16.msra.mxu0 %v1892
  %2516 = vmatpush.bf16.msra.mxu0 %v1891
  %2517 = vmatpush.bf16.msra.mxu0 %v1890
  %2518 = vmatmul.bf16.gmra.mxu0 %v676
  %v2519 = vpop.f32.mrf.mxu0
  %v2520 = vadd.f32 %v2506, %v2519
  %v2521 = vpop.f32.mrf.mxu0
  %v2522 = vadd.f32 %v2508, %v2521
  %2523 = vdwg.mxu0
  %2524 = vmatpush.bf16.msra.mxu0 %v1905
  %2525 = vmatpush.bf16.msra.mxu0 %v1904
  %2526 = vmatpush.bf16.msra.mxu0 %v1903
  %2527 = vmatpush.bf16.msra.mxu0 %v1902
  %2528 = vmatpush.bf16.msra.mxu0 %v1901
  %2529 = vmatpush.bf16.msra.mxu0 %v1900
  %2530 = vmatpush.bf16.msra.mxu0 %v1899
  %2531 = vmatpush.bf16.msra.mxu0 %v1898
  %2532 = vmatmul.bf16.gmra.mxu0 %v677
  %v2533 = vpop.f32.mrf.mxu0
  %v2534 = vadd.f32 %v2520, %v2533
  %v2535 = vpop.f32.mrf.mxu0
  %v2536 = vadd.f32 %v2522, %v2535
  %2537 = vdwg.mxu0
  %2538 = vmatpush.bf16.msra.mxu0 %v1913
  %2539 = vmatpush.bf16.msra.mxu0 %v1912
  %2540 = vmatpush.bf16.msra.mxu0 %v1911
  %2541 = vmatpush.bf16.msra.mxu0 %v1910
  %2542 = vmatpush.bf16.msra.mxu0 %v1909
  %2543 = vmatpush.bf16.msra.mxu0 %v1908
  %2544 = vmatpush.bf16.msra.mxu0 %v1907
  %2545 = vmatpush.bf16.msra.mxu0 %v1906
  %2546 = vmatmul.bf16.gmra.mxu0 %v678
  %v2547 = vpop.f32.mrf.mxu0
  %v2548 = vadd.f32 %v2534, %v2547
  %v2549 = vpop.f32.mrf.mxu0
  %v2550 = vadd.f32 %v2536, %v2549
  %2551 = vdwg.mxu0
  %2552 = vmatpush.bf16.msra.mxu0 %v1921
  %2553 = vmatpush.bf16.msra.mxu0 %v1920
  %2554 = vmatpush.bf16.msra.mxu0 %v1919
  %2555 = vmatpush.bf16.msra.mxu0 %v1918
  %2556 = vmatpush.bf16.msra.mxu0 %v1917
  %2557 = vmatpush.bf16.msra.mxu0 %v1916
  %2558 = vmatpush.bf16.msra.mxu0 %v1915
  %2559 = vmatpush.bf16.msra.mxu0 %v1914
  %2560 = vmatmul.bf16.gmra.mxu0 %v679
  %v2561 = vpop.f32.mrf.mxu0
  %v2562 = vadd.f32 %v2548, %v2561
  %v2563 = vpop.f32.mrf.mxu0
  %v2564 = vadd.f32 %v2550, %v2563
  %2565 = vdwg.mxu0
  %2566 = vmatpush.bf16.msra.mxu0 %v1929
  %2567 = vmatpush.bf16.msra.mxu0 %v1928
  %2568 = vmatpush.bf16.msra.mxu0 %v1927
  %2569 = vmatpush.bf16.msra.mxu0 %v1926
  %2570 = vmatpush.bf16.msra.mxu0 %v1925
  %2571 = vmatpush.bf16.msra.mxu0 %v1924
  %2572 = vmatpush.bf16.msra.mxu0 %v1923
  %2573 = vmatpush.bf16.msra.mxu0 %v1922
  %2574 = vmatmul.bf16.gmra.mxu0 %v680
  %v2575 = vpop.f32.mrf.mxu0
  %v2576 = vadd.f32 %v2562, %v2575
  %v2577 = vpop.f32.mrf.mxu0
  %v2578 = vadd.f32 %v2564, %v2577
  %2579 = vdwg.mxu0
  %2580 = vmatpush.bf16.msra.mxu0 %v1937
  %2581 = vmatpush.bf16.msra.mxu0 %v1936
  %2582 = vmatpush.bf16.msra.mxu0 %v1935
  %2583 = vmatpush.bf16.msra.mxu0 %v1934
  %2584 = vmatpush.bf16.msra.mxu0 %v1933
  %2585 = vmatpush.bf16.msra.mxu0 %v1932
  %2586 = vmatpush.bf16.msra.mxu0 %v1931
  %2587 = vmatpush.bf16.msra.mxu0 %v1930
  %2588 = vmatmul.bf16.gmra.mxu0 %v681
  %v2589 = vpop.f32.mrf.mxu0
  %v2590 = vadd.f32 %v2576, %v2589
  %v2591 = vpop.f32.mrf.mxu0
  %v2592 = vadd.f32 %v2578, %v2591
  %2593 = vdwg.mxu0
  %2594 = vmatpush.bf16.msra.mxu0 %v1945
  %2595 = vmatpush.bf16.msra.mxu0 %v1944
  %2596 = vmatpush.bf16.msra.mxu0 %v1943
  %2597 = vmatpush.bf16.msra.mxu0 %v1942
  %2598 = vmatpush.bf16.msra.mxu0 %v1941
  %2599 = vmatpush.bf16.msra.mxu0 %v1940
  %2600 = vmatpush.bf16.msra.mxu0 %v1939
  %2601 = vmatpush.bf16.msra.mxu0 %v1938
  %2602 = vmatmul.bf16.gmra.mxu0 %v682
  %v2603 = vpop.f32.mrf.mxu0
  %v2604 = vadd.f32 %v2590, %v2603
  %v2605 = vpop.f32.mrf.mxu0
  %v2606 = vadd.f32 %v2592, %v2605
  %2607 = vdwg.mxu0
  %2608 = vmatpush.bf16.msra.mxu0 %v1953
  %2609 = vmatpush.bf16.msra.mxu0 %v1952
  %2610 = vmatpush.bf16.msra.mxu0 %v1951
  %2611 = vmatpush.bf16.msra.mxu0 %v1950
  %2612 = vmatpush.bf16.msra.mxu0 %v1949
  %2613 = vmatpush.bf16.msra.mxu0 %v1948
  %2614 = vmatpush.bf16.msra.mxu0 %v1947
  %2615 = vmatpush.bf16.msra.mxu0 %v1946
  %2616 = vmatmul.bf16.gmra.mxu0 %v683
  %v2617 = vpop.f32.mrf.mxu0
  %v2618 = vadd.f32 %v2604, %v2617
  %v2619 = vpop.f32.mrf.mxu0
  %v2620 = vadd.f32 %v2606, %v2619
  %2621 = vdwg.mxu0
  %2622 = vmatpush.bf16.msra.mxu0 %v1961
  %2623 = vmatpush.bf16.msra.mxu0 %v1960
  %2624 = vmatpush.bf16.msra.mxu0 %v1959
  %2625 = vmatpush.bf16.msra.mxu0 %v1958
  %2626 = vmatpush.bf16.msra.mxu0 %v1957
  %2627 = vmatpush.bf16.msra.mxu0 %v1956
  %2628 = vmatpush.bf16.msra.mxu0 %v1955
  %2629 = vmatpush.bf16.msra.mxu0 %v1954
  %2630 = vmatmul.bf16.gmra.mxu0 %v684
  %v2631 = vpop.f32.mrf.mxu0
  %v2632 = vadd.f32 %v2618, %v2631
  %v2633 = vpop.f32.mrf.mxu0
  %v2634 = vadd.f32 %v2620, %v2633
  %2635 = vdwg.mxu0
  %2636 = vmatpush.bf16.msra.mxu0 %v1969
  %2637 = vmatpush.bf16.msra.mxu0 %v1968
  %2638 = vmatpush.bf16.msra.mxu0 %v1967
  %2639 = vmatpush.bf16.msra.mxu0 %v1966
  %2640 = vmatpush.bf16.msra.mxu0 %v1965
  %2641 = vmatpush.bf16.msra.mxu0 %v1964
  %2642 = vmatpush.bf16.msra.mxu0 %v1963
  %2643 = vmatpush.bf16.msra.mxu0 %v1962
  %2644 = vmatmul.bf16.gmra.mxu0 %v685
  %v2645 = vpop.f32.mrf.mxu0
  %v2646 = vadd.f32 %v2632, %v2645
  %v2647 = vpop.f32.mrf.mxu0
  %v2648 = vadd.f32 %v2634, %v2647
  %2649 = vdwg.mxu0
  %2650 = vmatpush.bf16.msra.mxu0 %v1977
  %2651 = vmatpush.bf16.msra.mxu0 %v1976
  %2652 = vmatpush.bf16.msra.mxu0 %v1975
  %2653 = vmatpush.bf16.msra.mxu0 %v1974
  %2654 = vmatpush.bf16.msra.mxu0 %v1973
  %2655 = vmatpush.bf16.msra.mxu0 %v1972
  %2656 = vmatpush.bf16.msra.mxu0 %v1971
  %2657 = vmatpush.bf16.msra.mxu0 %v1970
  %2658 = vmatmul.bf16.gmra.mxu0 %v686
  %v2659 = vpop.f32.mrf.mxu0
  %v2660 = vadd.f32 %v2646, %v2659
  %v2661 = vpop.f32.mrf.mxu0
  %v2662 = vadd.f32 %v2648, %v2661
  %2663 = vdwg.mxu0
  %2664 = vmatpush.bf16.msra.mxu0 %v1985
  %2665 = vmatpush.bf16.msra.mxu0 %v1984
  %2666 = vmatpush.bf16.msra.mxu0 %v1983
  %2667 = vmatpush.bf16.msra.mxu0 %v1982
  %2668 = vmatpush.bf16.msra.mxu0 %v1981
  %2669 = vmatpush.bf16.msra.mxu0 %v1980
  %2670 = vmatpush.bf16.msra.mxu0 %v1979
  %2671 = vmatpush.bf16.msra.mxu0 %v1978
  %2672 = vmatmul.bf16.gmra.mxu0 %v687
  %v2673 = vpop.f32.mrf.mxu0
  %v2674 = vadd.f32 %v2660, %v2673
  %v2675 = vpop.f32.mrf.mxu0
  %v2676 = vadd.f32 %v2662, %v2675
  %2677 = vdwg.mxu0
  %2678 = vmatpush.bf16.msra.mxu0 %v1993
  %2679 = vmatpush.bf16.msra.mxu0 %v1992
  %2680 = vmatpush.bf16.msra.mxu0 %v1991
  %2681 = vmatpush.bf16.msra.mxu0 %v1990
  %2682 = vmatpush.bf16.msra.mxu0 %v1989
  %2683 = vmatpush.bf16.msra.mxu0 %v1988
  %2684 = vmatpush.bf16.msra.mxu0 %v1987
  %2685 = vmatpush.bf16.msra.mxu0 %v1986
  %2686 = vmatmul.bf16.gmra.mxu0 %v688
  %v2687 = vpop.f32.mrf.mxu0
  %v2688 = vadd.f32 %v2674, %v2687
  %v2689 = vpop.f32.mrf.mxu0
  %v2690 = vadd.f32 %v2676, %v2689
  %2691 = vdwg.mxu0
  %2692 = vmatpush.bf16.msra.mxu0 %v2001
  %2693 = vmatpush.bf16.msra.mxu0 %v2000
  %2694 = vmatpush.bf16.msra.mxu0 %v1999
  %2695 = vmatpush.bf16.msra.mxu0 %v1998
  %2696 = vmatpush.bf16.msra.mxu0 %v1997
  %2697 = vmatpush.bf16.msra.mxu0 %v1996
  %2698 = vmatpush.bf16.msra.mxu0 %v1995
  %2699 = vmatpush.bf16.msra.mxu0 %v1994
  %2700 = vmatmul.bf16.gmra.mxu0 %v689
  %v2701 = vpop.f32.mrf.mxu0
  %v2702 = vadd.f32 %v2688, %v2701
  %v2703 = vpop.f32.mrf.mxu0
  %v2704 = vadd.f32 %v2690, %v2703
  %2705 = vdwg.mxu0
  %2706 = vst [vmem:[%s3] sm:$0xff] %v2702
  %2707 = vst [vmem:[%s3 + $0x8] sm:$0xff] %v2704
  // Predicated region
  $region14: #{discriminator_forward.7} parent=0 // pred_check
    _
  $region15: #{discriminator_forward.7} parent=0 // pred_check_branch
    %2709 = sbr.rel (0) target = $region17
  $region16: #{discriminator_forward.7} parent=0 // pred_region
    _
  $region17: #{discriminator_forward.7} parent=0 // pred_fallthru
    _
  // Predicated region
  $region18: #{discriminator_forward.7} parent=0 // pred_check
    _
  $region19: #{discriminator_forward.7} parent=0 // pred_check_branch
    %2711 = sbr.rel (0) target = $region21
  $region20: #{discriminator_forward.7} parent=0 // pred_region
    _
  $region21: #{discriminator_forward.7} parent=0 // pred_fallthru
    _

</llo_original>
